<compile_context>
chip_gen: v6e
topology: v6e:2x2x1
jax: 0.10.0
libtpu: 0.0.40
codegen_flags: <defaults>
</compile_context>

<pallas_src>
import jax
import jax.numpy as jnp
from jax import lax
from jax.experimental import pallas as pl
from jax.experimental.pallas import tpu as pltpu

NEG_SLOPE = 0.01                    # PyTorch nn.LeakyReLU() default negative_slope
LANE = 128                          # K / Cout padded to multiples of this
MAX_TM = 1024                       # M tile (rows of patches) upper bound
VMEM_LIMIT = 32 * 1024 * 1024       # explicit limit, safe on v5e / v6e / v7x


def _round_up(x, m):
    return ((x + m - 1) // m) * m


def _pad2(a, rows, cols):
    return jnp.pad(a, ((0, rows - a.shape[0]), (0, cols - a.shape[1])))


def _choose_m_tiling(m):
    """Balanced M tiling: minimal padding, >=2 tiles when feasible (v7x has 2 TCs)."""
    g = max(-(-m // MAX_TM), 1)
    if g == 1 and m >= 32:
        g = 2
    tm = _round_up(-(-m // g), 16)      # multiple of 16: bf16 sublane packing
    g = -(-m // tm)
    return tm, g, g * tm


# ----------------------------- Pallas kernel --------------------------------
def _matmul_bias_lrelu_kernel(p_ref, w_ref, b_ref, o_ref):
    # p_ref: (tm, K) bf16, w_ref: (K, C) bf16, b_ref: (1, C) f32,
    # o_ref: (tm, C) bf16 (intermediate layers) or f32 (final layer).
    acc = jnp.dot(p_ref[...], w_ref[...], preferred_element_type=jnp.float32)
    acc = acc + b_ref[...]
    o_ref[...] = jnp.where(acc >= 0.0, acc, NEG_SLOPE * acc).astype(o_ref.dtype)


def matmul_bias_lrelu(patches, weight, bias, out_dtype):
    """patches: (M, K) bf16, weight: (K, C) bf16, bias: (1, C) f32 -> (M, C) out_dtype.

    K and C are multiples of 128 (callers pre-pad).  M is tiled with a balanced
    'parallel' grid so v7x's two TensorCores split the tiles.
    """
    M, K = patches.shape
    C = weight.shape[1]

    tm, g, Mp = _choose_m_tiling(M)
    if Mp != M:
        patches = jnp.pad(patches, ((0, Mp - M), (0, 0)))

    out_itemsize = jnp.dtype(out_dtype).itemsize
    bytes_accessed = Mp * K * 2 + g * K * C * 2 + C * 4 + Mp * C * out_itemsize

    out = pl.pallas_call(
        _matmul_bias_lrelu_kernel,
        out_shape=jax.ShapeDtypeStruct((Mp, C), out_dtype),
        grid=(g,),
        in_specs=[
            pl.BlockSpec((tm, K), lambda i: (i, 0)),
            pl.BlockSpec((K, C), lambda i: (0, 0)),
            pl.BlockSpec((1, C), lambda i: (0, 0)),
        ],
        out_specs=pl.BlockSpec((tm, C), lambda i: (i, 0)),
        compiler_params=pltpu.CompilerParams(
            dimension_semantics=("parallel",),
            vmem_limit_bytes=VMEM_LIMIT,
        ),
        cost_estimate=pl.CostEstimate(
            flops=2 * Mp * K * C,
            transcendentals=0,
            bytes_accessed=int(bytes_accessed),
        ),
    )(patches, weight, bias)
    return out[:M] if Mp != M else out


# ------------------------------- layers (NHWC, bf16) -------------------------
def down_layer(x, wb, cout, out_dtype):
    """Conv2d(Cin->Cout, k=3, s=2, p=1) + LeakyReLU.  x: (N,H,W,Cin) bf16 NHWC."""
    wmat, bias = wb
    N, H, W, Cin = x.shape
    Ho = (H + 2 - 3) // 2 + 1
    Wo = (W + 2 - 3) // 2 + 1
    xp = jnp.pad(x, ((0, 0), (1, 1), (1, 1), (0, 0)))
    cols = [xp[:, i:i + 2 * (Ho - 1) + 1:2, j:j + 2 * (Wo - 1) + 1:2, :]
            for i in range(3) for j in range(3)]        # K order = (kh, kw, cin)
    K = 9 * Cin
    Kp = wmat.shape[0]
    if Kp != K:                                          # fuse K zero-pad into the concat
        cols.append(jnp.zeros((N, Ho, Wo, Kp - K), x.dtype))
    patches = jnp.concatenate(cols, axis=-1).reshape(N * Ho * Wo, Kp)   # bf16, one pass
    out = matmul_bias_lrelu(patches, wmat, bias, out_dtype)             # Pallas (MXU)
    return out[:, :cout].reshape(N, Ho, Wo, cout)


def up_layer(x, wb, cout, out_dtype):
    """ConvTranspose2d(Cin->Cout, k=3, s=2, p=1) + LeakyReLU.

    Sub-pixel decomposition, all 4 output phases fused as column blocks of one
    matmul:  out[2r+pr, 2c+pc] is column block (pr, pc) of
        [x(r,c) | x(r,c+1) | x(r+1,c) | x(r+1,c+1)] @ W_up,   W_up: (4*Cin, 4*Cout)
    (boundary-shifted rows/cols are zero-padded; they only feed the row/column
    that is cropped away, since the true output size is 2H-1 x 2W-1).
    """
    wmat, bias = wb
    N, H, W, Cin = x.shape
    zc = jnp.zeros((N, H, 1, Cin), x.dtype)
    zr = jnp.zeros((N, 1, W, Cin), x.dtype)
    x_c = jnp.concatenate([x[:, :, 1:, :], zc], axis=2)      # x[r,   c+1]
    x_r = jnp.concatenate([x[:, 1:, :, :], zr], axis=1)      # x[r+1, c  ]
    x_rc = jnp.concatenate([x_c[:, 1:, :, :], zr], axis=1)   # x[r+1, c+1]
    slab = jnp.concatenate([x, x_c, x_r, x_rc], axis=-1)     # (N,H,W,4*Cin) shared slab
    K = 4 * Cin
    Kp = wmat.shape[0]
    if Kp != K:
        slab = jnp.concatenate([slab, jnp.zeros((N, H, W, Kp - K), x.dtype)], axis=-1)
    patches = slab.reshape(N * H * W, Kp)

    out = matmul_bias_lrelu(patches, wmat, bias, out_dtype)  # (M, >=4*Cout)  <- Pallas
    out = out[:, :4 * cout].reshape(N, H, W, 2, 2, cout)     # [n,h,w,pr,pc,c]
    out = out.transpose(0, 1, 3, 2, 4, 5).reshape(N, 2 * H, 2 * W, cout)
    return out[:, :2 * H - 1, :2 * W - 1, :]                 # crop to true 2H-1, 2W-1


# ------------------------------ parameters -----------------------------------
def init_generator_params(key):
    def conv_w(k, co, ci):      # Conv2d weight: (Cout, Cin, 3, 3)
        return jax.random.normal(k, (co, ci, 3, 3), jnp.float32) * 0.05

    def convT_w(k, ci, co):     # ConvTranspose2d weight: (Cin, Cout, 3, 3)
        return jax.random.normal(k, (ci, co, 3, 3), jnp.float32) * 0.05

    ks = jax.random.split(key, 10)
    return {
        "down1": (conv_w(ks[0], 64, 3),    jax.random.normal(ks[1], (64,)) * 0.05),
        "down2": (conv_w(ks[2], 128, 64),  jax.random.normal(ks[3], (128,)) * 0.05),
        "down3": (conv_w(ks[4], 256, 128), jax.random.normal(ks[5], (256,)) * 0.05),
        "up1":   (convT_w(ks[6], 256, 128), jax.random.normal(ks[7], (128,)) * 0.05),
        "up2":   (convT_w(ks[8], 128, 64),  jax.random.normal(ks[9], (64,)) * 0.05),
    }


def prepare_generator_params(params):
    """One-time re-layout: matmul-ready, 128-padded, bf16 weights + f32 biases."""
    prep = {}
    for name in ("down1", "down2", "down3"):
        w, b = params[name]                              # (Cout, Cin, 3, 3), (Cout,)
        cout, cin = w.shape[0], w.shape[1]
        wmat = w.transpose(2, 3, 1, 0).reshape(9 * cin, cout)          # K=(kh,kw,ci)
        kp, cp = _round_up(9 * cin, LANE), _round_up(cout, LANE)
        prep[name] = (_pad2(wmat, kp, cp).astype(jnp.bfloat16),
                      _pad2(b.reshape(1, -1), 1, cp).astype(jnp.float32))
    for name in ("up1", "up2"):
        w, b = params[name]                              # (Cin, Cout, 3, 3), (Cout,)
        cin, cout = w.shape[0], w.shape[1]
        z = jnp.zeros((cin, cout), w.dtype)
        t = lambda kh, kw: w[:, :, kh, kw]               # (Cin, Cout) tap
        # K row blocks = [x(r,c), x(r,c+1), x(r+1,c), x(r+1,c+1)];
        # column blocks = output phases (pr, pc) in order (0,0),(0,1),(1,0),(1,1).
        cols = [
            jnp.concatenate([t(1, 1), z,        z,        z       ], axis=0),
            jnp.concatenate([t(1, 2), t(1, 0),  z,        z       ], axis=0),
            jnp.concatenate([t(2, 1), z,        t(0, 1),  z       ], axis=0),
            jnp.concatenate([t(2, 2), t(2, 0),  t(0, 2),  t(0, 0) ], axis=0),
        ]
        wmat = jnp.concatenate(cols, axis=1)             # (4*Cin, 4*Cout)
        bias = jnp.tile(b, 4).reshape(1, -1)             # bias once per phase column
        kp, cp = _round_up(4 * cin, LANE), _round_up(4 * cout, LANE)
        prep[name] = (_pad2(wmat, kp, cp).astype(jnp.bfloat16),
                      _pad2(bias, 1, cp).astype(jnp.float32))
    return prep


def generator_forward(prepared, x):
    """x: (N, 3, H, W) NCHW (PyTorch layout) -> NCHW output, f32."""
    h = jnp.transpose(x, (0, 2, 3, 1)).astype(jnp.bfloat16)   # NCHW -> NHWC, bf16 once
    h = down_layer(h, prepared["down1"], 64,  jnp.bfloat16)   # (N, H/2, W/2,  64)
    h = down_layer(h, prepared["down2"], 128, jnp.bfloat16)   # (N, H/4, W/4, 128)
    h = down_layer(h, prepared["down3"], 256, jnp.bfloat16)   # (N, H/8, W/8, 256)
    h = up_layer(h, prepared["up1"], 128, jnp.bfloat16)       # (N, 2*H/8-1, ..., 128)
    h = up_layer(h, prepared["up2"], 64,  jnp.float32)        # final layer stays f32
    return jnp.transpose(h, (0, 3, 1, 2))                     # back to NCHW


# --------------------------- pure-JAX reference -------------------------------
def _lrelu(x):
    return jnp.where(x >= 0, x, NEG_SLOPE * x)


def generator_ref(params, x):
    dn = ("NCHW", "OIHW", "NCHW")

    def down_ref(x, w, b):
        y = lax.conv_general_dilated(x, w, (2, 2), ((1, 1), (1, 1)),
                                     dimension_numbers=dn)
        return _lrelu(y + b.reshape(1, -1, 1, 1))

    def up_ref(x, w, b):
        w_eq = jnp.flip(w, axis=(2, 3)).transpose(1, 0, 2, 3)
        y = lax.conv_general_dilated(x, w_eq, (1, 1), ((1, 1), (1, 1)),
                                     lhs_dilation=(2, 2), dimension_numbers=dn)
        return _lrelu(y + b.reshape(1, -1, 1, 1))

    x1 = down_ref(x,  *params["down1"])
    x2 = down_ref(x1, *params["down2"])
    x3 = down_ref(x2, *params["down3"])
    y = up_ref(x3, *params["up1"])
    y = up_ref(y,  *params["up2"])
    return y


# ----------------------------------- main -------------------------------------
if __name__ == "__main__":
    key = jax.random.PRNGKey(0)
    kx, kp = jax.random.split(key)
    x = jax.random.normal(kx, (2, 3, 16, 16), jnp.float32)   # NCHW, like PyTorch
    params = init_generator_params(kp)
    prepared = prepare_generator_params(params)              # one-time weight re-layout

    fwd = jax.jit(generator_forward)
    out = jax.block_until_ready(fwd(prepared, x))
    assert out.shape == (2, 64, 5, 5), out.shape             # 16->8->4->2 ->3 ->5

    ref = jax.block_until_ready(generator_ref(params, x))
    # bf16 MXU inputs / bf16 inter-layer activations (f32 accumulation) -> loose tol.
    max_err = float(jnp.max(jnp.abs(out - ref)))
    assert jnp.allclose(out, ref, atol=5e-2, rtol=5e-2), max_err

    print("KERNEL_OK")
</pallas_src>

<mosaic_0001>
module attributes {stable_mosaic.version = 11 : i64} {
  func.func @_matmul_bias_lrelu_kernel(%arg0: i32, %arg1: memref<64x128xbf16, #tpu.memory_space<vmem>>, %arg2: memref<128x128xbf16, #tpu.memory_space<vmem>>, %arg3: memref<1x128xf32, #tpu.memory_space<vmem>>, %arg4: memref<64x128xbf16, #tpu.memory_space<vmem>>) attributes {dimension_semantics = [#tpu.dimension_semantics<parallel>], iteration_bounds = array<i64: 2>, scalar_prefetch = 0 : i64, scratch_operands = 0 : i64, tpu.core_type = #tpu.core_type<tc>, window_params = [{transform_indices = @transform_0, window_bounds = array<i64: 64, 128>}, {pipeline_mode = #tpu.pipeline_mode<synchronous>, transform_indices = @transform_1, window_bounds = array<i64: 128, 128>}, {pipeline_mode = #tpu.pipeline_mode<synchronous>, transform_indices = @transform_2, window_bounds = array<i64: 1, 128>}, {transform_indices = @transform_3, window_bounds = array<i64: 64, 128>}]} {
    %c0 = arith.constant 0 : index
    %c0_0 = arith.constant 0 : index
    %0 = vector.load %arg1[%c0, %c0_0] : memref<64x128xbf16, #tpu.memory_space<vmem>>, vector<64x128xbf16>
    %c0_1 = arith.constant 0 : index
    %c0_2 = arith.constant 0 : index
    %1 = vector.load %arg2[%c0_1, %c0_2] : memref<128x128xbf16, #tpu.memory_space<vmem>>, vector<128x128xbf16>
    %cst = arith.constant dense<0.000000e+00> : vector<64x128xf32>
    %2 = tpu.matmul %0, %1, %cst {dimension_numbers = #tpu.dot_dimension_numbers<[1], [0], [0], [1], [0, 0, 1, 1], [], []>} : vector<64x128xbf16>, vector<128x128xbf16>, vector<64x128xf32> -> vector<64x128xf32>
    %c0_3 = arith.constant 0 : index
    %c0_4 = arith.constant 0 : index
    %3 = vector.load %arg3[%c0_3, %c0_4] : memref<1x128xf32, #tpu.memory_space<vmem>>, vector<1x128xf32>
    %4 = vector.broadcast %3 : vector<1x128xf32> to vector<64x128xf32>
    %5 = arith.addf %2, %4 : vector<64x128xf32>
    %cst_5 = arith.constant 0.000000e+00 : f32
    %6 = vector.broadcast %cst_5 : f32 to vector<64x128xf32>
    %7 = arith.cmpf oge, %5, %6 : vector<64x128xf32>
    %cst_6 = arith.constant 0.00999999977 : f32
    %8 = vector.broadcast %cst_6 : f32 to vector<64x128xf32>
    %9 = arith.mulf %8, %5 : vector<64x128xf32>
    %10 = arith.select %7, %5, %9 : vector<64x128xi1>, vector<64x128xf32>
    %11 = arith.truncf %10 : vector<64x128xf32> to vector<64x128xbf16>
    %c0_7 = arith.constant 0 : index
    %c0_8 = arith.constant 0 : index
    %12 = vector.load %arg4[%c0_7, %c0_8] : memref<64x128xbf16, #tpu.memory_space<vmem>>, vector<64x128xbf16>
    tpu.vector_store %arg4[%c0_7, %c0_8], %11 {strides = array<i32>} : memref<64x128xbf16, #tpu.memory_space<vmem>>, vector<64x128xbf16>,
    return
  }
  func.func @transform_0(%arg0: i32) -> (i32, i32) {
    %c0_i32 = arith.constant 0 : i32
    %c0_i32_0 = arith.constant 0 : i32
    return %arg0, %c0_i32 : i32, i32
  }
  func.func @transform_1(%arg0: i32) -> (i32, i32) {
    %c0_i32 = arith.constant 0 : i32
    %c0_i32_0 = arith.constant 0 : i32
    %c0_i32_1 = arith.constant 0 : i32
    return %c0_i32, %c0_i32_0 : i32, i32
  }
  func.func @transform_2(%arg0: i32) -> (i32, i32) {
    %c0_i32 = arith.constant 0 : i32
    %c0_i32_0 = arith.constant 0 : i32
    %c0_i32_1 = arith.constant 0 : i32
    return %c0_i32, %c0_i32_0 : i32, i32
  }
  func.func @transform_3(%arg0: i32) -> (i32, i32) {
    %c0_i32 = arith.constant 0 : i32
    %c0_i32_0 = arith.constant 0 : i32
    return %arg0, %c0_i32 : i32, i32
  }
}

module attributes {stable_mosaic.version = 11 : i64} {
  func.func @_matmul_bias_lrelu_kernel(%arg0: i32, %arg1: memref<16x640xbf16, #tpu.memory_space<vmem>>, %arg2: memref<640x128xbf16, #tpu.memory_space<vmem>>, %arg3: memref<1x128xf32, #tpu.memory_space<vmem>>, %arg4: memref<16x128xbf16, #tpu.memory_space<vmem>>) attributes {dimension_semantics = [#tpu.dimension_semantics<parallel>], iteration_bounds = array<i64: 2>, scalar_prefetch = 0 : i64, scratch_operands = 0 : i64, tpu.core_type = #tpu.core_type<tc>, window_params = [{transform_indices = @transform_0, window_bounds = array<i64: 16, 640>}, {pipeline_mode = #tpu.pipeline_mode<synchronous>, transform_indices = @transform_1, window_bounds = array<i64: 640, 128>}, {pipeline_mode = #tpu.pipeline_mode<synchronous>, transform_indices = @transform_2, window_bounds = array<i64: 1, 128>}, {transform_indices = @transform_3, window_bounds = array<i64: 16, 128>}]} {
    %c0 = arith.constant 0 : index
    %c0_0 = arith.constant 0 : index
    %0 = vector.load %arg1[%c0, %c0_0] : memref<16x640xbf16, #tpu.memory_space<vmem>>, vector<16x640xbf16>
    %c0_1 = arith.constant 0 : index
    %c0_2 = arith.constant 0 : index
    %1 = vector.load %arg2[%c0_1, %c0_2] : memref<640x128xbf16, #tpu.memory_space<vmem>>, vector<640x128xbf16>
    %cst = arith.constant dense<0.000000e+00> : vector<16x128xf32>
    %2 = tpu.matmul %0, %1, %cst {dimension_numbers = #tpu.dot_dimension_numbers<[1], [0], [0], [1], [0, 0, 1, 1], [], []>} : vector<16x640xbf16>, vector<640x128xbf16>, vector<16x128xf32> -> vector<16x128xf32>
    %c0_3 = arith.constant 0 : index
    %c0_4 = arith.constant 0 : index
    %3 = vector.load %arg3[%c0_3, %c0_4] : memref<1x128xf32, #tpu.memory_space<vmem>>, vector<1x128xf32>
    %4 = vector.broadcast %3 : vector<1x128xf32> to vector<16x128xf32>
    %5 = arith.addf %2, %4 : vector<16x128xf32>
    %cst_5 = arith.constant 0.000000e+00 : f32
    %6 = vector.broadcast %cst_5 : f32 to vector<16x128xf32>
    %7 = arith.cmpf oge, %5, %6 : vector<16x128xf32>
    %cst_6 = arith.constant 0.00999999977 : f32
    %8 = vector.broadcast %cst_6 : f32 to vector<16x128xf32>
    %9 = arith.mulf %8, %5 : vector<16x128xf32>
    %10 = arith.select %7, %5, %9 : vector<16x128xi1>, vector<16x128xf32>
    %11 = arith.truncf %10 : vector<16x128xf32> to vector<16x128xbf16>
    %c0_7 = arith.constant 0 : index
    %c0_8 = arith.constant 0 : index
    %12 = vector.load %arg4[%c0_7, %c0_8] : memref<16x128xbf16, #tpu.memory_space<vmem>>, vector<16x128xbf16>
    tpu.vector_store %arg4[%c0_7, %c0_8], %11 {strides = array<i32>} : memref<16x128xbf16, #tpu.memory_space<vmem>>, vector<16x128xbf16>,
    return
  }
  func.func @transform_0(%arg0: i32) -> (i32, i32) {
    %c0_i32 = arith.constant 0 : i32
    %c0_i32_0 = arith.constant 0 : i32
    return %arg0, %c0_i32 : i32, i32
  }
  func.func @transform_1(%arg0: i32) -> (i32, i32) {
    %c0_i32 = arith.constant 0 : i32
    %c0_i32_0 = arith.constant 0 : i32
    %c0_i32_1 = arith.constant 0 : i32
    return %c0_i32, %c0_i32_0 : i32, i32
  }
  func.func @transform_2(%arg0: i32) -> (i32, i32) {
    %c0_i32 = arith.constant 0 : i32
    %c0_i32_0 = arith.constant 0 : i32
    %c0_i32_1 = arith.constant 0 : i32
    return %c0_i32, %c0_i32_0 : i32, i32
  }
  func.func @transform_3(%arg0: i32) -> (i32, i32) {
    %c0_i32 = arith.constant 0 : i32
    %c0_i32_0 = arith.constant 0 : i32
    return %arg0, %c0_i32 : i32, i32
  }
}

module attributes {stable_mosaic.version = 11 : i64} {
  func.func @_matmul_bias_lrelu_kernel(%arg0: i32, %arg1: memref<16x1152xbf16, #tpu.memory_space<vmem>>, %arg2: memref<1152x256xbf16, #tpu.memory_space<vmem>>, %arg3: memref<1x256xf32, #tpu.memory_space<vmem>>, %arg4: memref<16x256xbf16, #tpu.memory_space<vmem>>) attributes {dimension_semantics = [#tpu.dimension_semantics<parallel>], iteration_bounds = array<i64: 1>, scalar_prefetch = 0 : i64, scratch_operands = 0 : i64, tpu.core_type = #tpu.core_type<tc>, window_params = [{transform_indices = @transform_0, window_bounds = array<i64: 16, 1152>}, {pipeline_mode = #tpu.pipeline_mode<synchronous>, transform_indices = @transform_1, window_bounds = array<i64: 1152, 256>}, {pipeline_mode = #tpu.pipeline_mode<synchronous>, transform_indices = @transform_2, window_bounds = array<i64: 1, 256>}, {transform_indices = @transform_3, window_bounds = array<i64: 16, 256>}]} {
    %c0 = arith.constant 0 : index
    %c0_0 = arith.constant 0 : index
    %0 = vector.load %arg1[%c0, %c0_0] : memref<16x1152xbf16, #tpu.memory_space<vmem>>, vector<16x1152xbf16>
    %c0_1 = arith.constant 0 : index
    %c0_2 = arith.constant 0 : index
    %1 = vector.load %arg2[%c0_1, %c0_2] : memref<1152x256xbf16, #tpu.memory_space<vmem>>, vector<1152x256xbf16>
    %cst = arith.constant dense<0.000000e+00> : vector<16x256xf32>
    %2 = tpu.matmul %0, %1, %cst {dimension_numbers = #tpu.dot_dimension_numbers<[1], [0], [0], [1], [0, 0, 1, 1], [], []>} : vector<16x1152xbf16>, vector<1152x256xbf16>, vector<16x256xf32> -> vector<16x256xf32>
    %c0_3 = arith.constant 0 : index
    %c0_4 = arith.constant 0 : index
    %3 = vector.load %arg3[%c0_3, %c0_4] : memref<1x256xf32, #tpu.memory_space<vmem>>, vector<1x256xf32>
    %4 = vector.broadcast %3 : vector<1x256xf32> to vector<16x256xf32>
    %5 = arith.addf %2, %4 : vector<16x256xf32>
    %cst_5 = arith.constant 0.000000e+00 : f32
    %6 = vector.broadcast %cst_5 : f32 to vector<16x256xf32>
    %7 = arith.cmpf oge, %5, %6 : vector<16x256xf32>
    %cst_6 = arith.constant 0.00999999977 : f32
    %8 = vector.broadcast %cst_6 : f32 to vector<16x256xf32>
    %9 = arith.mulf %8, %5 : vector<16x256xf32>
    %10 = arith.select %7, %5, %9 : vector<16x256xi1>, vector<16x256xf32>
    %11 = arith.truncf %10 : vector<16x256xf32> to vector<16x256xbf16>
    %c0_7 = arith.constant 0 : index
    %c0_8 = arith.constant 0 : index
    %12 = vector.load %arg4[%c0_7, %c0_8] : memref<16x256xbf16, #tpu.memory_space<vmem>>, vector<16x256xbf16>
    tpu.vector_store %arg4[%c0_7, %c0_8], %11 {strides = array<i32>} : memref<16x256xbf16, #tpu.memory_space<vmem>>, vector<16x256xbf16>,
    return
  }
  func.func @transform_0(%arg0: i32) -> (i32, i32) {
    %c0_i32 = arith.constant 0 : i32
    %c0_i32_0 = arith.constant 0 : i32
    return %arg0, %c0_i32 : i32, i32
  }
  func.func @transform_1(%arg0: i32) -> (i32, i32) {
    %c0_i32 = arith.constant 0 : i32
    %c0_i32_0 = arith.constant 0 : i32
    %c0_i32_1 = arith.constant 0 : i32
    return %c0_i32, %c0_i32_0 : i32, i32
  }
  func.func @transform_2(%arg0: i32) -> (i32, i32) {
    %c0_i32 = arith.constant 0 : i32
    %c0_i32_0 = arith.constant 0 : i32
    %c0_i32_1 = arith.constant 0 : i32
    return %c0_i32, %c0_i32_0 : i32, i32
  }
  func.func @transform_3(%arg0: i32) -> (i32, i32) {
    %c0_i32 = arith.constant 0 : i32
    %c0_i32_0 = arith.constant 0 : i32
    return %arg0, %c0_i32 : i32, i32
  }
}

module attributes {stable_mosaic.version = 11 : i64} {
  func.func @_matmul_bias_lrelu_kernel(%arg0: i32, %arg1: memref<16x1024xbf16, #tpu.memory_space<vmem>>, %arg2: memref<1024x512xbf16, #tpu.memory_space<vmem>>, %arg3: memref<1x512xf32, #tpu.memory_space<vmem>>, %arg4: memref<16x512xbf16, #tpu.memory_space<vmem>>) attributes {dimension_semantics = [#tpu.dimension_semantics<parallel>], iteration_bounds = array<i64: 1>, scalar_prefetch = 0 : i64, scratch_operands = 0 : i64, tpu.core_type = #tpu.core_type<tc>, window_params = [{transform_indices = @transform_0, window_bounds = array<i64: 16, 1024>}, {pipeline_mode = #tpu.pipeline_mode<synchronous>, transform_indices = @transform_1, window_bounds = array<i64: 1024, 512>}, {pipeline_mode = #tpu.pipeline_mode<synchronous>, transform_indices = @transform_2, window_bounds = array<i64: 1, 512>}, {transform_indices = @transform_3, window_bounds = array<i64: 16, 512>}]} {
    %c0 = arith.constant 0 : index
    %c0_0 = arith.constant 0 : index
    %0 = vector.load %arg1[%c0, %c0_0] : memref<16x1024xbf16, #tpu.memory_space<vmem>>, vector<16x1024xbf16>
    %c0_1 = arith.constant 0 : index
    %c0_2 = arith.constant 0 : index
    %1 = vector.load %arg2[%c0_1, %c0_2] : memref<1024x512xbf16, #tpu.memory_space<vmem>>, vector<1024x512xbf16>
    %cst = arith.constant dense<0.000000e+00> : vector<16x512xf32>
    %2 = tpu.matmul %0, %1, %cst {dimension_numbers = #tpu.dot_dimension_numbers<[1], [0], [0], [1], [0, 0, 1, 1], [], []>} : vector<16x1024xbf16>, vector<1024x512xbf16>, vector<16x512xf32> -> vector<16x512xf32>
    %c0_3 = arith.constant 0 : index
    %c0_4 = arith.constant 0 : index
    %3 = vector.load %arg3[%c0_3, %c0_4] : memref<1x512xf32, #tpu.memory_space<vmem>>, vector<1x512xf32>
    %4 = vector.broadcast %3 : vector<1x512xf32> to vector<16x512xf32>
    %5 = arith.addf %2, %4 : vector<16x512xf32>
    %cst_5 = arith.constant 0.000000e+00 : f32
    %6 = vector.broadcast %cst_5 : f32 to vector<16x512xf32>
    %7 = arith.cmpf oge, %5, %6 : vector<16x512xf32>
    %cst_6 = arith.constant 0.00999999977 : f32
    %8 = vector.broadcast %cst_6 : f32 to vector<16x512xf32>
    %9 = arith.mulf %8, %5 : vector<16x512xf32>
    %10 = arith.select %7, %5, %9 : vector<16x512xi1>, vector<16x512xf32>
    %11 = arith.truncf %10 : vector<16x512xf32> to vector<16x512xbf16>
    %c0_7 = arith.constant 0 : index
    %c0_8 = arith.constant 0 : index
    %12 = vector.load %arg4[%c0_7, %c0_8] : memref<16x512xbf16, #tpu.memory_space<vmem>>, vector<16x512xbf16>
    tpu.vector_store %arg4[%c0_7, %c0_8], %11 {strides = array<i32>} : memref<16x512xbf16, #tpu.memory_space<vmem>>, vector<16x512xbf16>,
    return
  }
  func.func @transform_0(%arg0: i32) -> (i32, i32) {
    %c0_i32 = arith.constant 0 : i32
    %c0_i32_0 = arith.constant 0 : i32
    return %arg0, %c0_i32 : i32, i32
  }
  func.func @transform_1(%arg0: i32) -> (i32, i32) {
    %c0_i32 = arith.constant 0 : i32
    %c0_i32_0 = arith.constant 0 : i32
    %c0_i32_1 = arith.constant 0 : i32
    return %c0_i32, %c0_i32_0 : i32, i32
  }
  func.func @transform_2(%arg0: i32) -> (i32, i32) {
    %c0_i32 = arith.constant 0 : i32
    %c0_i32_0 = arith.constant 0 : i32
    %c0_i32_1 = arith.constant 0 : i32
    return %c0_i32, %c0_i32_0 : i32, i32
  }
  func.func @transform_3(%arg0: i32) -> (i32, i32) {
    %c0_i32 = arith.constant 0 : i32
    %c0_i32_0 = arith.constant 0 : i32
    return %arg0, %c0_i32 : i32, i32
  }
}

module attributes {stable_mosaic.version = 11 : i64} {
  func.func @_matmul_bias_lrelu_kernel(%arg0: i32, %arg1: memref<32x512xbf16, #tpu.memory_space<vmem>>, %arg2: memref<512x256xbf16, #tpu.memory_space<vmem>>, %arg3: memref<1x256xf32, #tpu.memory_space<vmem>>, %arg4: memref<32x256xf32, #tpu.memory_space<vmem>>) attributes {dimension_semantics = [#tpu.dimension_semantics<parallel>], iteration_bounds = array<i64: 1>, scalar_prefetch = 0 : i64, scratch_operands = 0 : i64, tpu.core_type = #tpu.core_type<tc>, window_params = [{transform_indices = @transform_0, window_bounds = array<i64: 32, 512>}, {pipeline_mode = #tpu.pipeline_mode<synchronous>, transform_indices = @transform_1, window_bounds = array<i64: 512, 256>}, {pipeline_mode = #tpu.pipeline_mode<synchronous>, transform_indices = @transform_2, window_bounds = array<i64: 1, 256>}, {transform_indices = @transform_3, window_bounds = array<i64: 32, 256>}]} {
    %c0 = arith.constant 0 : index
    %c0_0 = arith.constant 0 : index
    %0 = vector.load %arg1[%c0, %c0_0] : memref<32x512xbf16, #tpu.memory_space<vmem>>, vector<32x512xbf16>
    %c0_1 = arith.constant 0 : index
    %c0_2 = arith.constant 0 : index
    %1 = vector.load %arg2[%c0_1, %c0_2] : memref<512x256xbf16, #tpu.memory_space<vmem>>, vector<512x256xbf16>
    %cst = arith.constant dense<0.000000e+00> : vector<32x256xf32>
    %2 = tpu.matmul %0, %1, %cst {dimension_numbers = #tpu.dot_dimension_numbers<[1], [0], [0], [1], [0, 0, 1, 1], [], []>} : vector<32x512xbf16>, vector<512x256xbf16>, vector<32x256xf32> -> vector<32x256xf32>
    %c0_3 = arith.constant 0 : index
    %c0_4 = arith.constant 0 : index
    %3 = vector.load %arg3[%c0_3, %c0_4] : memref<1x256xf32, #tpu.memory_space<vmem>>, vector<1x256xf32>
    %4 = vector.broadcast %3 : vector<1x256xf32> to vector<32x256xf32>
    %5 = arith.addf %2, %4 : vector<32x256xf32>
    %cst_5 = arith.constant 0.000000e+00 : f32
    %6 = vector.broadcast %cst_5 : f32 to vector<32x256xf32>
    %7 = arith.cmpf oge, %5, %6 : vector<32x256xf32>
    %cst_6 = arith.constant 0.00999999977 : f32
    %8 = vector.broadcast %cst_6 : f32 to vector<32x256xf32>
    %9 = arith.mulf %8, %5 : vector<32x256xf32>
    %10 = arith.select %7, %5, %9 : vector<32x256xi1>, vector<32x256xf32>
    %c0_7 = arith.constant 0 : index
    %c0_8 = arith.constant 0 : index
    %11 = vector.load %arg4[%c0_7, %c0_8] : memref<32x256xf32, #tpu.memory_space<vmem>>, vector<32x256xf32>
    tpu.vector_store %arg4[%c0_7, %c0_8], %10 {strides = array<i32>} : memref<32x256xf32, #tpu.memory_space<vmem>>, vector<32x256xf32>,
    return
  }
  func.func @transform_0(%arg0: i32) -> (i32, i32) {
    %c0_i32 = arith.constant 0 : i32
    %c0_i32_0 = arith.constant 0 : i32
    return %arg0, %c0_i32 : i32, i32
  }
  func.func @transform_1(%arg0: i32) -> (i32, i32) {
    %c0_i32 = arith.constant 0 : i32
    %c0_i32_0 = arith.constant 0 : i32
    %c0_i32_1 = arith.constant 0 : i32
    return %c0_i32, %c0_i32_0 : i32, i32
  }
  func.func @transform_2(%arg0: i32) -> (i32, i32) {
    %c0_i32 = arith.constant 0 : i32
    %c0_i32_0 = arith.constant 0 : i32
    %c0_i32_1 = arith.constant 0 : i32
    return %c0_i32, %c0_i32_0 : i32, i32
  }
  func.func @transform_3(%arg0: i32) -> (i32, i32) {
    %c0_i32 = arith.constant 0 : i32
    %c0_i32_0 = arith.constant 0 : i32
    return %arg0, %c0_i32 : i32, i32
  }
}

</mosaic_0001>

<llo_original>
// kernel: generator_forward.5
$region0: #{generator_forward.5}
  #allocation0 [shape = 'u32[]', space=smem, size = 0x4, offset = 0x4, fixed_abs, tag = 'smem constant byte address 0x4 - core index']
  #allocation1 [shape = 'u32[144,128]{1,0:T(1,128)}', space=vmem, size = 0x12000, scoped, tag = 'internal scratch']
  %s0 = inlined_call_operand.vmem [shape: bf16[128,128], index: 0, kind: input, shape index: {}]
  %s1 = inlined_call_operand.vmem [shape: bf16[128,128], index: 1, kind: input, shape index: {}]
  %s2 = inlined_call_operand.vmem [shape: f32[1,128], index: 2, kind: input, shape index: {}]
  %s3 = inlined_call_operand.vmem [shape: bf16[128,128], index: 3, kind: output, shape index: {}]
  %s4 = sld [smem:[#allocation0]]
  $region45: #{generator_forward.5} parent=0
    _
  %s6 = ssub.s32 1, %s4
  %s7 = scalar_select 0, %s6, %s4
  loop: start=0, step=1, limit=4
  $region2: #{generator_forward.5} parent=0 // loop_pre_header
    _
  $region3: #{generator_forward.5} parent=0 // loop_header
    %s9 = sphi 0, %s13
    %p10 = scmp.ge.s32.totalorder %s9, 4
    %s19 = sphi 0, %s21
    %s22 = sphi 0, %s19
    %s23 = sphi 0, %s22
    %s39 = sphi 0, %s23
    %s43 = sphi 0, %s43
    %s45 = sphi 0, %s43
    %s46 = sphi 0, %s45
    %s60 = sphi 0, %s46
    %s64 = sphi 0, %s64
    %s66 = sphi 0, %s64
    %s67 = sphi 0, %s66
    %s81 = sphi 0, %s67
    %s87 = sphi 0, %s89
    %s90 = sphi 0, %s87
    %s91 = sphi 0, %s90
    %s107 = sphi 0, %s91
  $region4: #{generator_forward.5} parent=0 // loop_header_branch
    %12 = sbr.rel (%p10) target = $region8
  $region5: #{generator_forward.5} parent=0 // loop_body
    %s14 = ssub.s32 %s9, 1
    %s15 = ssub.s32 %s9, 2
    %s16 = sadd.s32 %s9, 1
    %s17 = ssub.s32 %s9, %s16
    %p18 = scmp.eq.s32.totalorder %s17, 0
    %s20 = sadd.s32 %s19, 1
    %s21 = scalar_select %p18, %s19, %s20
    %p24 = pneg %p18
    %p25 = scmp.eq.s32.totalorder %s9, 1
    %p26 = por %p24, %p25
    %p27 = scmp.ne.s32.totalorder %s19, %s22
    %p28 = scmp.eq.s32.totalorder %s9, 0
    %p29 = por %p27, %p28
    %p30 = scmp.ne.s32.totalorder %s19, %s22
    %p31 = scmp.eq.s32.totalorder %s14, 1
    %p32 = por %p30, %p31
    %p33 = scmp.ne.s32.totalorder %s22, %s23
    %p34 = scmp.eq.s32.totalorder %s14, 0
    %p35 = por %p33, %p34
    %p36 = scmp.ne.s32.totalorder %s22, %s23
    %p37 = scmp.eq.s32.totalorder %s15, 1
    %p38 = por %p36, %p37
    %p40 = scmp.ne.s32.totalorder %s23, %s39
    %p41 = scmp.eq.s32.totalorder %s15, 0
    %p42 = por %p40, %p41
    %s44 = sadd.s32 %s43, 1
    %p47 = scmp.eq.s32.totalorder %s9, 1
    %p48 = scmp.ne.s32.totalorder %s43, %s45
    %p49 = scmp.eq.s32.totalorder %s9, 0
    %p50 = por %p48, %p49
    %p51 = scmp.ne.s32.totalorder %s43, %s45
    %p52 = scmp.eq.s32.totalorder %s14, 1
    %p53 = por %p51, %p52
    %p54 = scmp.ne.s32.totalorder %s45, %s46
    %p55 = scmp.eq.s32.totalorder %s14, 0
    %p56 = por %p54, %p55
    %p57 = scmp.ne.s32.totalorder %s45, %s46
    %p58 = scmp.eq.s32.totalorder %s15, 1
    %p59 = por %p57, %p58
    %p61 = scmp.ne.s32.totalorder %s46, %s60
    %p62 = scmp.eq.s32.totalorder %s15, 0
    %p63 = por %p61, %p62
    %s65 = sadd.s32 %s64, 1
    %p68 = scmp.eq.s32.totalorder %s9, 1
    %p69 = scmp.ne.s32.totalorder %s64, %s66
    %p70 = scmp.eq.s32.totalorder %s9, 0
    %p71 = por %p69, %p70
    %p72 = scmp.ne.s32.totalorder %s64, %s66
    %p73 = scmp.eq.s32.totalorder %s14, 1
    %p74 = por %p72, %p73
    %p75 = scmp.ne.s32.totalorder %s66, %s67
    %p76 = scmp.eq.s32.totalorder %s14, 0
    %p77 = por %p75, %p76
    %p78 = scmp.ne.s32.totalorder %s66, %s67
    %p79 = scmp.eq.s32.totalorder %s15, 1
    %p80 = por %p78, %p79
    %p82 = scmp.ne.s32.totalorder %s67, %s81
    %p83 = scmp.eq.s32.totalorder %s15, 0
    %p84 = por %p82, %p83
    %s85 = ssub.s32 %s9, %s16
    %p86 = scmp.eq.s32.totalorder %s85, 0
    %s88 = sadd.s32 %s87, 1
    %s89 = scalar_select %p86, %s87, %s88
    %p92 = pneg %p86
    %p93 = scmp.eq.s32.totalorder %s9, 1
    %p94 = por %p92, %p93
    %p95 = scmp.ne.s32.totalorder %s87, %s90
    %p96 = scmp.eq.s32.totalorder %s9, 0
    %p97 = por %p95, %p96
    %p98 = scmp.ne.s32.totalorder %s87, %s90
    %p99 = scmp.eq.s32.totalorder %s14, 1
    %p100 = por %p98, %p99
    %p101 = scmp.ne.s32.totalorder %s90, %s91
    %p102 = scmp.eq.s32.totalorder %s14, 0
    %p103 = por %p101, %p102
    %p104 = scmp.ne.s32.totalorder %s90, %s91
    %p105 = scmp.eq.s32.totalorder %s15, 1
    %p106 = por %p104, %p105
    %p108 = scmp.ne.s32.totalorder %s91, %s107
    %p109 = scmp.eq.s32.totalorder %s15, 0
    %p110 = por %p108, %p109
    %p111 = scmp.le.s32.totalorder 1, %s9
    %p112 = scmp.lt.s32.totalorder %s9, 3
    %p113 = pnand %p111, %p112
    %p114 = pneg %p113
    // Predicated region
    $region9: #{generator_forward.5} parent=5 // pred_check
      _
    $region10: #{generator_forward.5} parent=5 // pred_check_branch
      %116 = sbr.rel (%p113) target = $region12
    $region11: #{generator_forward.5} parent=5 // pred_region
      %s117 = ssub.s32 %s9, 1
      // Predicated region
      $region13: #{generator_forward.5} parent=11 // pred_check
        %p118 = pneg %p56
      $region14: #{generator_forward.5} parent=11 // pred_check_branch
        %120 = sbr.rel (%p118) target = $region16
      $region15: #{generator_forward.5} parent=11 // pred_region
        _
      $region16: #{generator_forward.5} parent=11 // pred_fallthru
        _
      // Predicated region
      $region17: #{generator_forward.5} parent=11 // pred_check
        %p121 = pneg %p77
      $region18: #{generator_forward.5} parent=11 // pred_check_branch
        %123 = sbr.rel (%p121) target = $region20
      $region19: #{generator_forward.5} parent=11 // pred_region
        _
      $region20: #{generator_forward.5} parent=11 // pred_fallthru
        _
    $region12: #{generator_forward.5} parent=5 // pred_fallthru
      _
    %p124 = scmp.lt.s32.totalorder %s9, 2
    // Predicated region
    $region21: #{generator_forward.5} parent=5 // pred_check
      %p125 = pneg %p124
    $region22: #{generator_forward.5} parent=5 // pred_check_branch
      %127 = sbr.rel (%p125) target = $region24
    $region23: #{generator_forward.5} parent=5 // pred_region
      // Predicated region
      $region25: #{generator_forward.5} parent=23 // pred_check
        %p128 = pneg %p29
      $region26: #{generator_forward.5} parent=23 // pred_check_branch
        %130 = sbr.rel (%p128) target = $region28
      $region27: #{generator_forward.5} parent=23 // pred_region
        %s131 = smul.u32 8, %s9
        %p132 = scmp.lt.s32.totalorder %s131, 15
        %s133 = scalar_select %p132, %s131, 15
        %s134 = smul.addr %s133, 4
        %s135 = scalar_lea.vmem %s0, %s134
        %s136 = smul.u32 8, %s9
      $region28: #{generator_forward.5} parent=23 // pred_fallthru
        _
    $region24: #{generator_forward.5} parent=5 // pred_fallthru
      _
    %p137 = scmp.le.s32.totalorder 1, %s9
    %p138 = scmp.lt.s32.totalorder %s9, 3
    %p139 = pnand %p137, %p138
    %p140 = pneg %p139
    // Predicated region
    $region29: #{generator_forward.5} parent=5 // pred_check
      _
    $region30: #{generator_forward.5} parent=5 // pred_check_branch
      %142 = sbr.rel (%p139) target = $region32
    $region31: #{generator_forward.5} parent=5 // pred_region
      %s143 = ssub.s32 %s9, 1
      %s144 = smul.u32 8, %s14
      %p145 = scmp.lt.s32.totalorder %s144, 15
      %s146 = scalar_select %p145, %s144, 15
      %s147 = smul.addr %s146, 4
      %s148 = scalar_lea.vmem %s0, %s147
      %p149 = pneg %p35
      %p150 = pneg %p32
      %p151 = pneg %p56
      %p152 = pneg %p53
      %p153 = pneg %p77
      %p154 = pneg %p74
      %p155 = pneg %p103
      %p156 = pneg %p100
      %s157 = smul.u32 8, %s14
      %p158 = scmp.lt.s32.totalorder %s157, 15
      %s159 = scalar_select %p158, %s157, 15
      %s160 = smul.addr %s159, 4
      %s161 = scalar_lea.vmem %s3, %s160
      %s162 = smul.u32 8, %s14
      %p163 = scmp.lt.s32.totalorder %s162, 15
      %s164 = scalar_select %p163, %s162, 15
      %s165 = smul.addr %s164, 4
      %s166 = scalar_lea.vmem %s0, %s165
      %s167 = smul.u32 8, %s14
      %s168 = smul.u32 8, %s14
      %p169 = scmp.lt.s32.totalorder %s168, 15
      %s170 = scalar_select %p169, %s168, 15
      %s171 = smul.addr %s170, 4
      %s172 = scalar_lea.vmem %s3, %s171
      %s173 = smul.u32 8, %s14
      %v175 = vld [vmem:[%s166] sm:$0xf]
      %v176 = vld [vmem:[%s166 + $0x4] sm:$0xf]
      %v177 = vld [vmem:[%s166 + $0x8] sm:$0xf]
      %v178 = vld [vmem:[%s166 + $0xc] sm:$0xf]
      %v179 = vld [vmem:[%s166 + $0x10] sm:$0xf]
      %v180 = vld [vmem:[%s166 + $0x14] sm:$0xf]
      %v181 = vld [vmem:[%s166 + $0x18] sm:$0xf]
      %v182 = vld [vmem:[%s166 + $0x1c] sm:$0xf]
      %v183 = vld [vmem:[%s1] sm:$0xf]
      %v184 = vld [vmem:[%s1 + $0x4] sm:$0xf]
      %v185 = vld [vmem:[%s1 + $0x8] sm:$0xf]
      %v186 = vld [vmem:[%s1 + $0xc] sm:$0xf]
      %v187 = vld [vmem:[%s1 + $0x10] sm:$0xf]
      %v188 = vld [vmem:[%s1 + $0x14] sm:$0xf]
      %v189 = vld [vmem:[%s1 + $0x18] sm:$0xf]
      %v190 = vld [vmem:[%s1 + $0x1c] sm:$0xf]
      %v191 = vld [vmem:[%s1 + $0x20] sm:$0xf]
      %v192 = vld [vmem:[%s1 + $0x24] sm:$0xf]
      %v193 = vld [vmem:[%s1 + $0x28] sm:$0xf]
      %v194 = vld [vmem:[%s1 + $0x2c] sm:$0xf]
      %v195 = vld [vmem:[%s1 + $0x30] sm:$0xf]
      %v196 = vld [vmem:[%s1 + $0x34] sm:$0xf]
      %v197 = vld [vmem:[%s1 + $0x38] sm:$0xf]
      %v198 = vld [vmem:[%s1 + $0x3c] sm:$0xf]
      %v199 = vld [vmem:[%s2] sm:$0x1]
      %v201 = vlaneseq
      %v202 = vshrl.u32 %v201, 7
      %v203 = vsub.s32 0, %v202
      %v204 = vrot.slane %v199, %v203
      %v214 = vunpack.c.l.b16 %v175
      %v215 = vunpack.c.l.b16 %v176
      %v216 = vunpack.c.l.b16 %v177
      %v217 = vunpack.c.l.b16 %v178
      %v218 = vunpack.c.l.b16 %v179
      %v219 = vunpack.c.l.b16 %v180
      %v220 = vunpack.c.l.b16 %v181
      %v221 = vunpack.c.l.b16 %v182
      %v222 = vpack.c.b16 %v215, %v214
      %v223 = vpack.c.b16 %v217, %v216
      %v224 = vpack.c.b16 %v219, %v218
      %v225 = vpack.c.b16 %v221, %v220
      %v246 = vunpack.c.l.b16 %v183
      %v247 = vunpack.c.l.b16 %v184
      %v248 = vunpack.c.l.b16 %v185
      %v249 = vunpack.c.l.b16 %v186
      %v250 = vunpack.c.l.b16 %v187
      %v251 = vunpack.c.l.b16 %v188
      %v252 = vunpack.c.l.b16 %v189
      %v253 = vunpack.c.l.b16 %v190
      %v254 = vunpack.c.l.b16 %v191
      %v255 = vunpack.c.l.b16 %v192
      %v256 = vunpack.c.l.b16 %v193
      %v257 = vunpack.c.l.b16 %v194
      %v258 = vunpack.c.l.b16 %v195
      %v259 = vunpack.c.l.b16 %v196
      %v260 = vunpack.c.l.b16 %v197
      %v261 = vunpack.c.l.b16 %v198
      %v262 = vpack.c.b16 %v247, %v246
      %v263 = vpack.c.b16 %v249, %v248
      %v264 = vpack.c.b16 %v251, %v250
      %v265 = vpack.c.b16 %v253, %v252
      %v266 = vpack.c.b16 %v255, %v254
      %v267 = vpack.c.b16 %v257, %v256
      %v268 = vpack.c.b16 %v259, %v258
      %v269 = vpack.c.b16 %v261, %v260
      %278 = vmatprep.subr.bf16.mxu0 0
      %279 = vmatpush1.bf16.msra.mxu0 %v269
      %280 = vmatprep.subr.bf16.mxu0 0
      %281 = vmatpush1.bf16.msra.mxu0 %v268
      %282 = vmatprep.subr.bf16.mxu0 0
      %283 = vmatpush1.bf16.msra.mxu0 %v267
      %284 = vmatprep.subr.bf16.mxu0 0
      %285 = vmatpush1.bf16.msra.mxu0 %v266
      %286 = vmatprep.subr.bf16.mxu0 0
      %287 = vmatpush1.bf16.msra.mxu0 %v265
      %288 = vmatprep.subr.bf16.mxu0 0
      %289 = vmatpush1.bf16.msra.mxu0 %v264
      %290 = vmatprep.subr.bf16.mxu0 0
      %291 = vmatpush1.bf16.msra.mxu0 %v263
      %292 = vmatprep.subr.bf16.mxu0 0
      %293 = vmatpush1.bf16.msra.mxu0 %v262
      %294 = vmatprep.subr.bf16.mxu0 0
      %295 = vmatpush2.bf16.msra.mxu0 0
      %296 = vmatprep.subr.bf16.mxu0 0
      %297 = vmatpush2.bf16.msra.mxu0 0
      %298 = vmatprep.subr.bf16.mxu0 0
      %299 = vmatpush2.bf16.msra.mxu0 0
      %300 = vmatprep.subr.bf16.mxu0 0
      %301 = vmatpush2.bf16.msra.mxu0 0
      %302 = vmatprep.subr.bf16.mxu0 0
      %303 = vmatpush2.bf16.msra.mxu0 0
      %304 = vmatprep.subr.bf16.mxu0 0
      %305 = vmatpush2.bf16.msra.mxu0 0
      %306 = vmatprep.subr.bf16.mxu0 0
      %307 = vmatpush2.bf16.msra.mxu0 0
      %308 = vmatprep.subr.bf16.mxu0 0
      %309 = vmatpush2.bf16.msra.mxu0 0
      %310 = vmatprep.mubr.bf16.mxu0 0
      %311 = vmatmul.mubr.bf16.gmra.mxu0 %v222
      %v312 = vpop.f32.mrf.mxu0
      %v313 = vadd.f32 %v204, %v312
      %v314 = vpop.f32.mrf.mxu0
      %v315 = vpop.f32.mrf.mxu0
      %v316 = vadd.f32 %v204, %v315
      %v317 = vpop.f32.mrf.mxu0
      %318 = vmatprep.mubr.bf16.mxu0 0
      %319 = vmatmul.mubr.bf16.gmra.mxu0 %v223
      %v320 = vpop.f32.mrf.mxu0
      %v321 = vadd.f32 %v204, %v320
      %v322 = vpop.f32.mrf.mxu0
      %v323 = vpop.f32.mrf.mxu0
      %v324 = vadd.f32 %v204, %v323
      %v325 = vpop.f32.mrf.mxu0
      %326 = vmatprep.mubr.bf16.mxu0 0
      %327 = vmatmul.mubr.bf16.gmra.mxu0 %v224
      %v328 = vpop.f32.mrf.mxu0
      %v329 = vadd.f32 %v204, %v328
      %v330 = vpop.f32.mrf.mxu0
      %v331 = vpop.f32.mrf.mxu0
      %v332 = vadd.f32 %v204, %v331
      %v333 = vpop.f32.mrf.mxu0
      %334 = vmatprep.mubr.bf16.mxu0 0
      %335 = vmatmul.mubr.bf16.gmra.mxu0 %v225
      %v336 = vpop.f32.mrf.mxu0
      %v337 = vadd.f32 %v204, %v336
      %v338 = vpop.f32.mrf.mxu0
      %v339 = vpop.f32.mrf.mxu0
      %v340 = vadd.f32 %v204, %v339
      %v341 = vpop.f32.mrf.mxu0
      %342 = vdwg.mxu0
      %vm343 = vcmp.ge.f32.partialorder %v313, 0.0
      %vm344 = vcmp.ge.f32.partialorder %v316, 0.0
      %vm345 = vcmp.ge.f32.partialorder %v321, 0.0
      %vm346 = vcmp.ge.f32.partialorder %v324, 0.0
      %vm347 = vcmp.ge.f32.partialorder %v329, 0.0
      %vm348 = vcmp.ge.f32.partialorder %v332, 0.0
      %vm349 = vcmp.ge.f32.partialorder %v337, 0.0
      %vm350 = vcmp.ge.f32.partialorder %v340, 0.0
      %v351 = vmul.f32 %v313, 0.01
      %v352 = vmul.f32 %v316, 0.01
      %v353 = vmul.f32 %v321, 0.01
      %v354 = vmul.f32 %v324, 0.01
      %v355 = vmul.f32 %v329, 0.01
      %v356 = vmul.f32 %v332, 0.01
      %v357 = vmul.f32 %v337, 0.01
      %v358 = vmul.f32 %v340, 0.01
      %v359 = vsel %vm343, %v313, %v351
      %v360 = vsel %vm344, %v316, %v352
      %v361 = vsel %vm345, %v321, %v353
      %v362 = vsel %vm346, %v324, %v354
      %v363 = vsel %vm347, %v329, %v355
      %v364 = vsel %vm348, %v332, %v356
      %v365 = vsel %vm349, %v337, %v357
      %v366 = vsel %vm350, %v340, %v358
      %v367 = vpack.c.bf16 %v360, %v359
      %v368 = vpack.c.bf16 %v362, %v361
      %v369 = vpack.c.bf16 %v364, %v363
      %v370 = vpack.c.bf16 %v366, %v365
      %v375 = vunpack.c.l.b16 %v367
      %v376 = vunpack.c.h.b16 %v367
      %v377 = vunpack.c.l.b16 %v368
      %v378 = vunpack.c.h.b16 %v368
      %v379 = vunpack.c.l.b16 %v369
      %v380 = vunpack.c.h.b16 %v369
      %v381 = vunpack.c.l.b16 %v370
      %v382 = vunpack.c.h.b16 %v370
      %v383 = vpack.c.b16 %v375, %v375
      %v384 = vpack.c.b16 %v376, %v376
      %v385 = vpack.c.b16 %v377, %v377
      %v386 = vpack.c.b16 %v378, %v378
      %v387 = vpack.c.b16 %v379, %v379
      %v388 = vpack.c.b16 %v380, %v380
      %v389 = vpack.c.b16 %v381, %v381
      %v390 = vpack.c.b16 %v382, %v382
      %399 = vst [vmem:[%s172] sm:$0xf] %v383
      %400 = vst [vmem:[%s172 + $0x4] sm:$0xf] %v384
      %401 = vst [vmem:[%s172 + $0x8] sm:$0xf] %v385
      %402 = vst [vmem:[%s172 + $0xc] sm:$0xf] %v386
      %403 = vst [vmem:[%s172 + $0x10] sm:$0xf] %v387
      %404 = vst [vmem:[%s172 + $0x14] sm:$0xf] %v388
      %405 = vst [vmem:[%s172 + $0x18] sm:$0xf] %v389
      %406 = vst [vmem:[%s172 + $0x1c] sm:$0xf] %v390
      %s407 = smul.u32 8, %s14
      %p408 = scmp.lt.s32.totalorder %s407, 15
      %s409 = scalar_select %p408, %s407, 15
      %s410 = smul.addr %s409, 4
      %s411 = scalar_lea.vmem %s3, %s410
      // Predicated region
      $region33: #{generator_forward.5} parent=31 // pred_check
        %p412 = pneg %p100
      $region34: #{generator_forward.5} parent=31 // pred_check_branch
        %414 = sbr.rel (%p412) target = $region36
      $region35: #{generator_forward.5} parent=31 // pred_region
        %s415 = smul.u32 8, %s14
      $region36: #{generator_forward.5} parent=31 // pred_fallthru
        _
    $region32: #{generator_forward.5} parent=5 // pred_fallthru
      _
    %p416 = scmp.le.s32.totalorder 2, %s9
    // Predicated region
    $region37: #{generator_forward.5} parent=5 // pred_check
      %p417 = pneg %p416
    $region38: #{generator_forward.5} parent=5 // pred_check_branch
      %419 = sbr.rel (%p417) target = $region40
    $region39: #{generator_forward.5} parent=5 // pred_region
      %s420 = ssub.s32 %s9, 2
      // Predicated region
      $region41: #{generator_forward.5} parent=39 // pred_check
        %p421 = pneg %p106
      $region42: #{generator_forward.5} parent=39 // pred_check_branch
        %423 = sbr.rel (%p421) target = $region44
      $region43: #{generator_forward.5} parent=39 // pred_region
        %s424 = smul.u32 8, %s15
        %p425 = scmp.lt.s32.totalorder %s424, 15
        %s426 = scalar_select %p425, %s424, 15
        %s427 = smul.addr %s426, 4
        %s428 = scalar_lea.vmem %s3, %s427
      $region44: #{generator_forward.5} parent=39 // pred_fallthru
        _
    $region40: #{generator_forward.5} parent=5 // pred_fallthru
      _
  $region6: #{generator_forward.5} parent=0 // loop_footer
    %s13 = sadd.s32 1, %s9
  $region7: #{generator_forward.5} parent=0 // loop_footer_branch
    %8 = sbr.rel target = $region3
  $region8: #{generator_forward.5} parent=0 // loop_exit
    _

// kernel: generator_forward.6
$region0: #{generator_forward.6}
  #allocation0 [shape = 'u32[]', space=smem, size = 0x4, offset = 0x4, fixed_abs, tag = 'smem constant byte address 0x4 - core index']
  #allocation1 [shape = 'u32[144,128]{1,0:T(1,128)}', space=vmem, size = 0x12000, scoped, tag = 'internal scratch']
  %s0 = inlined_call_operand.vmem [shape: bf16[32,640], index: 0, kind: input, shape index: {}]
  %s1 = inlined_call_operand.vmem [shape: bf16[640,128], index: 1, kind: input, shape index: {}]
  %s2 = inlined_call_operand.vmem [shape: f32[1,128], index: 2, kind: input, shape index: {}]
  %s3 = inlined_call_operand.vmem [shape: bf16[32,128], index: 3, kind: output, shape index: {}]
  %s4 = sld [smem:[#allocation0]]
  $region45: #{generator_forward.6} parent=0
    _
  %s6 = ssub.s32 1, %s4
  %s7 = scalar_select 0, %s6, %s4
  loop: start=0, step=1, limit=4
  $region2: #{generator_forward.6} parent=0 // loop_pre_header
    _
  $region3: #{generator_forward.6} parent=0 // loop_header
    %s9 = sphi 0, %s13
    %p10 = scmp.ge.s32.totalorder %s9, 4
    %s19 = sphi 0, %s21
    %s22 = sphi 0, %s19
    %s23 = sphi 0, %s22
    %s39 = sphi 0, %s23
    %s43 = sphi 0, %s43
    %s45 = sphi 0, %s43
    %s46 = sphi 0, %s45
    %s60 = sphi 0, %s46
    %s64 = sphi 0, %s64
    %s66 = sphi 0, %s64
    %s67 = sphi 0, %s66
    %s81 = sphi 0, %s67
    %s87 = sphi 0, %s89
    %s90 = sphi 0, %s87
    %s91 = sphi 0, %s90
    %s107 = sphi 0, %s91
  $region4: #{generator_forward.6} parent=0 // loop_header_branch
    %12 = sbr.rel (%p10) target = $region8
  $region5: #{generator_forward.6} parent=0 // loop_body
    %s14 = ssub.s32 %s9, 1
    %s15 = ssub.s32 %s9, 2
    %s16 = sadd.s32 %s9, 1
    %s17 = ssub.s32 %s9, %s16
    %p18 = scmp.eq.s32.totalorder %s17, 0
    %s20 = sadd.s32 %s19, 1
    %s21 = scalar_select %p18, %s19, %s20
    %p24 = pneg %p18
    %p25 = scmp.eq.s32.totalorder %s9, 1
    %p26 = por %p24, %p25
    %p27 = scmp.ne.s32.totalorder %s19, %s22
    %p28 = scmp.eq.s32.totalorder %s9, 0
    %p29 = por %p27, %p28
    %p30 = scmp.ne.s32.totalorder %s19, %s22
    %p31 = scmp.eq.s32.totalorder %s14, 1
    %p32 = por %p30, %p31
    %p33 = scmp.ne.s32.totalorder %s22, %s23
    %p34 = scmp.eq.s32.totalorder %s14, 0
    %p35 = por %p33, %p34
    %p36 = scmp.ne.s32.totalorder %s22, %s23
    %p37 = scmp.eq.s32.totalorder %s15, 1
    %p38 = por %p36, %p37
    %p40 = scmp.ne.s32.totalorder %s23, %s39
    %p41 = scmp.eq.s32.totalorder %s15, 0
    %p42 = por %p40, %p41
    %s44 = sadd.s32 %s43, 1
    %p47 = scmp.eq.s32.totalorder %s9, 1
    %p48 = scmp.ne.s32.totalorder %s43, %s45
    %p49 = scmp.eq.s32.totalorder %s9, 0
    %p50 = por %p48, %p49
    %p51 = scmp.ne.s32.totalorder %s43, %s45
    %p52 = scmp.eq.s32.totalorder %s14, 1
    %p53 = por %p51, %p52
    %p54 = scmp.ne.s32.totalorder %s45, %s46
    %p55 = scmp.eq.s32.totalorder %s14, 0
    %p56 = por %p54, %p55
    %p57 = scmp.ne.s32.totalorder %s45, %s46
    %p58 = scmp.eq.s32.totalorder %s15, 1
    %p59 = por %p57, %p58
    %p61 = scmp.ne.s32.totalorder %s46, %s60
    %p62 = scmp.eq.s32.totalorder %s15, 0
    %p63 = por %p61, %p62
    %s65 = sadd.s32 %s64, 1
    %p68 = scmp.eq.s32.totalorder %s9, 1
    %p69 = scmp.ne.s32.totalorder %s64, %s66
    %p70 = scmp.eq.s32.totalorder %s9, 0
    %p71 = por %p69, %p70
    %p72 = scmp.ne.s32.totalorder %s64, %s66
    %p73 = scmp.eq.s32.totalorder %s14, 1
    %p74 = por %p72, %p73
    %p75 = scmp.ne.s32.totalorder %s66, %s67
    %p76 = scmp.eq.s32.totalorder %s14, 0
    %p77 = por %p75, %p76
    %p78 = scmp.ne.s32.totalorder %s66, %s67
    %p79 = scmp.eq.s32.totalorder %s15, 1
    %p80 = por %p78, %p79
    %p82 = scmp.ne.s32.totalorder %s67, %s81
    %p83 = scmp.eq.s32.totalorder %s15, 0
    %p84 = por %p82, %p83
    %s85 = ssub.s32 %s9, %s16
    %p86 = scmp.eq.s32.totalorder %s85, 0
    %s88 = sadd.s32 %s87, 1
    %s89 = scalar_select %p86, %s87, %s88
    %p92 = pneg %p86
    %p93 = scmp.eq.s32.totalorder %s9, 1
    %p94 = por %p92, %p93
    %p95 = scmp.ne.s32.totalorder %s87, %s90
    %p96 = scmp.eq.s32.totalorder %s9, 0
    %p97 = por %p95, %p96
    %p98 = scmp.ne.s32.totalorder %s87, %s90
    %p99 = scmp.eq.s32.totalorder %s14, 1
    %p100 = por %p98, %p99
    %p101 = scmp.ne.s32.totalorder %s90, %s91
    %p102 = scmp.eq.s32.totalorder %s14, 0
    %p103 = por %p101, %p102
    %p104 = scmp.ne.s32.totalorder %s90, %s91
    %p105 = scmp.eq.s32.totalorder %s15, 1
    %p106 = por %p104, %p105
    %p108 = scmp.ne.s32.totalorder %s91, %s107
    %p109 = scmp.eq.s32.totalorder %s15, 0
    %p110 = por %p108, %p109
    %p111 = scmp.le.s32.totalorder 1, %s9
    %p112 = scmp.lt.s32.totalorder %s9, 3
    %p113 = pnand %p111, %p112
    %p114 = pneg %p113
    // Predicated region
    $region9: #{generator_forward.6} parent=5 // pred_check
      _
    $region10: #{generator_forward.6} parent=5 // pred_check_branch
      %116 = sbr.rel (%p113) target = $region12
    $region11: #{generator_forward.6} parent=5 // pred_region
      %s117 = ssub.s32 %s9, 1
      // Predicated region
      $region13: #{generator_forward.6} parent=11 // pred_check
        %p118 = pneg %p56
      $region14: #{generator_forward.6} parent=11 // pred_check_branch
        %120 = sbr.rel (%p118) target = $region16
      $region15: #{generator_forward.6} parent=11 // pred_region
        _
      $region16: #{generator_forward.6} parent=11 // pred_fallthru
        _
      // Predicated region
      $region17: #{generator_forward.6} parent=11 // pred_check
        %p121 = pneg %p77
      $region18: #{generator_forward.6} parent=11 // pred_check_branch
        %123 = sbr.rel (%p121) target = $region20
      $region19: #{generator_forward.6} parent=11 // pred_region
        _
      $region20: #{generator_forward.6} parent=11 // pred_fallthru
        _
    $region12: #{generator_forward.6} parent=5 // pred_fallthru
      _
    %p124 = scmp.lt.s32.totalorder %s9, 2
    // Predicated region
    $region21: #{generator_forward.6} parent=5 // pred_check
      %p125 = pneg %p124
    $region22: #{generator_forward.6} parent=5 // pred_check_branch
      %127 = sbr.rel (%p125) target = $region24
    $region23: #{generator_forward.6} parent=5 // pred_region
      // Predicated region
      $region25: #{generator_forward.6} parent=23 // pred_check
        %p128 = pneg %p29
      $region26: #{generator_forward.6} parent=23 // pred_check_branch
        %130 = sbr.rel (%p128) target = $region28
      $region27: #{generator_forward.6} parent=23 // pred_region
        %s131 = smul.u32 2, %s9
        %p132 = scmp.lt.s32.totalorder %s131, 3
        %s133 = scalar_select %p132, %s131, 3
        %s134 = smul.addr %s133, 5
        %s135 = smul.addr %s134, 4
        %s136 = scalar_lea.vmem %s0, %s135
        %s137 = smul.u32 2, %s9
      $region28: #{generator_forward.6} parent=23 // pred_fallthru
        _
    $region24: #{generator_forward.6} parent=5 // pred_fallthru
      _
    %p138 = scmp.le.s32.totalorder 1, %s9
    %p139 = scmp.lt.s32.totalorder %s9, 3
    %p140 = pnand %p138, %p139
    %p141 = pneg %p140
    // Predicated region
    $region29: #{generator_forward.6} parent=5 // pred_check
      _
    $region30: #{generator_forward.6} parent=5 // pred_check_branch
      %143 = sbr.rel (%p140) target = $region32
    $region31: #{generator_forward.6} parent=5 // pred_region
      %s144 = ssub.s32 %s9, 1
      %s145 = smul.u32 2, %s14
      %p146 = scmp.lt.s32.totalorder %s145, 3
      %s147 = scalar_select %p146, %s145, 3
      %s148 = smul.addr %s147, 5
      %s149 = smul.addr %s148, 4
      %s150 = scalar_lea.vmem %s0, %s149
      %p151 = pneg %p35
      %p152 = pneg %p32
      %p153 = pneg %p56
      %p154 = pneg %p53
      %p155 = pneg %p77
      %p156 = pneg %p74
      %p157 = pneg %p103
      %p158 = pneg %p100
      %s159 = smul.u32 2, %s14
      %p160 = scmp.lt.s32.totalorder %s159, 3
      %s161 = scalar_select %p160, %s159, 3
      %s162 = smul.addr %s161, 4
      %s163 = scalar_lea.vmem %s3, %s162
      %s164 = smul.u32 2, %s14
      %p165 = scmp.lt.s32.totalorder %s164, 3
      %s166 = scalar_select %p165, %s164, 3
      %s167 = smul.addr %s166, 5
      %s168 = smul.addr %s167, 4
      %s169 = scalar_lea.vmem %s0, %s168
      %s170 = smul.u32 2, %s14
      %s171 = smul.u32 2, %s14
      %p172 = scmp.lt.s32.totalorder %s171, 3
      %s173 = scalar_select %p172, %s171, 3
      %s174 = smul.addr %s173, 4
      %s175 = scalar_lea.vmem %s3, %s174
      %s176 = smul.u32 2, %s14
      %v178 = vld [vmem:[%s169] sm:$0xff]
      %v179 = vld [vmem:[%s169 + $0x8] sm:$0xff]
      %v180 = vld [vmem:[%s169 + $0x10] sm:$0xf]
      %v181 = vld [vmem:[%s169 + $0x14] sm:$0xff]
      %v182 = vld [vmem:[%s169 + $0x1c] sm:$0xff]
      %v183 = vld [vmem:[%s169 + $0x24] sm:$0xf]
      %v184 = vld [vmem:[%s1] sm:$0xf]
      %v185 = vld [vmem:[%s1 + $0x4] sm:$0xf]
      %v186 = vld [vmem:[%s1 + $0x8] sm:$0xf]
      %v187 = vld [vmem:[%s1 + $0xc] sm:$0xf]
      %v188 = vld [vmem:[%s1 + $0x10] sm:$0xf]
      %v189 = vld [vmem:[%s1 + $0x14] sm:$0xf]
      %v190 = vld [vmem:[%s1 + $0x18] sm:$0xf]
      %v191 = vld [vmem:[%s1 + $0x1c] sm:$0xf]
      %v192 = vld [vmem:[%s1 + $0x20] sm:$0xf]
      %v193 = vld [vmem:[%s1 + $0x24] sm:$0xf]
      %v194 = vld [vmem:[%s1 + $0x28] sm:$0xf]
      %v195 = vld [vmem:[%s1 + $0x2c] sm:$0xf]
      %v196 = vld [vmem:[%s1 + $0x30] sm:$0xf]
      %v197 = vld [vmem:[%s1 + $0x34] sm:$0xf]
      %v198 = vld [vmem:[%s1 + $0x38] sm:$0xf]
      %v199 = vld [vmem:[%s1 + $0x3c] sm:$0xf]
      %v200 = vld [vmem:[%s1 + $0x40] sm:$0xf]
      %v201 = vld [vmem:[%s1 + $0x44] sm:$0xf]
      %v202 = vld [vmem:[%s1 + $0x48] sm:$0xf]
      %v203 = vld [vmem:[%s1 + $0x4c] sm:$0xf]
      %v204 = vld [vmem:[%s1 + $0x50] sm:$0xf]
      %v205 = vld [vmem:[%s1 + $0x54] sm:$0xf]
      %v206 = vld [vmem:[%s1 + $0x58] sm:$0xf]
      %v207 = vld [vmem:[%s1 + $0x5c] sm:$0xf]
      %v208 = vld [vmem:[%s1 + $0x60] sm:$0xf]
      %v209 = vld [vmem:[%s1 + $0x64] sm:$0xf]
      %v210 = vld [vmem:[%s1 + $0x68] sm:$0xf]
      %v211 = vld [vmem:[%s1 + $0x6c] sm:$0xf]
      %v212 = vld [vmem:[%s1 + $0x70] sm:$0xf]
      %v213 = vld [vmem:[%s1 + $0x74] sm:$0xf]
      %v214 = vld [vmem:[%s1 + $0x78] sm:$0xf]
      %v215 = vld [vmem:[%s1 + $0x7c] sm:$0xf]
      %v216 = vld [vmem:[%s1 + $0x80] sm:$0xf]
      %v217 = vld [vmem:[%s1 + $0x84] sm:$0xf]
      %v218 = vld [vmem:[%s1 + $0x88] sm:$0xf]
      %v219 = vld [vmem:[%s1 + $0x8c] sm:$0xf]
      %v220 = vld [vmem:[%s1 + $0x90] sm:$0xf]
      %v221 = vld [vmem:[%s1 + $0x94] sm:$0xf]
      %v222 = vld [vmem:[%s1 + $0x98] sm:$0xf]
      %v223 = vld [vmem:[%s1 + $0x9c] sm:$0xf]
      %v224 = vld [vmem:[%s1 + $0xa0] sm:$0xf]
      %v225 = vld [vmem:[%s1 + $0xa4] sm:$0xf]
      %v226 = vld [vmem:[%s1 + $0xa8] sm:$0xf]
      %v227 = vld [vmem:[%s1 + $0xac] sm:$0xf]
      %v228 = vld [vmem:[%s1 + $0xb0] sm:$0xf]
      %v229 = vld [vmem:[%s1 + $0xb4] sm:$0xf]
      %v230 = vld [vmem:[%s1 + $0xb8] sm:$0xf]
      %v231 = vld [vmem:[%s1 + $0xbc] sm:$0xf]
      %v232 = vld [vmem:[%s1 + $0xc0] sm:$0xf]
      %v233 = vld [vmem:[%s1 + $0xc4] sm:$0xf]
      %v234 = vld [vmem:[%s1 + $0xc8] sm:$0xf]
      %v235 = vld [vmem:[%s1 + $0xcc] sm:$0xf]
      %v236 = vld [vmem:[%s1 + $0xd0] sm:$0xf]
      %v237 = vld [vmem:[%s1 + $0xd4] sm:$0xf]
      %v238 = vld [vmem:[%s1 + $0xd8] sm:$0xf]
      %v239 = vld [vmem:[%s1 + $0xdc] sm:$0xf]
      %v240 = vld [vmem:[%s1 + $0xe0] sm:$0xf]
      %v241 = vld [vmem:[%s1 + $0xe4] sm:$0xf]
      %v242 = vld [vmem:[%s1 + $0xe8] sm:$0xf]
      %v243 = vld [vmem:[%s1 + $0xec] sm:$0xf]
      %v244 = vld [vmem:[%s1 + $0xf0] sm:$0xf]
      %v245 = vld [vmem:[%s1 + $0xf4] sm:$0xf]
      %v246 = vld [vmem:[%s1 + $0xf8] sm:$0xf]
      %v247 = vld [vmem:[%s1 + $0xfc] sm:$0xf]
      %v248 = vld [vmem:[%s1 + $0x100] sm:$0xf]
      %v249 = vld [vmem:[%s1 + $0x104] sm:$0xf]
      %v250 = vld [vmem:[%s1 + $0x108] sm:$0xf]
      %v251 = vld [vmem:[%s1 + $0x10c] sm:$0xf]
      %v252 = vld [vmem:[%s1 + $0x110] sm:$0xf]
      %v253 = vld [vmem:[%s1 + $0x114] sm:$0xf]
      %v254 = vld [vmem:[%s1 + $0x118] sm:$0xf]
      %v255 = vld [vmem:[%s1 + $0x11c] sm:$0xf]
      %v256 = vld [vmem:[%s1 + $0x120] sm:$0xf]
      %v257 = vld [vmem:[%s1 + $0x124] sm:$0xf]
      %v258 = vld [vmem:[%s1 + $0x128] sm:$0xf]
      %v259 = vld [vmem:[%s1 + $0x12c] sm:$0xf]
      %v260 = vld [vmem:[%s1 + $0x130] sm:$0xf]
      %v261 = vld [vmem:[%s1 + $0x134] sm:$0xf]
      %v262 = vld [vmem:[%s1 + $0x138] sm:$0xf]
      %v263 = vld [vmem:[%s1 + $0x13c] sm:$0xf]
      %v264 = vld [vmem:[%s2] sm:$0x1]
      %v266 = vlaneseq
      %v267 = vshrl.u32 %v266, 7
      %v268 = vsub.s32 0, %v267
      %v269 = vrot.slane %v264, %v268
      %v277 = vunpack.c.l.b16 %v178
      %v278 = vunpack.c.h.b16 %v178
      %v279 = vunpack.c.l.b16 %v179
      %v280 = vunpack.c.h.b16 %v179
      %v281 = vunpack.c.l.b16 %v180
      %v282 = vunpack.c.l.b16 %v181
      %v283 = vunpack.c.h.b16 %v181
      %v284 = vunpack.c.l.b16 %v182
      %v285 = vunpack.c.h.b16 %v182
      %v286 = vunpack.c.l.b16 %v183
      %v287 = vpack.c.b16 %v282, %v277
      %v288 = vpack.c.b16 %v283, %v278
      %v289 = vpack.c.b16 %v284, %v279
      %v290 = vpack.c.b16 %v285, %v280
      %v291 = vpack.c.b16 %v286, %v281
      %v377 = vunpack.c.l.b16 %v184
      %v378 = vunpack.c.l.b16 %v185
      %v379 = vunpack.c.l.b16 %v186
      %v380 = vunpack.c.l.b16 %v187
      %v381 = vunpack.c.l.b16 %v188
      %v382 = vunpack.c.l.b16 %v189
      %v383 = vunpack.c.l.b16 %v190
      %v384 = vunpack.c.l.b16 %v191
      %v385 = vunpack.c.l.b16 %v192
      %v386 = vunpack.c.l.b16 %v193
      %v387 = vunpack.c.l.b16 %v194
      %v388 = vunpack.c.l.b16 %v195
      %v389 = vunpack.c.l.b16 %v196
      %v390 = vunpack.c.l.b16 %v197
      %v391 = vunpack.c.l.b16 %v198
      %v392 = vunpack.c.l.b16 %v199
      %v393 = vunpack.c.l.b16 %v200
      %v394 = vunpack.c.l.b16 %v201
      %v395 = vunpack.c.l.b16 %v202
      %v396 = vunpack.c.l.b16 %v203
      %v397 = vunpack.c.l.b16 %v204
      %v398 = vunpack.c.l.b16 %v205
      %v399 = vunpack.c.l.b16 %v206
      %v400 = vunpack.c.l.b16 %v207
      %v401 = vunpack.c.l.b16 %v208
      %v402 = vunpack.c.l.b16 %v209
      %v403 = vunpack.c.l.b16 %v210
      %v404 = vunpack.c.l.b16 %v211
      %v405 = vunpack.c.l.b16 %v212
      %v406 = vunpack.c.l.b16 %v213
      %v407 = vunpack.c.l.b16 %v214
      %v408 = vunpack.c.l.b16 %v215
      %v409 = vunpack.c.l.b16 %v216
      %v410 = vunpack.c.l.b16 %v217
      %v411 = vunpack.c.l.b16 %v218
      %v412 = vunpack.c.l.b16 %v219
      %v413 = vunpack.c.l.b16 %v220
      %v414 = vunpack.c.l.b16 %v221
      %v415 = vunpack.c.l.b16 %v222
      %v416 = vunpack.c.l.b16 %v223
      %v417 = vunpack.c.l.b16 %v224
      %v418 = vunpack.c.l.b16 %v225
      %v419 = vunpack.c.l.b16 %v226
      %v420 = vunpack.c.l.b16 %v227
      %v421 = vunpack.c.l.b16 %v228
      %v422 = vunpack.c.l.b16 %v229
      %v423 = vunpack.c.l.b16 %v230
      %v424 = vunpack.c.l.b16 %v231
      %v425 = vunpack.c.l.b16 %v232
      %v426 = vunpack.c.l.b16 %v233
      %v427 = vunpack.c.l.b16 %v234
      %v428 = vunpack.c.l.b16 %v235
      %v429 = vunpack.c.l.b16 %v236
      %v430 = vunpack.c.l.b16 %v237
      %v431 = vunpack.c.l.b16 %v238
      %v432 = vunpack.c.l.b16 %v239
      %v433 = vunpack.c.l.b16 %v240
      %v434 = vunpack.c.l.b16 %v241
      %v435 = vunpack.c.l.b16 %v242
      %v436 = vunpack.c.l.b16 %v243
      %v437 = vunpack.c.l.b16 %v244
      %v438 = vunpack.c.l.b16 %v245
      %v439 = vunpack.c.l.b16 %v246
      %v440 = vunpack.c.l.b16 %v247
      %v441 = vunpack.c.l.b16 %v248
      %v442 = vunpack.c.l.b16 %v249
      %v443 = vunpack.c.l.b16 %v250
      %v444 = vunpack.c.l.b16 %v251
      %v445 = vunpack.c.l.b16 %v252
      %v446 = vunpack.c.l.b16 %v253
      %v447 = vunpack.c.l.b16 %v254
      %v448 = vunpack.c.l.b16 %v255
      %v449 = vunpack.c.l.b16 %v256
      %v450 = vunpack.c.l.b16 %v257
      %v451 = vunpack.c.l.b16 %v258
      %v452 = vunpack.c.l.b16 %v259
      %v453 = vunpack.c.l.b16 %v260
      %v454 = vunpack.c.l.b16 %v261
      %v455 = vunpack.c.l.b16 %v262
      %v456 = vunpack.c.l.b16 %v263
      %v457 = vpack.c.b16 %v378, %v377
      %v458 = vpack.c.b16 %v380, %v379
      %v459 = vpack.c.b16 %v382, %v381
      %v460 = vpack.c.b16 %v384, %v383
      %v461 = vpack.c.b16 %v386, %v385
      %v462 = vpack.c.b16 %v388, %v387
      %v463 = vpack.c.b16 %v390, %v389
      %v464 = vpack.c.b16 %v392, %v391
      %v465 = vpack.c.b16 %v394, %v393
      %v466 = vpack.c.b16 %v396, %v395
      %v467 = vpack.c.b16 %v398, %v397
      %v468 = vpack.c.b16 %v400, %v399
      %v469 = vpack.c.b16 %v402, %v401
      %v470 = vpack.c.b16 %v404, %v403
      %v471 = vpack.c.b16 %v406, %v405
      %v472 = vpack.c.b16 %v408, %v407
      %v473 = vpack.c.b16 %v410, %v409
      %v474 = vpack.c.b16 %v412, %v411
      %v475 = vpack.c.b16 %v414, %v413
      %v476 = vpack.c.b16 %v416, %v415
      %v477 = vpack.c.b16 %v418, %v417
      %v478 = vpack.c.b16 %v420, %v419
      %v479 = vpack.c.b16 %v422, %v421
      %v480 = vpack.c.b16 %v424, %v423
      %v481 = vpack.c.b16 %v426, %v425
      %v482 = vpack.c.b16 %v428, %v427
      %v483 = vpack.c.b16 %v430, %v429
      %v484 = vpack.c.b16 %v432, %v431
      %v485 = vpack.c.b16 %v434, %v433
      %v486 = vpack.c.b16 %v436, %v435
      %v487 = vpack.c.b16 %v438, %v437
      %v488 = vpack.c.b16 %v440, %v439
      %v489 = vpack.c.b16 %v442, %v441
      %v490 = vpack.c.b16 %v444, %v443
      %v491 = vpack.c.b16 %v446, %v445
      %v492 = vpack.c.b16 %v448, %v447
      %v493 = vpack.c.b16 %v450, %v449
      %v494 = vpack.c.b16 %v452, %v451
      %v495 = vpack.c.b16 %v454, %v453
      %v496 = vpack.c.b16 %v456, %v455
      %537 = vmatprep.subr.bf16.mxu0 0
      %538 = vmatpush1.bf16.msra.mxu0 %v464
      %539 = vmatprep.subr.bf16.mxu0 0
      %540 = vmatpush1.bf16.msra.mxu0 %v463
      %541 = vmatprep.subr.bf16.mxu0 0
      %542 = vmatpush1.bf16.msra.mxu0 %v462
      %543 = vmatprep.subr.bf16.mxu0 0
      %544 = vmatpush1.bf16.msra.mxu0 %v461
      %545 = vmatprep.subr.bf16.mxu0 0
      %546 = vmatpush1.bf16.msra.mxu0 %v460
      %547 = vmatprep.subr.bf16.mxu0 0
      %548 = vmatpush1.bf16.msra.mxu0 %v459
      %549 = vmatprep.subr.bf16.mxu0 0
      %550 = vmatpush1.bf16.msra.mxu0 %v458
      %551 = vmatprep.subr.bf16.mxu0 0
      %552 = vmatpush1.bf16.msra.mxu0 %v457
      %553 = vmatprep.subr.bf16.mxu0 0
      %554 = vmatpush2.bf16.msra.mxu0 %v472
      %555 = vmatprep.subr.bf16.mxu0 0
      %556 = vmatpush2.bf16.msra.mxu0 %v471
      %557 = vmatprep.subr.bf16.mxu0 0
      %558 = vmatpush2.bf16.msra.mxu0 %v470
      %559 = vmatprep.subr.bf16.mxu0 0
      %560 = vmatpush2.bf16.msra.mxu0 %v469
      %561 = vmatprep.subr.bf16.mxu0 0
      %562 = vmatpush2.bf16.msra.mxu0 %v468
      %563 = vmatprep.subr.bf16.mxu0 0
      %564 = vmatpush2.bf16.msra.mxu0 %v467
      %565 = vmatprep.subr.bf16.mxu0 0
      %566 = vmatpush2.bf16.msra.mxu0 %v466
      %567 = vmatprep.subr.bf16.mxu0 0
      %568 = vmatpush2.bf16.msra.mxu0 %v465
      %569 = vmatprep.mubr.bf16.mxu0 %v288
      %570 = vmatmul.mubr.bf16.gmra.mxu0 %v287
      %v571 = vpop.f32.mrf.mxu0
      %v572 = vadd.f32 %v269, %v571
      %v573 = vpop.f32.mrf.mxu0
      %v574 = vpop.f32.mrf.mxu0
      %v575 = vadd.f32 %v269, %v574
      %v576 = vpop.f32.mrf.mxu0
      %577 = vdwg.mxu0
      %578 = vmatprep.subr.bf16.mxu0 0
      %579 = vmatpush1.bf16.msra.mxu0 %v480
      %580 = vmatprep.subr.bf16.mxu0 0
      %581 = vmatpush1.bf16.msra.mxu0 %v479
      %582 = vmatprep.subr.bf16.mxu0 0
      %583 = vmatpush1.bf16.msra.mxu0 %v478
      %584 = vmatprep.subr.bf16.mxu0 0
      %585 = vmatpush1.bf16.msra.mxu0 %v477
      %586 = vmatprep.subr.bf16.mxu0 0
      %587 = vmatpush1.bf16.msra.mxu0 %v476
      %588 = vmatprep.subr.bf16.mxu0 0
      %589 = vmatpush1.bf16.msra.mxu0 %v475
      %590 = vmatprep.subr.bf16.mxu0 0
      %591 = vmatpush1.bf16.msra.mxu0 %v474
      %592 = vmatprep.subr.bf16.mxu0 0
      %593 = vmatpush1.bf16.msra.mxu0 %v473
      %594 = vmatprep.subr.bf16.mxu0 0
      %595 = vmatpush2.bf16.msra.mxu0 %v488
      %596 = vmatprep.subr.bf16.mxu0 0
      %597 = vmatpush2.bf16.msra.mxu0 %v487
      %598 = vmatprep.subr.bf16.mxu0 0
      %599 = vmatpush2.bf16.msra.mxu0 %v486
      %600 = vmatprep.subr.bf16.mxu0 0
      %601 = vmatpush2.bf16.msra.mxu0 %v485
      %602 = vmatprep.subr.bf16.mxu0 0
      %603 = vmatpush2.bf16.msra.mxu0 %v484
      %604 = vmatprep.subr.bf16.mxu0 0
      %605 = vmatpush2.bf16.msra.mxu0 %v483
      %606 = vmatprep.subr.bf16.mxu0 0
      %607 = vmatpush2.bf16.msra.mxu0 %v482
      %608 = vmatprep.subr.bf16.mxu0 0
      %609 = vmatpush2.bf16.msra.mxu0 %v481
      %610 = vmatprep.mubr.bf16.mxu0 %v290
      %611 = vmatmul.mubr.bf16.gmra.mxu0 %v289
      %v612 = vpop.f32.mrf.mxu0
      %v613 = vadd.f32 %v572, %v612
      %v614 = vpop.f32.mrf.mxu0
      %v615 = vpop.f32.mrf.mxu0
      %v616 = vadd.f32 %v575, %v615
      %v617 = vpop.f32.mrf.mxu0
      %618 = vdwg.mxu0
      %619 = vmatprep.subr.bf16.mxu0 0
      %620 = vmatpush1.bf16.msra.mxu0 %v496
      %621 = vmatprep.subr.bf16.mxu0 0
      %622 = vmatpush1.bf16.msra.mxu0 %v495
      %623 = vmatprep.subr.bf16.mxu0 0
      %624 = vmatpush1.bf16.msra.mxu0 %v494
      %625 = vmatprep.subr.bf16.mxu0 0
      %626 = vmatpush1.bf16.msra.mxu0 %v493
      %627 = vmatprep.subr.bf16.mxu0 0
      %628 = vmatpush1.bf16.msra.mxu0 %v492
      %629 = vmatprep.subr.bf16.mxu0 0
      %630 = vmatpush1.bf16.msra.mxu0 %v491
      %631 = vmatprep.subr.bf16.mxu0 0
      %632 = vmatpush1.bf16.msra.mxu0 %v490
      %633 = vmatprep.subr.bf16.mxu0 0
      %634 = vmatpush1.bf16.msra.mxu0 %v489
      %635 = vmatprep.subr.bf16.mxu0 0
      %636 = vmatpush2.bf16.msra.mxu0 0
      %637 = vmatprep.subr.bf16.mxu0 0
      %638 = vmatpush2.bf16.msra.mxu0 0
      %639 = vmatprep.subr.bf16.mxu0 0
      %640 = vmatpush2.bf16.msra.mxu0 0
      %641 = vmatprep.subr.bf16.mxu0 0
      %642 = vmatpush2.bf16.msra.mxu0 0
      %643 = vmatprep.subr.bf16.mxu0 0
      %644 = vmatpush2.bf16.msra.mxu0 0
      %645 = vmatprep.subr.bf16.mxu0 0
      %646 = vmatpush2.bf16.msra.mxu0 0
      %647 = vmatprep.subr.bf16.mxu0 0
      %648 = vmatpush2.bf16.msra.mxu0 0
      %649 = vmatprep.subr.bf16.mxu0 0
      %650 = vmatpush2.bf16.msra.mxu0 0
      %651 = vmatprep.mubr.bf16.mxu0 0
      %652 = vmatmul.mubr.bf16.gmra.mxu0 %v291
      %v653 = vpop.f32.mrf.mxu0
      %v654 = vadd.f32 %v613, %v653
      %v655 = vpop.f32.mrf.mxu0
      %v656 = vpop.f32.mrf.mxu0
      %v657 = vadd.f32 %v616, %v656
      %v658 = vpop.f32.mrf.mxu0
      %659 = vdwg.mxu0
      %vm660 = vcmp.ge.f32.partialorder %v654, 0.0
      %vm661 = vcmp.ge.f32.partialorder %v657, 0.0
      %v662 = vmul.f32 %v654, 0.01
      %v663 = vmul.f32 %v657, 0.01
      %v664 = vsel %vm660, %v654, %v662
      %v665 = vsel %vm661, %v657, %v663
      %v666 = vpack.c.bf16 %v665, %v664
      %v668 = vunpack.c.l.b16 %v666
      %v669 = vunpack.c.h.b16 %v666
      %v670 = vpack.c.b16 %v668, %v668
      %v671 = vpack.c.b16 %v669, %v669
      %674 = vst [vmem:[%s175] sm:$0xf] %v670
      %675 = vst [vmem:[%s175 + $0x4] sm:$0xf] %v671
      %s676 = smul.u32 2, %s14
      %p677 = scmp.lt.s32.totalorder %s676, 3
      %s678 = scalar_select %p677, %s676, 3
      %s679 = smul.addr %s678, 4
      %s680 = scalar_lea.vmem %s3, %s679
      // Predicated region
      $region33: #{generator_forward.6} parent=31 // pred_check
        %p681 = pneg %p100
      $region34: #{generator_forward.6} parent=31 // pred_check_branch
        %683 = sbr.rel (%p681) target = $region36
      $region35: #{generator_forward.6} parent=31 // pred_region
        %s684 = smul.u32 2, %s14
      $region36: #{generator_forward.6} parent=31 // pred_fallthru
        _
    $region32: #{generator_forward.6} parent=5 // pred_fallthru
      _
    %p685 = scmp.le.s32.totalorder 2, %s9
    // Predicated region
    $region37: #{generator_forward.6} parent=5 // pred_check
      %p686 = pneg %p685
    $region38: #{generator_forward.6} parent=5 // pred_check_branch
      %688 = sbr.rel (%p686) target = $region40
    $region39: #{generator_forward.6} parent=5 // pred_region
      %s689 = ssub.s32 %s9, 2
      // Predicated region
      $region41: #{generator_forward.6} parent=39 // pred_check
        %p690 = pneg %p106
      $region42: #{generator_forward.6} parent=39 // pred_check_branch
        %692 = sbr.rel (%p690) target = $region44
      $region43: #{generator_forward.6} parent=39 // pred_region
        %s693 = smul.u32 2, %s15
        %p694 = scmp.lt.s32.totalorder %s693, 3
        %s695 = scalar_select %p694, %s693, 3
        %s696 = smul.addr %s695, 4
        %s697 = scalar_lea.vmem %s3, %s696
      $region44: #{generator_forward.6} parent=39 // pred_fallthru
        _
    $region40: #{generator_forward.6} parent=5 // pred_fallthru
      _
  $region6: #{generator_forward.6} parent=0 // loop_footer
    %s13 = sadd.s32 1, %s9
  $region7: #{generator_forward.6} parent=0 // loop_footer_branch
    %8 = sbr.rel target = $region3
  $region8: #{generator_forward.6} parent=0 // loop_exit
    _

// kernel: generator_forward.7
$region0: #{generator_forward.7}
  #allocation0 [shape = 'u32[]', space=smem, size = 0x4, offset = 0x4, fixed_abs, tag = 'smem constant byte address 0x4 - core index']
  #allocation1 [shape = 'u32[144,128]{1,0:T(1,128)}', space=vmem, size = 0x12000, scoped, tag = 'internal scratch']
  %s0 = inlined_call_operand.vmem [shape: bf16[16,1152], index: 0, kind: input, shape index: {}]
  %s1 = inlined_call_operand.vmem [shape: bf16[1152,256], index: 1, kind: input, shape index: {}]
  %s2 = inlined_call_operand.vmem [shape: f32[1,256], index: 2, kind: input, shape index: {}]
  %s3 = inlined_call_operand.vmem [shape: bf16[16,256], index: 3, kind: output, shape index: {}]
  %s4 = sld [smem:[#allocation0]]
  $region22: #{generator_forward.7} parent=0
    _
  %s6 = ssub.s32 1, %s4
  %s7 = scalar_select 0, %s6, %s4
  // Predicated region
  $region2: #{generator_forward.7} parent=0 // pred_check
    _
  $region3: #{generator_forward.7} parent=0 // pred_check_branch
    %9 = sbr.rel (0) target = $region5
  $region4: #{generator_forward.7} parent=0 // pred_region
    _
  $region5: #{generator_forward.7} parent=0 // pred_fallthru
    _
  // Predicated region
  $region6: #{generator_forward.7} parent=0 // pred_check
    _
  $region7: #{generator_forward.7} parent=0 // pred_check_branch
    %11 = sbr.rel (0) target = $region9
  $region8: #{generator_forward.7} parent=0 // pred_region
    _
  $region9: #{generator_forward.7} parent=0 // pred_fallthru
    _
  // Predicated region
  $region10: #{generator_forward.7} parent=0 // pred_check
    _
  $region11: #{generator_forward.7} parent=0 // pred_check_branch
    %13 = sbr.rel (0) target = $region13
  $region12: #{generator_forward.7} parent=0 // pred_region
    _
  $region13: #{generator_forward.7} parent=0 // pred_fallthru
    _
  %v15 = vld [vmem:[%s0] sm:$0xff]
  %v16 = vld [vmem:[%s0 + $0x8] sm:$0xff]
  %v17 = vld [vmem:[%s0 + $0x10] sm:$0xff]
  %v18 = vld [vmem:[%s0 + $0x18] sm:$0xff]
  %v19 = vld [vmem:[%s0 + $0x20] sm:$0xf]
  %v20 = vld [vmem:[%s0 + $0x24] sm:$0xff]
  %v21 = vld [vmem:[%s0 + $0x2c] sm:$0xff]
  %v22 = vld [vmem:[%s0 + $0x34] sm:$0xff]
  %v23 = vld [vmem:[%s0 + $0x3c] sm:$0xff]
  %v24 = vld [vmem:[%s0 + $0x44] sm:$0xf]
  %v25 = vld [vmem:[%s1] sm:$0xff]
  %v26 = vld [vmem:[%s1 + $0x8] sm:$0xff]
  %v27 = vld [vmem:[%s1 + $0x10] sm:$0xff]
  %v28 = vld [vmem:[%s1 + $0x18] sm:$0xff]
  %v29 = vld [vmem:[%s1 + $0x20] sm:$0xff]
  %v30 = vld [vmem:[%s1 + $0x28] sm:$0xff]
  %v31 = vld [vmem:[%s1 + $0x30] sm:$0xff]
  %v32 = vld [vmem:[%s1 + $0x38] sm:$0xff]
  %v33 = vld [vmem:[%s1 + $0x40] sm:$0xff]
  %v34 = vld [vmem:[%s1 + $0x48] sm:$0xff]
  %v35 = vld [vmem:[%s1 + $0x50] sm:$0xff]
  %v36 = vld [vmem:[%s1 + $0x58] sm:$0xff]
  %v37 = vld [vmem:[%s1 + $0x60] sm:$0xff]
  %v38 = vld [vmem:[%s1 + $0x68] sm:$0xff]
  %v39 = vld [vmem:[%s1 + $0x70] sm:$0xff]
  %v40 = vld [vmem:[%s1 + $0x78] sm:$0xff]
  %v41 = vld [vmem:[%s1 + $0x80] sm:$0xff]
  %v42 = vld [vmem:[%s1 + $0x88] sm:$0xff]
  %v43 = vld [vmem:[%s1 + $0x90] sm:$0xff]
  %v44 = vld [vmem:[%s1 + $0x98] sm:$0xff]
  %v45 = vld [vmem:[%s1 + $0xa0] sm:$0xff]
  %v46 = vld [vmem:[%s1 + $0xa8] sm:$0xff]
  %v47 = vld [vmem:[%s1 + $0xb0] sm:$0xff]
  %v48 = vld [vmem:[%s1 + $0xb8] sm:$0xff]
  %v49 = vld [vmem:[%s1 + $0xc0] sm:$0xff]
  %v50 = vld [vmem:[%s1 + $0xc8] sm:$0xff]
  %v51 = vld [vmem:[%s1 + $0xd0] sm:$0xff]
  %v52 = vld [vmem:[%s1 + $0xd8] sm:$0xff]
  %v53 = vld [vmem:[%s1 + $0xe0] sm:$0xff]
  %v54 = vld [vmem:[%s1 + $0xe8] sm:$0xff]
  %v55 = vld [vmem:[%s1 + $0xf0] sm:$0xff]
  %v56 = vld [vmem:[%s1 + $0xf8] sm:$0xff]
  %v57 = vld [vmem:[%s1 + $0x100] sm:$0xff]
  %v58 = vld [vmem:[%s1 + $0x108] sm:$0xff]
  %v59 = vld [vmem:[%s1 + $0x110] sm:$0xff]
  %v60 = vld [vmem:[%s1 + $0x118] sm:$0xff]
  %v61 = vld [vmem:[%s1 + $0x120] sm:$0xff]
  %v62 = vld [vmem:[%s1 + $0x128] sm:$0xff]
  %v63 = vld [vmem:[%s1 + $0x130] sm:$0xff]
  %v64 = vld [vmem:[%s1 + $0x138] sm:$0xff]
  %v65 = vld [vmem:[%s1 + $0x140] sm:$0xff]
  %v66 = vld [vmem:[%s1 + $0x148] sm:$0xff]
  %v67 = vld [vmem:[%s1 + $0x150] sm:$0xff]
  %v68 = vld [vmem:[%s1 + $0x158] sm:$0xff]
  %v69 = vld [vmem:[%s1 + $0x160] sm:$0xff]
  %v70 = vld [vmem:[%s1 + $0x168] sm:$0xff]
  %v71 = vld [vmem:[%s1 + $0x170] sm:$0xff]
  %v72 = vld [vmem:[%s1 + $0x178] sm:$0xff]
  %v73 = vld [vmem:[%s1 + $0x180] sm:$0xff]
  %v74 = vld [vmem:[%s1 + $0x188] sm:$0xff]
  %v75 = vld [vmem:[%s1 + $0x190] sm:$0xff]
  %v76 = vld [vmem:[%s1 + $0x198] sm:$0xff]
  %v77 = vld [vmem:[%s1 + $0x1a0] sm:$0xff]
  %v78 = vld [vmem:[%s1 + $0x1a8] sm:$0xff]
  %v79 = vld [vmem:[%s1 + $0x1b0] sm:$0xff]
  %v80 = vld [vmem:[%s1 + $0x1b8] sm:$0xff]
  %v81 = vld [vmem:[%s1 + $0x1c0] sm:$0xff]
  %v82 = vld [vmem:[%s1 + $0x1c8] sm:$0xff]
  %v83 = vld [vmem:[%s1 + $0x1d0] sm:$0xff]
  %v84 = vld [vmem:[%s1 + $0x1d8] sm:$0xff]
  %v85 = vld [vmem:[%s1 + $0x1e0] sm:$0xff]
  %v86 = vld [vmem:[%s1 + $0x1e8] sm:$0xff]
  %v87 = vld [vmem:[%s1 + $0x1f0] sm:$0xff]
  %v88 = vld [vmem:[%s1 + $0x1f8] sm:$0xff]
  %v89 = vld [vmem:[%s1 + $0x200] sm:$0xff]
  %v90 = vld [vmem:[%s1 + $0x208] sm:$0xff]
  %v91 = vld [vmem:[%s1 + $0x210] sm:$0xff]
  %v92 = vld [vmem:[%s1 + $0x218] sm:$0xff]
  %v93 = vld [vmem:[%s1 + $0x220] sm:$0xff]
  %v94 = vld [vmem:[%s1 + $0x228] sm:$0xff]
  %v95 = vld [vmem:[%s1 + $0x230] sm:$0xff]
  %v96 = vld [vmem:[%s1 + $0x238] sm:$0xff]
  %v97 = vld [vmem:[%s1 + $0x240] sm:$0xff]
  %v98 = vld [vmem:[%s1 + $0x248] sm:$0xff]
  %v99 = vld [vmem:[%s1 + $0x250] sm:$0xff]
  %v100 = vld [vmem:[%s1 + $0x258] sm:$0xff]
  %v101 = vld [vmem:[%s1 + $0x260] sm:$0xff]
  %v102 = vld [vmem:[%s1 + $0x268] sm:$0xff]
  %v103 = vld [vmem:[%s1 + $0x270] sm:$0xff]
  %v104 = vld [vmem:[%s1 + $0x278] sm:$0xff]
  %v105 = vld [vmem:[%s1 + $0x280] sm:$0xff]
  %v106 = vld [vmem:[%s1 + $0x288] sm:$0xff]
  %v107 = vld [vmem:[%s1 + $0x290] sm:$0xff]
  %v108 = vld [vmem:[%s1 + $0x298] sm:$0xff]
  %v109 = vld [vmem:[%s1 + $0x2a0] sm:$0xff]
  %v110 = vld [vmem:[%s1 + $0x2a8] sm:$0xff]
  %v111 = vld [vmem:[%s1 + $0x2b0] sm:$0xff]
  %v112 = vld [vmem:[%s1 + $0x2b8] sm:$0xff]
  %v113 = vld [vmem:[%s1 + $0x2c0] sm:$0xff]
  %v114 = vld [vmem:[%s1 + $0x2c8] sm:$0xff]
  %v115 = vld [vmem:[%s1 + $0x2d0] sm:$0xff]
  %v116 = vld [vmem:[%s1 + $0x2d8] sm:$0xff]
  %v117 = vld [vmem:[%s1 + $0x2e0] sm:$0xff]
  %v118 = vld [vmem:[%s1 + $0x2e8] sm:$0xff]
  %v119 = vld [vmem:[%s1 + $0x2f0] sm:$0xff]
  %v120 = vld [vmem:[%s1 + $0x2f8] sm:$0xff]
  %v121 = vld [vmem:[%s1 + $0x300] sm:$0xff]
  %v122 = vld [vmem:[%s1 + $0x308] sm:$0xff]
  %v123 = vld [vmem:[%s1 + $0x310] sm:$0xff]
  %v124 = vld [vmem:[%s1 + $0x318] sm:$0xff]
  %v125 = vld [vmem:[%s1 + $0x320] sm:$0xff]
  %v126 = vld [vmem:[%s1 + $0x328] sm:$0xff]
  %v127 = vld [vmem:[%s1 + $0x330] sm:$0xff]
  %v128 = vld [vmem:[%s1 + $0x338] sm:$0xff]
  %v129 = vld [vmem:[%s1 + $0x340] sm:$0xff]
  %v130 = vld [vmem:[%s1 + $0x348] sm:$0xff]
  %v131 = vld [vmem:[%s1 + $0x350] sm:$0xff]
  %v132 = vld [vmem:[%s1 + $0x358] sm:$0xff]
  %v133 = vld [vmem:[%s1 + $0x360] sm:$0xff]
  %v134 = vld [vmem:[%s1 + $0x368] sm:$0xff]
  %v135 = vld [vmem:[%s1 + $0x370] sm:$0xff]
  %v136 = vld [vmem:[%s1 + $0x378] sm:$0xff]
  %v137 = vld [vmem:[%s1 + $0x380] sm:$0xff]
  %v138 = vld [vmem:[%s1 + $0x388] sm:$0xff]
  %v139 = vld [vmem:[%s1 + $0x390] sm:$0xff]
  %v140 = vld [vmem:[%s1 + $0x398] sm:$0xff]
  %v141 = vld [vmem:[%s1 + $0x3a0] sm:$0xff]
  %v142 = vld [vmem:[%s1 + $0x3a8] sm:$0xff]
  %v143 = vld [vmem:[%s1 + $0x3b0] sm:$0xff]
  %v144 = vld [vmem:[%s1 + $0x3b8] sm:$0xff]
  %v145 = vld [vmem:[%s1 + $0x3c0] sm:$0xff]
  %v146 = vld [vmem:[%s1 + $0x3c8] sm:$0xff]
  %v147 = vld [vmem:[%s1 + $0x3d0] sm:$0xff]
  %v148 = vld [vmem:[%s1 + $0x3d8] sm:$0xff]
  %v149 = vld [vmem:[%s1 + $0x3e0] sm:$0xff]
  %v150 = vld [vmem:[%s1 + $0x3e8] sm:$0xff]
  %v151 = vld [vmem:[%s1 + $0x3f0] sm:$0xff]
  %v152 = vld [vmem:[%s1 + $0x3f8] sm:$0xff]
  %v153 = vld [vmem:[%s1 + $0x400] sm:$0xff]
  %v154 = vld [vmem:[%s1 + $0x408] sm:$0xff]
  %v155 = vld [vmem:[%s1 + $0x410] sm:$0xff]
  %v156 = vld [vmem:[%s1 + $0x418] sm:$0xff]
  %v157 = vld [vmem:[%s1 + $0x420] sm:$0xff]
  %v158 = vld [vmem:[%s1 + $0x428] sm:$0xff]
  %v159 = vld [vmem:[%s1 + $0x430] sm:$0xff]
  %v160 = vld [vmem:[%s1 + $0x438] sm:$0xff]
  %v161 = vld [vmem:[%s1 + $0x440] sm:$0xff]
  %v162 = vld [vmem:[%s1 + $0x448] sm:$0xff]
  %v163 = vld [vmem:[%s1 + $0x450] sm:$0xff]
  %v164 = vld [vmem:[%s1 + $0x458] sm:$0xff]
  %v165 = vld [vmem:[%s1 + $0x460] sm:$0xff]
  %v166 = vld [vmem:[%s1 + $0x468] sm:$0xff]
  %v167 = vld [vmem:[%s1 + $0x470] sm:$0xff]
  %v168 = vld [vmem:[%s1 + $0x478] sm:$0xff]
  %v169 = vld [vmem:[%s2] sm:$0x3]
  %v171 = vlaneseq
  %v172 = vshrl.u32 %v171, 7
  %v173 = vsub.s32 0, %v172
  %v174 = vrot.slane %v169, %v173
  %v175 = vlaneseq
  %v176 = vshrl.u32 %v175, 7
  %v177 = vsub.s32 1, %v176
  %v178 = vrot.slane %v169, %v177
  %v191 = vunpack.c.l.b16 %v15
  %v192 = vunpack.c.h.b16 %v15
  %v193 = vunpack.c.l.b16 %v16
  %v194 = vunpack.c.h.b16 %v16
  %v195 = vunpack.c.l.b16 %v17
  %v196 = vunpack.c.h.b16 %v17
  %v197 = vunpack.c.l.b16 %v18
  %v198 = vunpack.c.h.b16 %v18
  %v199 = vunpack.c.l.b16 %v19
  %v200 = vunpack.c.l.b16 %v20
  %v201 = vunpack.c.h.b16 %v20
  %v202 = vunpack.c.l.b16 %v21
  %v203 = vunpack.c.h.b16 %v21
  %v204 = vunpack.c.l.b16 %v22
  %v205 = vunpack.c.h.b16 %v22
  %v206 = vunpack.c.l.b16 %v23
  %v207 = vunpack.c.h.b16 %v23
  %v208 = vunpack.c.l.b16 %v24
  %v209 = vpack.c.b16 %v200, %v191
  %v210 = vpack.c.b16 %v201, %v192
  %v211 = vpack.c.b16 %v202, %v193
  %v212 = vpack.c.b16 %v203, %v194
  %v213 = vpack.c.b16 %v204, %v195
  %v214 = vpack.c.b16 %v205, %v196
  %v215 = vpack.c.b16 %v206, %v197
  %v216 = vpack.c.b16 %v207, %v198
  %v217 = vpack.c.b16 %v208, %v199
  %v371 = vunpack.c.l.b16 %v25
  %v372 = vunpack.c.h.b16 %v25
  %v373 = vunpack.c.l.b16 %v26
  %v374 = vunpack.c.h.b16 %v26
  %v375 = vunpack.c.l.b16 %v27
  %v376 = vunpack.c.h.b16 %v27
  %v377 = vunpack.c.l.b16 %v28
  %v378 = vunpack.c.h.b16 %v28
  %v379 = vunpack.c.l.b16 %v29
  %v380 = vunpack.c.h.b16 %v29
  %v381 = vunpack.c.l.b16 %v30
  %v382 = vunpack.c.h.b16 %v30
  %v383 = vunpack.c.l.b16 %v31
  %v384 = vunpack.c.h.b16 %v31
  %v385 = vunpack.c.l.b16 %v32
  %v386 = vunpack.c.h.b16 %v32
  %v387 = vunpack.c.l.b16 %v33
  %v388 = vunpack.c.h.b16 %v33
  %v389 = vunpack.c.l.b16 %v34
  %v390 = vunpack.c.h.b16 %v34
  %v391 = vunpack.c.l.b16 %v35
  %v392 = vunpack.c.h.b16 %v35
  %v393 = vunpack.c.l.b16 %v36
  %v394 = vunpack.c.h.b16 %v36
  %v395 = vunpack.c.l.b16 %v37
  %v396 = vunpack.c.h.b16 %v37
  %v397 = vunpack.c.l.b16 %v38
  %v398 = vunpack.c.h.b16 %v38
  %v399 = vunpack.c.l.b16 %v39
  %v400 = vunpack.c.h.b16 %v39
  %v401 = vunpack.c.l.b16 %v40
  %v402 = vunpack.c.h.b16 %v40
  %v403 = vunpack.c.l.b16 %v41
  %v404 = vunpack.c.h.b16 %v41
  %v405 = vunpack.c.l.b16 %v42
  %v406 = vunpack.c.h.b16 %v42
  %v407 = vunpack.c.l.b16 %v43
  %v408 = vunpack.c.h.b16 %v43
  %v409 = vunpack.c.l.b16 %v44
  %v410 = vunpack.c.h.b16 %v44
  %v411 = vunpack.c.l.b16 %v45
  %v412 = vunpack.c.h.b16 %v45
  %v413 = vunpack.c.l.b16 %v46
  %v414 = vunpack.c.h.b16 %v46
  %v415 = vunpack.c.l.b16 %v47
  %v416 = vunpack.c.h.b16 %v47
  %v417 = vunpack.c.l.b16 %v48
  %v418 = vunpack.c.h.b16 %v48
  %v419 = vunpack.c.l.b16 %v49
  %v420 = vunpack.c.h.b16 %v49
  %v421 = vunpack.c.l.b16 %v50
  %v422 = vunpack.c.h.b16 %v50
  %v423 = vunpack.c.l.b16 %v51
  %v424 = vunpack.c.h.b16 %v51
  %v425 = vunpack.c.l.b16 %v52
  %v426 = vunpack.c.h.b16 %v52
  %v427 = vunpack.c.l.b16 %v53
  %v428 = vunpack.c.h.b16 %v53
  %v429 = vunpack.c.l.b16 %v54
  %v430 = vunpack.c.h.b16 %v54
  %v431 = vunpack.c.l.b16 %v55
  %v432 = vunpack.c.h.b16 %v55
  %v433 = vunpack.c.l.b16 %v56
  %v434 = vunpack.c.h.b16 %v56
  %v435 = vunpack.c.l.b16 %v57
  %v436 = vunpack.c.h.b16 %v57
  %v437 = vunpack.c.l.b16 %v58
  %v438 = vunpack.c.h.b16 %v58
  %v439 = vunpack.c.l.b16 %v59
  %v440 = vunpack.c.h.b16 %v59
  %v441 = vunpack.c.l.b16 %v60
  %v442 = vunpack.c.h.b16 %v60
  %v443 = vunpack.c.l.b16 %v61
  %v444 = vunpack.c.h.b16 %v61
  %v445 = vunpack.c.l.b16 %v62
  %v446 = vunpack.c.h.b16 %v62
  %v447 = vunpack.c.l.b16 %v63
  %v448 = vunpack.c.h.b16 %v63
  %v449 = vunpack.c.l.b16 %v64
  %v450 = vunpack.c.h.b16 %v64
  %v451 = vunpack.c.l.b16 %v65
  %v452 = vunpack.c.h.b16 %v65
  %v453 = vunpack.c.l.b16 %v66
  %v454 = vunpack.c.h.b16 %v66
  %v455 = vunpack.c.l.b16 %v67
  %v456 = vunpack.c.h.b16 %v67
  %v457 = vunpack.c.l.b16 %v68
  %v458 = vunpack.c.h.b16 %v68
  %v459 = vunpack.c.l.b16 %v69
  %v460 = vunpack.c.h.b16 %v69
  %v461 = vunpack.c.l.b16 %v70
  %v462 = vunpack.c.h.b16 %v70
  %v463 = vunpack.c.l.b16 %v71
  %v464 = vunpack.c.h.b16 %v71
  %v465 = vunpack.c.l.b16 %v72
  %v466 = vunpack.c.h.b16 %v72
  %v467 = vunpack.c.l.b16 %v73
  %v468 = vunpack.c.h.b16 %v73
  %v469 = vunpack.c.l.b16 %v74
  %v470 = vunpack.c.h.b16 %v74
  %v471 = vunpack.c.l.b16 %v75
  %v472 = vunpack.c.h.b16 %v75
  %v473 = vunpack.c.l.b16 %v76
  %v474 = vunpack.c.h.b16 %v76
  %v475 = vunpack.c.l.b16 %v77
  %v476 = vunpack.c.h.b16 %v77
  %v477 = vunpack.c.l.b16 %v78
  %v478 = vunpack.c.h.b16 %v78
  %v479 = vunpack.c.l.b16 %v79
  %v480 = vunpack.c.h.b16 %v79
  %v481 = vunpack.c.l.b16 %v80
  %v482 = vunpack.c.h.b16 %v80
  %v483 = vunpack.c.l.b16 %v81
  %v484 = vunpack.c.h.b16 %v81
  %v485 = vunpack.c.l.b16 %v82
  %v486 = vunpack.c.h.b16 %v82
  %v487 = vunpack.c.l.b16 %v83
  %v488 = vunpack.c.h.b16 %v83
  %v489 = vunpack.c.l.b16 %v84
  %v490 = vunpack.c.h.b16 %v84
  %v491 = vunpack.c.l.b16 %v85
  %v492 = vunpack.c.h.b16 %v85
  %v493 = vunpack.c.l.b16 %v86
  %v494 = vunpack.c.h.b16 %v86
  %v495 = vunpack.c.l.b16 %v87
  %v496 = vunpack.c.h.b16 %v87
  %v497 = vunpack.c.l.b16 %v88
  %v498 = vunpack.c.h.b16 %v88
  %v499 = vunpack.c.l.b16 %v89
  %v500 = vunpack.c.h.b16 %v89
  %v501 = vunpack.c.l.b16 %v90
  %v502 = vunpack.c.h.b16 %v90
  %v503 = vunpack.c.l.b16 %v91
  %v504 = vunpack.c.h.b16 %v91
  %v505 = vunpack.c.l.b16 %v92
  %v506 = vunpack.c.h.b16 %v92
  %v507 = vunpack.c.l.b16 %v93
  %v508 = vunpack.c.h.b16 %v93
  %v509 = vunpack.c.l.b16 %v94
  %v510 = vunpack.c.h.b16 %v94
  %v511 = vunpack.c.l.b16 %v95
  %v512 = vunpack.c.h.b16 %v95
  %v513 = vunpack.c.l.b16 %v96
  %v514 = vunpack.c.h.b16 %v96
  %v515 = vunpack.c.l.b16 %v97
  %v516 = vunpack.c.h.b16 %v97
  %v517 = vunpack.c.l.b16 %v98
  %v518 = vunpack.c.h.b16 %v98
  %v519 = vunpack.c.l.b16 %v99
  %v520 = vunpack.c.h.b16 %v99
  %v521 = vunpack.c.l.b16 %v100
  %v522 = vunpack.c.h.b16 %v100
  %v523 = vunpack.c.l.b16 %v101
  %v524 = vunpack.c.h.b16 %v101
  %v525 = vunpack.c.l.b16 %v102
  %v526 = vunpack.c.h.b16 %v102
  %v527 = vunpack.c.l.b16 %v103
  %v528 = vunpack.c.h.b16 %v103
  %v529 = vunpack.c.l.b16 %v104
  %v530 = vunpack.c.h.b16 %v104
  %v531 = vunpack.c.l.b16 %v105
  %v532 = vunpack.c.h.b16 %v105
  %v533 = vunpack.c.l.b16 %v106
  %v534 = vunpack.c.h.b16 %v106
  %v535 = vunpack.c.l.b16 %v107
  %v536 = vunpack.c.h.b16 %v107
  %v537 = vunpack.c.l.b16 %v108
  %v538 = vunpack.c.h.b16 %v108
  %v539 = vunpack.c.l.b16 %v109
  %v540 = vunpack.c.h.b16 %v109
  %v541 = vunpack.c.l.b16 %v110
  %v542 = vunpack.c.h.b16 %v110
  %v543 = vunpack.c.l.b16 %v111
  %v544 = vunpack.c.h.b16 %v111
  %v545 = vunpack.c.l.b16 %v112
  %v546 = vunpack.c.h.b16 %v112
  %v547 = vunpack.c.l.b16 %v113
  %v548 = vunpack.c.h.b16 %v113
  %v549 = vunpack.c.l.b16 %v114
  %v550 = vunpack.c.h.b16 %v114
  %v551 = vunpack.c.l.b16 %v115
  %v552 = vunpack.c.h.b16 %v115
  %v553 = vunpack.c.l.b16 %v116
  %v554 = vunpack.c.h.b16 %v116
  %v555 = vunpack.c.l.b16 %v117
  %v556 = vunpack.c.h.b16 %v117
  %v557 = vunpack.c.l.b16 %v118
  %v558 = vunpack.c.h.b16 %v118
  %v559 = vunpack.c.l.b16 %v119
  %v560 = vunpack.c.h.b16 %v119
  %v561 = vunpack.c.l.b16 %v120
  %v562 = vunpack.c.h.b16 %v120
  %v563 = vunpack.c.l.b16 %v121
  %v564 = vunpack.c.h.b16 %v121
  %v565 = vunpack.c.l.b16 %v122
  %v566 = vunpack.c.h.b16 %v122
  %v567 = vunpack.c.l.b16 %v123
  %v568 = vunpack.c.h.b16 %v123
  %v569 = vunpack.c.l.b16 %v124
  %v570 = vunpack.c.h.b16 %v124
  %v571 = vunpack.c.l.b16 %v125
  %v572 = vunpack.c.h.b16 %v125
  %v573 = vunpack.c.l.b16 %v126
  %v574 = vunpack.c.h.b16 %v126
  %v575 = vunpack.c.l.b16 %v127
  %v576 = vunpack.c.h.b16 %v127
  %v577 = vunpack.c.l.b16 %v128
  %v578 = vunpack.c.h.b16 %v128
  %v579 = vunpack.c.l.b16 %v129
  %v580 = vunpack.c.h.b16 %v129
  %v581 = vunpack.c.l.b16 %v130
  %v582 = vunpack.c.h.b16 %v130
  %v583 = vunpack.c.l.b16 %v131
  %v584 = vunpack.c.h.b16 %v131
  %v585 = vunpack.c.l.b16 %v132
  %v586 = vunpack.c.h.b16 %v132
  %v587 = vunpack.c.l.b16 %v133
  %v588 = vunpack.c.h.b16 %v133
  %v589 = vunpack.c.l.b16 %v134
  %v590 = vunpack.c.h.b16 %v134
  %v591 = vunpack.c.l.b16 %v135
  %v592 = vunpack.c.h.b16 %v135
  %v593 = vunpack.c.l.b16 %v136
  %v594 = vunpack.c.h.b16 %v136
  %v595 = vunpack.c.l.b16 %v137
  %v596 = vunpack.c.h.b16 %v137
  %v597 = vunpack.c.l.b16 %v138
  %v598 = vunpack.c.h.b16 %v138
  %v599 = vunpack.c.l.b16 %v139
  %v600 = vunpack.c.h.b16 %v139
  %v601 = vunpack.c.l.b16 %v140
  %v602 = vunpack.c.h.b16 %v140
  %v603 = vunpack.c.l.b16 %v141
  %v604 = vunpack.c.h.b16 %v141
  %v605 = vunpack.c.l.b16 %v142
  %v606 = vunpack.c.h.b16 %v142
  %v607 = vunpack.c.l.b16 %v143
  %v608 = vunpack.c.h.b16 %v143
  %v609 = vunpack.c.l.b16 %v144
  %v610 = vunpack.c.h.b16 %v144
  %v611 = vunpack.c.l.b16 %v145
  %v612 = vunpack.c.h.b16 %v145
  %v613 = vunpack.c.l.b16 %v146
  %v614 = vunpack.c.h.b16 %v146
  %v615 = vunpack.c.l.b16 %v147
  %v616 = vunpack.c.h.b16 %v147
  %v617 = vunpack.c.l.b16 %v148
  %v618 = vunpack.c.h.b16 %v148
  %v619 = vunpack.c.l.b16 %v149
  %v620 = vunpack.c.h.b16 %v149
  %v621 = vunpack.c.l.b16 %v150
  %v622 = vunpack.c.h.b16 %v150
  %v623 = vunpack.c.l.b16 %v151
  %v624 = vunpack.c.h.b16 %v151
  %v625 = vunpack.c.l.b16 %v152
  %v626 = vunpack.c.h.b16 %v152
  %v627 = vunpack.c.l.b16 %v153
  %v628 = vunpack.c.h.b16 %v153
  %v629 = vunpack.c.l.b16 %v154
  %v630 = vunpack.c.h.b16 %v154
  %v631 = vunpack.c.l.b16 %v155
  %v632 = vunpack.c.h.b16 %v155
  %v633 = vunpack.c.l.b16 %v156
  %v634 = vunpack.c.h.b16 %v156
  %v635 = vunpack.c.l.b16 %v157
  %v636 = vunpack.c.h.b16 %v157
  %v637 = vunpack.c.l.b16 %v158
  %v638 = vunpack.c.h.b16 %v158
  %v639 = vunpack.c.l.b16 %v159
  %v640 = vunpack.c.h.b16 %v159
  %v641 = vunpack.c.l.b16 %v160
  %v642 = vunpack.c.h.b16 %v160
  %v643 = vunpack.c.l.b16 %v161
  %v644 = vunpack.c.h.b16 %v161
  %v645 = vunpack.c.l.b16 %v162
  %v646 = vunpack.c.h.b16 %v162
  %v647 = vunpack.c.l.b16 %v163
  %v648 = vunpack.c.h.b16 %v163
  %v649 = vunpack.c.l.b16 %v164
  %v650 = vunpack.c.h.b16 %v164
  %v651 = vunpack.c.l.b16 %v165
  %v652 = vunpack.c.h.b16 %v165
  %v653 = vunpack.c.l.b16 %v166
  %v654 = vunpack.c.h.b16 %v166
  %v655 = vunpack.c.l.b16 %v167
  %v656 = vunpack.c.h.b16 %v167
  %v657 = vunpack.c.l.b16 %v168
  %v658 = vunpack.c.h.b16 %v168
  %v659 = vpack.c.b16 %v373, %v371
  %v660 = vpack.c.b16 %v374, %v372
  %v661 = vpack.c.b16 %v377, %v375
  %v662 = vpack.c.b16 %v378, %v376
  %v663 = vpack.c.b16 %v381, %v379
  %v664 = vpack.c.b16 %v382, %v380
  %v665 = vpack.c.b16 %v385, %v383
  %v666 = vpack.c.b16 %v386, %v384
  %v667 = vpack.c.b16 %v389, %v387
  %v668 = vpack.c.b16 %v390, %v388
  %v669 = vpack.c.b16 %v393, %v391
  %v670 = vpack.c.b16 %v394, %v392
  %v671 = vpack.c.b16 %v397, %v395
  %v672 = vpack.c.b16 %v398, %v396
  %v673 = vpack.c.b16 %v401, %v399
  %v674 = vpack.c.b16 %v402, %v400
  %v675 = vpack.c.b16 %v405, %v403
  %v676 = vpack.c.b16 %v406, %v404
  %v677 = vpack.c.b16 %v409, %v407
  %v678 = vpack.c.b16 %v410, %v408
  %v679 = vpack.c.b16 %v413, %v411
  %v680 = vpack.c.b16 %v414, %v412
  %v681 = vpack.c.b16 %v417, %v415
  %v682 = vpack.c.b16 %v418, %v416
  %v683 = vpack.c.b16 %v421, %v419
  %v684 = vpack.c.b16 %v422, %v420
  %v685 = vpack.c.b16 %v425, %v423
  %v686 = vpack.c.b16 %v426, %v424
  %v687 = vpack.c.b16 %v429, %v427
  %v688 = vpack.c.b16 %v430, %v428
  %v689 = vpack.c.b16 %v433, %v431
  %v690 = vpack.c.b16 %v434, %v432
  %v691 = vpack.c.b16 %v437, %v435
  %v692 = vpack.c.b16 %v438, %v436
  %v693 = vpack.c.b16 %v441, %v439
  %v694 = vpack.c.b16 %v442, %v440
  %v695 = vpack.c.b16 %v445, %v443
  %v696 = vpack.c.b16 %v446, %v444
  %v697 = vpack.c.b16 %v449, %v447
  %v698 = vpack.c.b16 %v450, %v448
  %v699 = vpack.c.b16 %v453, %v451
  %v700 = vpack.c.b16 %v454, %v452
  %v701 = vpack.c.b16 %v457, %v455
  %v702 = vpack.c.b16 %v458, %v456
  %v703 = vpack.c.b16 %v461, %v459
  %v704 = vpack.c.b16 %v462, %v460
  %v705 = vpack.c.b16 %v465, %v463
  %v706 = vpack.c.b16 %v466, %v464
  %v707 = vpack.c.b16 %v469, %v467
  %v708 = vpack.c.b16 %v470, %v468
  %v709 = vpack.c.b16 %v473, %v471
  %v710 = vpack.c.b16 %v474, %v472
  %v711 = vpack.c.b16 %v477, %v475
  %v712 = vpack.c.b16 %v478, %v476
  %v713 = vpack.c.b16 %v481, %v479
  %v714 = vpack.c.b16 %v482, %v480
  %v715 = vpack.c.b16 %v485, %v483
  %v716 = vpack.c.b16 %v486, %v484
  %v717 = vpack.c.b16 %v489, %v487
  %v718 = vpack.c.b16 %v490, %v488
  %v719 = vpack.c.b16 %v493, %v491
  %v720 = vpack.c.b16 %v494, %v492
  %v721 = vpack.c.b16 %v497, %v495
  %v722 = vpack.c.b16 %v498, %v496
  %v723 = vpack.c.b16 %v501, %v499
  %v724 = vpack.c.b16 %v502, %v500
  %v725 = vpack.c.b16 %v505, %v503
  %v726 = vpack.c.b16 %v506, %v504
  %v727 = vpack.c.b16 %v509, %v507
  %v728 = vpack.c.b16 %v510, %v508
  %v729 = vpack.c.b16 %v513, %v511
  %v730 = vpack.c.b16 %v514, %v512
  %v731 = vpack.c.b16 %v517, %v515
  %v732 = vpack.c.b16 %v518, %v516
  %v733 = vpack.c.b16 %v521, %v519
  %v734 = vpack.c.b16 %v522, %v520
  %v735 = vpack.c.b16 %v525, %v523
  %v736 = vpack.c.b16 %v526, %v524
  %v737 = vpack.c.b16 %v529, %v527
  %v738 = vpack.c.b16 %v530, %v528
  %v739 = vpack.c.b16 %v533, %v531
  %v740 = vpack.c.b16 %v534, %v532
  %v741 = vpack.c.b16 %v537, %v535
  %v742 = vpack.c.b16 %v538, %v536
  %v743 = vpack.c.b16 %v541, %v539
  %v744 = vpack.c.b16 %v542, %v540
  %v745 = vpack.c.b16 %v545, %v543
  %v746 = vpack.c.b16 %v546, %v544
  %v747 = vpack.c.b16 %v549, %v547
  %v748 = vpack.c.b16 %v550, %v548
  %v749 = vpack.c.b16 %v553, %v551
  %v750 = vpack.c.b16 %v554, %v552
  %v751 = vpack.c.b16 %v557, %v555
  %v752 = vpack.c.b16 %v558, %v556
  %v753 = vpack.c.b16 %v561, %v559
  %v754 = vpack.c.b16 %v562, %v560
  %v755 = vpack.c.b16 %v565, %v563
  %v756 = vpack.c.b16 %v566, %v564
  %v757 = vpack.c.b16 %v569, %v567
  %v758 = vpack.c.b16 %v570, %v568
  %v759 = vpack.c.b16 %v573, %v571
  %v760 = vpack.c.b16 %v574, %v572
  %v761 = vpack.c.b16 %v577, %v575
  %v762 = vpack.c.b16 %v578, %v576
  %v763 = vpack.c.b16 %v581, %v579
  %v764 = vpack.c.b16 %v582, %v580
  %v765 = vpack.c.b16 %v585, %v583
  %v766 = vpack.c.b16 %v586, %v584
  %v767 = vpack.c.b16 %v589, %v587
  %v768 = vpack.c.b16 %v590, %v588
  %v769 = vpack.c.b16 %v593, %v591
  %v770 = vpack.c.b16 %v594, %v592
  %v771 = vpack.c.b16 %v597, %v595
  %v772 = vpack.c.b16 %v598, %v596
  %v773 = vpack.c.b16 %v601, %v599
  %v774 = vpack.c.b16 %v602, %v600
  %v775 = vpack.c.b16 %v605, %v603
  %v776 = vpack.c.b16 %v606, %v604
  %v777 = vpack.c.b16 %v609, %v607
  %v778 = vpack.c.b16 %v610, %v608
  %v779 = vpack.c.b16 %v613, %v611
  %v780 = vpack.c.b16 %v614, %v612
  %v781 = vpack.c.b16 %v617, %v615
  %v782 = vpack.c.b16 %v618, %v616
  %v783 = vpack.c.b16 %v621, %v619
  %v784 = vpack.c.b16 %v622, %v620
  %v785 = vpack.c.b16 %v625, %v623
  %v786 = vpack.c.b16 %v626, %v624
  %v787 = vpack.c.b16 %v629, %v627
  %v788 = vpack.c.b16 %v630, %v628
  %v789 = vpack.c.b16 %v633, %v631
  %v790 = vpack.c.b16 %v634, %v632
  %v791 = vpack.c.b16 %v637, %v635
  %v792 = vpack.c.b16 %v638, %v636
  %v793 = vpack.c.b16 %v641, %v639
  %v794 = vpack.c.b16 %v642, %v640
  %v795 = vpack.c.b16 %v645, %v643
  %v796 = vpack.c.b16 %v646, %v644
  %v797 = vpack.c.b16 %v649, %v647
  %v798 = vpack.c.b16 %v650, %v648
  %v799 = vpack.c.b16 %v653, %v651
  %v800 = vpack.c.b16 %v654, %v652
  %v801 = vpack.c.b16 %v657, %v655
  %v802 = vpack.c.b16 %v658, %v656
  %947 = vmatprep.subr.bf16.mxu0 %v674
  %948 = vmatpush1.bf16.msra.mxu0 %v673
  %949 = vmatprep.subr.bf16.mxu0 %v672
  %950 = vmatpush1.bf16.msra.mxu0 %v671
  %951 = vmatprep.subr.bf16.mxu0 %v670
  %952 = vmatpush1.bf16.msra.mxu0 %v669
  %953 = vmatprep.subr.bf16.mxu0 %v668
  %954 = vmatpush1.bf16.msra.mxu0 %v667
  %955 = vmatprep.subr.bf16.mxu0 %v666
  %956 = vmatpush1.bf16.msra.mxu0 %v665
  %957 = vmatprep.subr.bf16.mxu0 %v664
  %958 = vmatpush1.bf16.msra.mxu0 %v663
  %959 = vmatprep.subr.bf16.mxu0 %v662
  %960 = vmatpush1.bf16.msra.mxu0 %v661
  %961 = vmatprep.subr.bf16.mxu0 %v660
  %962 = vmatpush1.bf16.msra.mxu0 %v659
  %963 = vmatprep.subr.bf16.mxu0 %v690
  %964 = vmatpush2.bf16.msra.mxu0 %v689
  %965 = vmatprep.subr.bf16.mxu0 %v688
  %966 = vmatpush2.bf16.msra.mxu0 %v687
  %967 = vmatprep.subr.bf16.mxu0 %v686
  %968 = vmatpush2.bf16.msra.mxu0 %v685
  %969 = vmatprep.subr.bf16.mxu0 %v684
  %970 = vmatpush2.bf16.msra.mxu0 %v683
  %971 = vmatprep.subr.bf16.mxu0 %v682
  %972 = vmatpush2.bf16.msra.mxu0 %v681
  %973 = vmatprep.subr.bf16.mxu0 %v680
  %974 = vmatpush2.bf16.msra.mxu0 %v679
  %975 = vmatprep.subr.bf16.mxu0 %v678
  %976 = vmatpush2.bf16.msra.mxu0 %v677
  %977 = vmatprep.subr.bf16.mxu0 %v676
  %978 = vmatpush2.bf16.msra.mxu0 %v675
  %979 = vmatprep.mubr.bf16.mxu0 %v210
  %980 = vmatmul.mubr.bf16.gmra.mxu0 %v209
  %v981 = vpop.f32.mrf.mxu0
  %v982 = vadd.f32 %v174, %v981
  %v983 = vpop.f32.mrf.mxu0
  %v984 = vadd.f32 %v178, %v983
  %v985 = vpop.f32.mrf.mxu0
  %v986 = vadd.f32 %v174, %v985
  %v987 = vpop.f32.mrf.mxu0
  %v988 = vadd.f32 %v178, %v987
  %989 = vdwg.mxu0
  %990 = vmatprep.subr.bf16.mxu0 %v706
  %991 = vmatpush1.bf16.msra.mxu0 %v705
  %992 = vmatprep.subr.bf16.mxu0 %v704
  %993 = vmatpush1.bf16.msra.mxu0 %v703
  %994 = vmatprep.subr.bf16.mxu0 %v702
  %995 = vmatpush1.bf16.msra.mxu0 %v701
  %996 = vmatprep.subr.bf16.mxu0 %v700
  %997 = vmatpush1.bf16.msra.mxu0 %v699
  %998 = vmatprep.subr.bf16.mxu0 %v698
  %999 = vmatpush1.bf16.msra.mxu0 %v697
  %1000 = vmatprep.subr.bf16.mxu0 %v696
  %1001 = vmatpush1.bf16.msra.mxu0 %v695
  %1002 = vmatprep.subr.bf16.mxu0 %v694
  %1003 = vmatpush1.bf16.msra.mxu0 %v693
  %1004 = vmatprep.subr.bf16.mxu0 %v692
  %1005 = vmatpush1.bf16.msra.mxu0 %v691
  %1006 = vmatprep.subr.bf16.mxu0 %v722
  %1007 = vmatpush2.bf16.msra.mxu0 %v721
  %1008 = vmatprep.subr.bf16.mxu0 %v720
  %1009 = vmatpush2.bf16.msra.mxu0 %v719
  %1010 = vmatprep.subr.bf16.mxu0 %v718
  %1011 = vmatpush2.bf16.msra.mxu0 %v717
  %1012 = vmatprep.subr.bf16.mxu0 %v716
  %1013 = vmatpush2.bf16.msra.mxu0 %v715
  %1014 = vmatprep.subr.bf16.mxu0 %v714
  %1015 = vmatpush2.bf16.msra.mxu0 %v713
  %1016 = vmatprep.subr.bf16.mxu0 %v712
  %1017 = vmatpush2.bf16.msra.mxu0 %v711
  %1018 = vmatprep.subr.bf16.mxu0 %v710
  %1019 = vmatpush2.bf16.msra.mxu0 %v709
  %1020 = vmatprep.subr.bf16.mxu0 %v708
  %1021 = vmatpush2.bf16.msra.mxu0 %v707
  %1022 = vmatprep.mubr.bf16.mxu0 %v212
  %1023 = vmatmul.mubr.bf16.gmra.mxu0 %v211
  %v1024 = vpop.f32.mrf.mxu0
  %v1025 = vadd.f32 %v982, %v1024
  %v1026 = vpop.f32.mrf.mxu0
  %v1027 = vadd.f32 %v984, %v1026
  %v1028 = vpop.f32.mrf.mxu0
  %v1029 = vadd.f32 %v986, %v1028
  %v1030 = vpop.f32.mrf.mxu0
  %v1031 = vadd.f32 %v988, %v1030
  %1032 = vdwg.mxu0
  %1033 = vmatprep.subr.bf16.mxu0 %v738
  %1034 = vmatpush1.bf16.msra.mxu0 %v737
  %1035 = vmatprep.subr.bf16.mxu0 %v736
  %1036 = vmatpush1.bf16.msra.mxu0 %v735
  %1037 = vmatprep.subr.bf16.mxu0 %v734
  %1038 = vmatpush1.bf16.msra.mxu0 %v733
  %1039 = vmatprep.subr.bf16.mxu0 %v732
  %1040 = vmatpush1.bf16.msra.mxu0 %v731
  %1041 = vmatprep.subr.bf16.mxu0 %v730
  %1042 = vmatpush1.bf16.msra.mxu0 %v729
  %1043 = vmatprep.subr.bf16.mxu0 %v728
  %1044 = vmatpush1.bf16.msra.mxu0 %v727
  %1045 = vmatprep.subr.bf16.mxu0 %v726
  %1046 = vmatpush1.bf16.msra.mxu0 %v725
  %1047 = vmatprep.subr.bf16.mxu0 %v724
  %1048 = vmatpush1.bf16.msra.mxu0 %v723
  %1049 = vmatprep.subr.bf16.mxu0 %v754
  %1050 = vmatpush2.bf16.msra.mxu0 %v753
  %1051 = vmatprep.subr.bf16.mxu0 %v752
  %1052 = vmatpush2.bf16.msra.mxu0 %v751
  %1053 = vmatprep.subr.bf16.mxu0 %v750
  %1054 = vmatpush2.bf16.msra.mxu0 %v749
  %1055 = vmatprep.subr.bf16.mxu0 %v748
  %1056 = vmatpush2.bf16.msra.mxu0 %v747
  %1057 = vmatprep.subr.bf16.mxu0 %v746
  %1058 = vmatpush2.bf16.msra.mxu0 %v745
  %1059 = vmatprep.subr.bf16.mxu0 %v744
  %1060 = vmatpush2.bf16.msra.mxu0 %v743
  %1061 = vmatprep.subr.bf16.mxu0 %v742
  %1062 = vmatpush2.bf16.msra.mxu0 %v741
  %1063 = vmatprep.subr.bf16.mxu0 %v740
  %1064 = vmatpush2.bf16.msra.mxu0 %v739
  %1065 = vmatprep.mubr.bf16.mxu0 %v214
  %1066 = vmatmul.mubr.bf16.gmra.mxu0 %v213
  %v1067 = vpop.f32.mrf.mxu0
  %v1068 = vadd.f32 %v1025, %v1067
  %v1069 = vpop.f32.mrf.mxu0
  %v1070 = vadd.f32 %v1027, %v1069
  %v1071 = vpop.f32.mrf.mxu0
  %v1072 = vadd.f32 %v1029, %v1071
  %v1073 = vpop.f32.mrf.mxu0
  %v1074 = vadd.f32 %v1031, %v1073
  %1075 = vdwg.mxu0
  %1076 = vmatprep.subr.bf16.mxu0 %v770
  %1077 = vmatpush1.bf16.msra.mxu0 %v769
  %1078 = vmatprep.subr.bf16.mxu0 %v768
  %1079 = vmatpush1.bf16.msra.mxu0 %v767
  %1080 = vmatprep.subr.bf16.mxu0 %v766
  %1081 = vmatpush1.bf16.msra.mxu0 %v765
  %1082 = vmatprep.subr.bf16.mxu0 %v764
  %1083 = vmatpush1.bf16.msra.mxu0 %v763
  %1084 = vmatprep.subr.bf16.mxu0 %v762
  %1085 = vmatpush1.bf16.msra.mxu0 %v761
  %1086 = vmatprep.subr.bf16.mxu0 %v760
  %1087 = vmatpush1.bf16.msra.mxu0 %v759
  %1088 = vmatprep.subr.bf16.mxu0 %v758
  %1089 = vmatpush1.bf16.msra.mxu0 %v757
  %1090 = vmatprep.subr.bf16.mxu0 %v756
  %1091 = vmatpush1.bf16.msra.mxu0 %v755
  %1092 = vmatprep.subr.bf16.mxu0 %v786
  %1093 = vmatpush2.bf16.msra.mxu0 %v785
  %1094 = vmatprep.subr.bf16.mxu0 %v784
  %1095 = vmatpush2.bf16.msra.mxu0 %v783
  %1096 = vmatprep.subr.bf16.mxu0 %v782
  %1097 = vmatpush2.bf16.msra.mxu0 %v781
  %1098 = vmatprep.subr.bf16.mxu0 %v780
  %1099 = vmatpush2.bf16.msra.mxu0 %v779
  %1100 = vmatprep.subr.bf16.mxu0 %v778
  %1101 = vmatpush2.bf16.msra.mxu0 %v777
  %1102 = vmatprep.subr.bf16.mxu0 %v776
  %1103 = vmatpush2.bf16.msra.mxu0 %v775
  %1104 = vmatprep.subr.bf16.mxu0 %v774
  %1105 = vmatpush2.bf16.msra.mxu0 %v773
  %1106 = vmatprep.subr.bf16.mxu0 %v772
  %1107 = vmatpush2.bf16.msra.mxu0 %v771
  %1108 = vmatprep.mubr.bf16.mxu0 %v216
  %1109 = vmatmul.mubr.bf16.gmra.mxu0 %v215
  %v1110 = vpop.f32.mrf.mxu0
  %v1111 = vadd.f32 %v1068, %v1110
  %v1112 = vpop.f32.mrf.mxu0
  %v1113 = vadd.f32 %v1070, %v1112
  %v1114 = vpop.f32.mrf.mxu0
  %v1115 = vadd.f32 %v1072, %v1114
  %v1116 = vpop.f32.mrf.mxu0
  %v1117 = vadd.f32 %v1074, %v1116
  %1118 = vdwg.mxu0
  %1119 = vmatprep.subr.bf16.mxu0 %v802
  %1120 = vmatpush1.bf16.msra.mxu0 %v801
  %1121 = vmatprep.subr.bf16.mxu0 %v800
  %1122 = vmatpush1.bf16.msra.mxu0 %v799
  %1123 = vmatprep.subr.bf16.mxu0 %v798
  %1124 = vmatpush1.bf16.msra.mxu0 %v797
  %1125 = vmatprep.subr.bf16.mxu0 %v796
  %1126 = vmatpush1.bf16.msra.mxu0 %v795
  %1127 = vmatprep.subr.bf16.mxu0 %v794
  %1128 = vmatpush1.bf16.msra.mxu0 %v793
  %1129 = vmatprep.subr.bf16.mxu0 %v792
  %1130 = vmatpush1.bf16.msra.mxu0 %v791
  %1131 = vmatprep.subr.bf16.mxu0 %v790
  %1132 = vmatpush1.bf16.msra.mxu0 %v789
  %1133 = vmatprep.subr.bf16.mxu0 %v788
  %1134 = vmatpush1.bf16.msra.mxu0 %v787
  %1135 = vmatprep.subr.bf16.mxu0 0
  %1136 = vmatpush2.bf16.msra.mxu0 0
  %1137 = vmatprep.subr.bf16.mxu0 0
  %1138 = vmatpush2.bf16.msra.mxu0 0
  %1139 = vmatprep.subr.bf16.mxu0 0
  %1140 = vmatpush2.bf16.msra.mxu0 0
  %1141 = vmatprep.subr.bf16.mxu0 0
  %1142 = vmatpush2.bf16.msra.mxu0 0
  %1143 = vmatprep.subr.bf16.mxu0 0
  %1144 = vmatpush2.bf16.msra.mxu0 0
  %1145 = vmatprep.subr.bf16.mxu0 0
  %1146 = vmatpush2.bf16.msra.mxu0 0
  %1147 = vmatprep.subr.bf16.mxu0 0
  %1148 = vmatpush2.bf16.msra.mxu0 0
  %1149 = vmatprep.subr.bf16.mxu0 0
  %1150 = vmatpush2.bf16.msra.mxu0 0
  %1151 = vmatprep.mubr.bf16.mxu0 0
  %1152 = vmatmul.mubr.bf16.gmra.mxu0 %v217
  %v1153 = vpop.f32.mrf.mxu0
  %v1154 = vadd.f32 %v1111, %v1153
  %v1155 = vpop.f32.mrf.mxu0
  %v1156 = vadd.f32 %v1113, %v1155
  %v1157 = vpop.f32.mrf.mxu0
  %v1158 = vadd.f32 %v1115, %v1157
  %v1159 = vpop.f32.mrf.mxu0
  %v1160 = vadd.f32 %v1117, %v1159
  %1161 = vdwg.mxu0
  %vm1162 = vcmp.ge.f32.partialorder %v1154, 0.0
  %vm1163 = vcmp.ge.f32.partialorder %v1156, 0.0
  %vm1164 = vcmp.ge.f32.partialorder %v1158, 0.0
  %vm1165 = vcmp.ge.f32.partialorder %v1160, 0.0
  %v1166 = vmul.f32 %v1154, 0.01
  %v1167 = vmul.f32 %v1156, 0.01
  %v1168 = vmul.f32 %v1158, 0.01
  %v1169 = vmul.f32 %v1160, 0.01
  %v1170 = vsel %vm1162, %v1154, %v1166
  %v1171 = vsel %vm1163, %v1156, %v1167
  %v1172 = vsel %vm1164, %v1158, %v1168
  %v1173 = vsel %vm1165, %v1160, %v1169
  %v1174 = vpack.c.bf16 %v1172, %v1170
  %v1175 = vpack.c.bf16 %v1173, %v1171
  %v1178 = vunpack.c.l.b16 %v1174
  %v1179 = vunpack.c.l.b16 %v1175
  %v1180 = vunpack.c.h.b16 %v1174
  %v1181 = vunpack.c.h.b16 %v1175
  %v1182 = vpack.c.b16 %v1179, %v1178
  %v1183 = vpack.c.b16 %v1181, %v1180
  %1186 = vst [vmem:[%s3] sm:$0xff] %v1182
  %1187 = vst [vmem:[%s3 + $0x8] sm:$0xff] %v1183
  // Predicated region
  $region14: #{generator_forward.7} parent=0 // pred_check
    _
  $region15: #{generator_forward.7} parent=0 // pred_check_branch
    %1189 = sbr.rel (0) target = $region17
  $region16: #{generator_forward.7} parent=0 // pred_region
    _
  $region17: #{generator_forward.7} parent=0 // pred_fallthru
    _
  // Predicated region
  $region18: #{generator_forward.7} parent=0 // pred_check
    _
  $region19: #{generator_forward.7} parent=0 // pred_check_branch
    %1191 = sbr.rel (0) target = $region21
  $region20: #{generator_forward.7} parent=0 // pred_region
    _
  $region21: #{generator_forward.7} parent=0 // pred_fallthru
    _

// kernel: generator_forward.9
$region0: #{generator_forward.9}
  #allocation0 [shape = 'u32[]', space=smem, size = 0x4, offset = 0x4, fixed_abs, tag = 'smem constant byte address 0x4 - core index']
  #allocation1 [shape = 'u32[144,128]{1,0:T(1,128)}', space=vmem, size = 0x12000, scoped, tag = 'internal scratch']
  %s0 = inlined_call_operand.vmem [shape: bf16[32,512], index: 0, kind: input, shape index: {}]
  %s1 = inlined_call_operand.vmem [shape: bf16[512,256], index: 1, kind: input, shape index: {}]
  %s2 = inlined_call_operand.vmem [shape: f32[1,256], index: 2, kind: input, shape index: {}]
  %s3 = inlined_call_operand.vmem [shape: f32[32,256], index: 3, kind: output, shape index: {}]
  %s4 = sld [smem:[#allocation0]]
  $region22: #{generator_forward.9} parent=0
    _
  %s6 = ssub.s32 1, %s4
  %s7 = scalar_select 0, %s6, %s4
  // Predicated region
  $region2: #{generator_forward.9} parent=0 // pred_check
    _
  $region3: #{generator_forward.9} parent=0 // pred_check_branch
    %9 = sbr.rel (0) target = $region5
  $region4: #{generator_forward.9} parent=0 // pred_region
    _
  $region5: #{generator_forward.9} parent=0 // pred_fallthru
    _
  // Predicated region
  $region6: #{generator_forward.9} parent=0 // pred_check
    _
  $region7: #{generator_forward.9} parent=0 // pred_check_branch
    %11 = sbr.rel (0) target = $region9
  $region8: #{generator_forward.9} parent=0 // pred_region
    _
  $region9: #{generator_forward.9} parent=0 // pred_fallthru
    _
  // Predicated region
  $region10: #{generator_forward.9} parent=0 // pred_check
    _
  $region11: #{generator_forward.9} parent=0 // pred_check_branch
    %13 = sbr.rel (0) target = $region13
  $region12: #{generator_forward.9} parent=0 // pred_region
    _
  $region13: #{generator_forward.9} parent=0 // pred_fallthru
    _
  %v14 = vld [vmem:[%s0] sm:$0xff]
  %v15 = vld [vmem:[%s0 + $0x8] sm:$0xff]
  %v16 = vld [vmem:[%s0 + $0x10] sm:$0xff]
  %v17 = vld [vmem:[%s0 + $0x18] sm:$0xff]
  %v18 = vld [vmem:[%s0 + $0x20] sm:$0xff]
  %v19 = vld [vmem:[%s0 + $0x28] sm:$0xff]
  %v20 = vld [vmem:[%s0 + $0x30] sm:$0xff]
  %v21 = vld [vmem:[%s0 + $0x38] sm:$0xff]
  %v22 = vld [vmem:[%s1] sm:$0xff]
  %v23 = vld [vmem:[%s1 + $0x8] sm:$0xff]
  %v24 = vld [vmem:[%s1 + $0x10] sm:$0xff]
  %v25 = vld [vmem:[%s1 + $0x18] sm:$0xff]
  %v26 = vld [vmem:[%s1 + $0x20] sm:$0xff]
  %v27 = vld [vmem:[%s1 + $0x28] sm:$0xff]
  %v28 = vld [vmem:[%s1 + $0x30] sm:$0xff]
  %v29 = vld [vmem:[%s1 + $0x38] sm:$0xff]
  %v30 = vld [vmem:[%s1 + $0x40] sm:$0xff]
  %v31 = vld [vmem:[%s1 + $0x48] sm:$0xff]
  %v32 = vld [vmem:[%s1 + $0x50] sm:$0xff]
  %v33 = vld [vmem:[%s1 + $0x58] sm:$0xff]
  %v34 = vld [vmem:[%s1 + $0x60] sm:$0xff]
  %v35 = vld [vmem:[%s1 + $0x68] sm:$0xff]
  %v36 = vld [vmem:[%s1 + $0x70] sm:$0xff]
  %v37 = vld [vmem:[%s1 + $0x78] sm:$0xff]
  %v38 = vld [vmem:[%s1 + $0x80] sm:$0xff]
  %v39 = vld [vmem:[%s1 + $0x88] sm:$0xff]
  %v40 = vld [vmem:[%s1 + $0x90] sm:$0xff]
  %v41 = vld [vmem:[%s1 + $0x98] sm:$0xff]
  %v42 = vld [vmem:[%s1 + $0xa0] sm:$0xff]
  %v43 = vld [vmem:[%s1 + $0xa8] sm:$0xff]
  %v44 = vld [vmem:[%s1 + $0xb0] sm:$0xff]
  %v45 = vld [vmem:[%s1 + $0xb8] sm:$0xff]
  %v46 = vld [vmem:[%s1 + $0xc0] sm:$0xff]
  %v47 = vld [vmem:[%s1 + $0xc8] sm:$0xff]
  %v48 = vld [vmem:[%s1 + $0xd0] sm:$0xff]
  %v49 = vld [vmem:[%s1 + $0xd8] sm:$0xff]
  %v50 = vld [vmem:[%s1 + $0xe0] sm:$0xff]
  %v51 = vld [vmem:[%s1 + $0xe8] sm:$0xff]
  %v52 = vld [vmem:[%s1 + $0xf0] sm:$0xff]
  %v53 = vld [vmem:[%s1 + $0xf8] sm:$0xff]
  %v54 = vld [vmem:[%s1 + $0x100] sm:$0xff]
  %v55 = vld [vmem:[%s1 + $0x108] sm:$0xff]
  %v56 = vld [vmem:[%s1 + $0x110] sm:$0xff]
  %v57 = vld [vmem:[%s1 + $0x118] sm:$0xff]
  %v58 = vld [vmem:[%s1 + $0x120] sm:$0xff]
  %v59 = vld [vmem:[%s1 + $0x128] sm:$0xff]
  %v60 = vld [vmem:[%s1 + $0x130] sm:$0xff]
  %v61 = vld [vmem:[%s1 + $0x138] sm:$0xff]
  %v62 = vld [vmem:[%s1 + $0x140] sm:$0xff]
  %v63 = vld [vmem:[%s1 + $0x148] sm:$0xff]
  %v64 = vld [vmem:[%s1 + $0x150] sm:$0xff]
  %v65 = vld [vmem:[%s1 + $0x158] sm:$0xff]
  %v66 = vld [vmem:[%s1 + $0x160] sm:$0xff]
  %v67 = vld [vmem:[%s1 + $0x168] sm:$0xff]
  %v68 = vld [vmem:[%s1 + $0x170] sm:$0xff]
  %v69 = vld [vmem:[%s1 + $0x178] sm:$0xff]
  %v70 = vld [vmem:[%s1 + $0x180] sm:$0xff]
  %v71 = vld [vmem:[%s1 + $0x188] sm:$0xff]
  %v72 = vld [vmem:[%s1 + $0x190] sm:$0xff]
  %v73 = vld [vmem:[%s1 + $0x198] sm:$0xff]
  %v74 = vld [vmem:[%s1 + $0x1a0] sm:$0xff]
  %v75 = vld [vmem:[%s1 + $0x1a8] sm:$0xff]
  %v76 = vld [vmem:[%s1 + $0x1b0] sm:$0xff]
  %v77 = vld [vmem:[%s1 + $0x1b8] sm:$0xff]
  %v78 = vld [vmem:[%s1 + $0x1c0] sm:$0xff]
  %v79 = vld [vmem:[%s1 + $0x1c8] sm:$0xff]
  %v80 = vld [vmem:[%s1 + $0x1d0] sm:$0xff]
  %v81 = vld [vmem:[%s1 + $0x1d8] sm:$0xff]
  %v82 = vld [vmem:[%s1 + $0x1e0] sm:$0xff]
  %v83 = vld [vmem:[%s1 + $0x1e8] sm:$0xff]
  %v84 = vld [vmem:[%s1 + $0x1f0] sm:$0xff]
  %v85 = vld [vmem:[%s1 + $0x1f8] sm:$0xff]
  %v86 = vld [vmem:[%s2] sm:$0x3]
  %v88 = vlaneseq
  %v89 = vshrl.u32 %v88, 7
  %v90 = vsub.s32 0, %v89
  %v91 = vrot.slane %v86, %v90
  %v92 = vlaneseq
  %v93 = vshrl.u32 %v92, 7
  %v94 = vsub.s32 1, %v93
  %v95 = vrot.slane %v86, %v94
  %v106 = vunpack.c.l.b16 %v14
  %v107 = vunpack.c.h.b16 %v14
  %v108 = vunpack.c.l.b16 %v15
  %v109 = vunpack.c.h.b16 %v15
  %v110 = vunpack.c.l.b16 %v16
  %v111 = vunpack.c.h.b16 %v16
  %v112 = vunpack.c.l.b16 %v17
  %v113 = vunpack.c.h.b16 %v17
  %v114 = vunpack.c.l.b16 %v18
  %v115 = vunpack.c.h.b16 %v18
  %v116 = vunpack.c.l.b16 %v19
  %v117 = vunpack.c.h.b16 %v19
  %v118 = vunpack.c.l.b16 %v20
  %v119 = vunpack.c.h.b16 %v20
  %v120 = vunpack.c.l.b16 %v21
  %v121 = vunpack.c.h.b16 %v21
  %v122 = vpack.c.b16 %v110, %v106
  %v123 = vpack.c.b16 %v111, %v107
  %v124 = vpack.c.b16 %v112, %v108
  %v125 = vpack.c.b16 %v113, %v109
  %v126 = vpack.c.b16 %v118, %v114
  %v127 = vpack.c.b16 %v119, %v115
  %v128 = vpack.c.b16 %v120, %v116
  %v129 = vpack.c.b16 %v121, %v117
  %v202 = vunpack.c.l.b16 %v22
  %v203 = vunpack.c.h.b16 %v22
  %v204 = vunpack.c.l.b16 %v23
  %v205 = vunpack.c.h.b16 %v23
  %v206 = vunpack.c.l.b16 %v24
  %v207 = vunpack.c.h.b16 %v24
  %v208 = vunpack.c.l.b16 %v25
  %v209 = vunpack.c.h.b16 %v25
  %v210 = vunpack.c.l.b16 %v26
  %v211 = vunpack.c.h.b16 %v26
  %v212 = vunpack.c.l.b16 %v27
  %v213 = vunpack.c.h.b16 %v27
  %v214 = vunpack.c.l.b16 %v28
  %v215 = vunpack.c.h.b16 %v28
  %v216 = vunpack.c.l.b16 %v29
  %v217 = vunpack.c.h.b16 %v29
  %v218 = vunpack.c.l.b16 %v30
  %v219 = vunpack.c.h.b16 %v30
  %v220 = vunpack.c.l.b16 %v31
  %v221 = vunpack.c.h.b16 %v31
  %v222 = vunpack.c.l.b16 %v32
  %v223 = vunpack.c.h.b16 %v32
  %v224 = vunpack.c.l.b16 %v33
  %v225 = vunpack.c.h.b16 %v33
  %v226 = vunpack.c.l.b16 %v34
  %v227 = vunpack.c.h.b16 %v34
  %v228 = vunpack.c.l.b16 %v35
  %v229 = vunpack.c.h.b16 %v35
  %v230 = vunpack.c.l.b16 %v36
  %v231 = vunpack.c.h.b16 %v36
  %v232 = vunpack.c.l.b16 %v37
  %v233 = vunpack.c.h.b16 %v37
  %v234 = vunpack.c.l.b16 %v38
  %v235 = vunpack.c.h.b16 %v38
  %v236 = vunpack.c.l.b16 %v39
  %v237 = vunpack.c.h.b16 %v39
  %v238 = vunpack.c.l.b16 %v40
  %v239 = vunpack.c.h.b16 %v40
  %v240 = vunpack.c.l.b16 %v41
  %v241 = vunpack.c.h.b16 %v41
  %v242 = vunpack.c.l.b16 %v42
  %v243 = vunpack.c.h.b16 %v42
  %v244 = vunpack.c.l.b16 %v43
  %v245 = vunpack.c.h.b16 %v43
  %v246 = vunpack.c.l.b16 %v44
  %v247 = vunpack.c.h.b16 %v44
  %v248 = vunpack.c.l.b16 %v45
  %v249 = vunpack.c.h.b16 %v45
  %v250 = vunpack.c.l.b16 %v46
  %v251 = vunpack.c.h.b16 %v46
  %v252 = vunpack.c.l.b16 %v47
  %v253 = vunpack.c.h.b16 %v47
  %v254 = vunpack.c.l.b16 %v48
  %v255 = vunpack.c.h.b16 %v48
  %v256 = vunpack.c.l.b16 %v49
  %v257 = vunpack.c.h.b16 %v49
  %v258 = vunpack.c.l.b16 %v50
  %v259 = vunpack.c.h.b16 %v50
  %v260 = vunpack.c.l.b16 %v51
  %v261 = vunpack.c.h.b16 %v51
  %v262 = vunpack.c.l.b16 %v52
  %v263 = vunpack.c.h.b16 %v52
  %v264 = vunpack.c.l.b16 %v53
  %v265 = vunpack.c.h.b16 %v53
  %v266 = vunpack.c.l.b16 %v54
  %v267 = vunpack.c.h.b16 %v54
  %v268 = vunpack.c.l.b16 %v55
  %v269 = vunpack.c.h.b16 %v55
  %v270 = vunpack.c.l.b16 %v56
  %v271 = vunpack.c.h.b16 %v56
  %v272 = vunpack.c.l.b16 %v57
  %v273 = vunpack.c.h.b16 %v57
  %v274 = vunpack.c.l.b16 %v58
  %v275 = vunpack.c.h.b16 %v58
  %v276 = vunpack.c.l.b16 %v59
  %v277 = vunpack.c.h.b16 %v59
  %v278 = vunpack.c.l.b16 %v60
  %v279 = vunpack.c.h.b16 %v60
  %v280 = vunpack.c.l.b16 %v61
  %v281 = vunpack.c.h.b16 %v61
  %v282 = vunpack.c.l.b16 %v62
  %v283 = vunpack.c.h.b16 %v62
  %v284 = vunpack.c.l.b16 %v63
  %v285 = vunpack.c.h.b16 %v63
  %v286 = vunpack.c.l.b16 %v64
  %v287 = vunpack.c.h.b16 %v64
  %v288 = vunpack.c.l.b16 %v65
  %v289 = vunpack.c.h.b16 %v65
  %v290 = vunpack.c.l.b16 %v66
  %v291 = vunpack.c.h.b16 %v66
  %v292 = vunpack.c.l.b16 %v67
  %v293 = vunpack.c.h.b16 %v67
  %v294 = vunpack.c.l.b16 %v68
  %v295 = vunpack.c.h.b16 %v68
  %v296 = vunpack.c.l.b16 %v69
  %v297 = vunpack.c.h.b16 %v69
  %v298 = vunpack.c.l.b16 %v70
  %v299 = vunpack.c.h.b16 %v70
  %v300 = vunpack.c.l.b16 %v71
  %v301 = vunpack.c.h.b16 %v71
  %v302 = vunpack.c.l.b16 %v72
  %v303 = vunpack.c.h.b16 %v72
  %v304 = vunpack.c.l.b16 %v73
  %v305 = vunpack.c.h.b16 %v73
  %v306 = vunpack.c.l.b16 %v74
  %v307 = vunpack.c.h.b16 %v74
  %v308 = vunpack.c.l.b16 %v75
  %v309 = vunpack.c.h.b16 %v75
  %v310 = vunpack.c.l.b16 %v76
  %v311 = vunpack.c.h.b16 %v76
  %v312 = vunpack.c.l.b16 %v77
  %v313 = vunpack.c.h.b16 %v77
  %v314 = vunpack.c.l.b16 %v78
  %v315 = vunpack.c.h.b16 %v78
  %v316 = vunpack.c.l.b16 %v79
  %v317 = vunpack.c.h.b16 %v79
  %v318 = vunpack.c.l.b16 %v80
  %v319 = vunpack.c.h.b16 %v80
  %v320 = vunpack.c.l.b16 %v81
  %v321 = vunpack.c.h.b16 %v81
  %v322 = vunpack.c.l.b16 %v82
  %v323 = vunpack.c.h.b16 %v82
  %v324 = vunpack.c.l.b16 %v83
  %v325 = vunpack.c.h.b16 %v83
  %v326 = vunpack.c.l.b16 %v84
  %v327 = vunpack.c.h.b16 %v84
  %v328 = vunpack.c.l.b16 %v85
  %v329 = vunpack.c.h.b16 %v85
  %v330 = vpack.c.b16 %v204, %v202
  %v331 = vpack.c.b16 %v205, %v203
  %v332 = vpack.c.b16 %v208, %v206
  %v333 = vpack.c.b16 %v209, %v207
  %v334 = vpack.c.b16 %v212, %v210
  %v335 = vpack.c.b16 %v213, %v211
  %v336 = vpack.c.b16 %v216, %v214
  %v337 = vpack.c.b16 %v217, %v215
  %v338 = vpack.c.b16 %v220, %v218
  %v339 = vpack.c.b16 %v221, %v219
  %v340 = vpack.c.b16 %v224, %v222
  %v341 = vpack.c.b16 %v225, %v223
  %v342 = vpack.c.b16 %v228, %v226
  %v343 = vpack.c.b16 %v229, %v227
  %v344 = vpack.c.b16 %v232, %v230
  %v345 = vpack.c.b16 %v233, %v231
  %v346 = vpack.c.b16 %v236, %v234
  %v347 = vpack.c.b16 %v237, %v235
  %v348 = vpack.c.b16 %v240, %v238
  %v349 = vpack.c.b16 %v241, %v239
  %v350 = vpack.c.b16 %v244, %v242
  %v351 = vpack.c.b16 %v245, %v243
  %v352 = vpack.c.b16 %v248, %v246
  %v353 = vpack.c.b16 %v249, %v247
  %v354 = vpack.c.b16 %v252, %v250
  %v355 = vpack.c.b16 %v253, %v251
  %v356 = vpack.c.b16 %v256, %v254
  %v357 = vpack.c.b16 %v257, %v255
  %v358 = vpack.c.b16 %v260, %v258
  %v359 = vpack.c.b16 %v261, %v259
  %v360 = vpack.c.b16 %v264, %v262
  %v361 = vpack.c.b16 %v265, %v263
  %v362 = vpack.c.b16 %v268, %v266
  %v363 = vpack.c.b16 %v269, %v267
  %v364 = vpack.c.b16 %v272, %v270
  %v365 = vpack.c.b16 %v273, %v271
  %v366 = vpack.c.b16 %v276, %v274
  %v367 = vpack.c.b16 %v277, %v275
  %v368 = vpack.c.b16 %v280, %v278
  %v369 = vpack.c.b16 %v281, %v279
  %v370 = vpack.c.b16 %v284, %v282
  %v371 = vpack.c.b16 %v285, %v283
  %v372 = vpack.c.b16 %v288, %v286
  %v373 = vpack.c.b16 %v289, %v287
  %v374 = vpack.c.b16 %v292, %v290
  %v375 = vpack.c.b16 %v293, %v291
  %v376 = vpack.c.b16 %v296, %v294
  %v377 = vpack.c.b16 %v297, %v295
  %v378 = vpack.c.b16 %v300, %v298
  %v379 = vpack.c.b16 %v301, %v299
  %v380 = vpack.c.b16 %v304, %v302
  %v381 = vpack.c.b16 %v305, %v303
  %v382 = vpack.c.b16 %v308, %v306
  %v383 = vpack.c.b16 %v309, %v307
  %v384 = vpack.c.b16 %v312, %v310
  %v385 = vpack.c.b16 %v313, %v311
  %v386 = vpack.c.b16 %v316, %v314
  %v387 = vpack.c.b16 %v317, %v315
  %v388 = vpack.c.b16 %v320, %v318
  %v389 = vpack.c.b16 %v321, %v319
  %v390 = vpack.c.b16 %v324, %v322
  %v391 = vpack.c.b16 %v325, %v323
  %v392 = vpack.c.b16 %v328, %v326
  %v393 = vpack.c.b16 %v329, %v327
  %458 = vmatprep.subr.bf16.mxu0 %v345
  %459 = vmatpush1.bf16.msra.mxu0 %v344
  %460 = vmatprep.subr.bf16.mxu0 %v343
  %461 = vmatpush1.bf16.msra.mxu0 %v342
  %462 = vmatprep.subr.bf16.mxu0 %v341
  %463 = vmatpush1.bf16.msra.mxu0 %v340
  %464 = vmatprep.subr.bf16.mxu0 %v339
  %465 = vmatpush1.bf16.msra.mxu0 %v338
  %466 = vmatprep.subr.bf16.mxu0 %v337
  %467 = vmatpush1.bf16.msra.mxu0 %v336
  %468 = vmatprep.subr.bf16.mxu0 %v335
  %469 = vmatpush1.bf16.msra.mxu0 %v334
  %470 = vmatprep.subr.bf16.mxu0 %v333
  %471 = vmatpush1.bf16.msra.mxu0 %v332
  %472 = vmatprep.subr.bf16.mxu0 %v331
  %473 = vmatpush1.bf16.msra.mxu0 %v330
  %474 = vmatprep.subr.bf16.mxu0 %v361
  %475 = vmatpush2.bf16.msra.mxu0 %v360
  %476 = vmatprep.subr.bf16.mxu0 %v359
  %477 = vmatpush2.bf16.msra.mxu0 %v358
  %478 = vmatprep.subr.bf16.mxu0 %v357
  %479 = vmatpush2.bf16.msra.mxu0 %v356
  %480 = vmatprep.subr.bf16.mxu0 %v355
  %481 = vmatpush2.bf16.msra.mxu0 %v354
  %482 = vmatprep.subr.bf16.mxu0 %v353
  %483 = vmatpush2.bf16.msra.mxu0 %v352
  %484 = vmatprep.subr.bf16.mxu0 %v351
  %485 = vmatpush2.bf16.msra.mxu0 %v350
  %486 = vmatprep.subr.bf16.mxu0 %v349
  %487 = vmatpush2.bf16.msra.mxu0 %v348
  %488 = vmatprep.subr.bf16.mxu0 %v347
  %489 = vmatpush2.bf16.msra.mxu0 %v346
  %490 = vmatprep.mubr.bf16.mxu0 %v123
  %491 = vmatmul.mubr.bf16.gmra.mxu0 %v122
  %v492 = vpop.f32.mrf.mxu0
  %v493 = vadd.f32 %v91, %v492
  %v494 = vpop.f32.mrf.mxu0
  %v495 = vadd.f32 %v95, %v494
  %v496 = vpop.f32.mrf.mxu0
  %v497 = vadd.f32 %v91, %v496
  %v498 = vpop.f32.mrf.mxu0
  %v499 = vadd.f32 %v95, %v498
  %500 = vmatprep.mubr.bf16.mxu0 %v127
  %501 = vmatmul.mubr.bf16.gmra.mxu0 %v126
  %v502 = vpop.f32.mrf.mxu0
  %v503 = vadd.f32 %v91, %v502
  %v504 = vpop.f32.mrf.mxu0
  %v505 = vadd.f32 %v95, %v504
  %v506 = vpop.f32.mrf.mxu0
  %v507 = vadd.f32 %v91, %v506
  %v508 = vpop.f32.mrf.mxu0
  %v509 = vadd.f32 %v95, %v508
  %510 = vdwg.mxu0
  %511 = vmatprep.subr.bf16.mxu0 %v377
  %512 = vmatpush1.bf16.msra.mxu0 %v376
  %513 = vmatprep.subr.bf16.mxu0 %v375
  %514 = vmatpush1.bf16.msra.mxu0 %v374
  %515 = vmatprep.subr.bf16.mxu0 %v373
  %516 = vmatpush1.bf16.msra.mxu0 %v372
  %517 = vmatprep.subr.bf16.mxu0 %v371
  %518 = vmatpush1.bf16.msra.mxu0 %v370
  %519 = vmatprep.subr.bf16.mxu0 %v369
  %520 = vmatpush1.bf16.msra.mxu0 %v368
  %521 = vmatprep.subr.bf16.mxu0 %v367
  %522 = vmatpush1.bf16.msra.mxu0 %v366
  %523 = vmatprep.subr.bf16.mxu0 %v365
  %524 = vmatpush1.bf16.msra.mxu0 %v364
  %525 = vmatprep.subr.bf16.mxu0 %v363
  %526 = vmatpush1.bf16.msra.mxu0 %v362
  %527 = vmatprep.subr.bf16.mxu0 %v393
  %528 = vmatpush2.bf16.msra.mxu0 %v392
  %529 = vmatprep.subr.bf16.mxu0 %v391
  %530 = vmatpush2.bf16.msra.mxu0 %v390
  %531 = vmatprep.subr.bf16.mxu0 %v389
  %532 = vmatpush2.bf16.msra.mxu0 %v388
  %533 = vmatprep.subr.bf16.mxu0 %v387
  %534 = vmatpush2.bf16.msra.mxu0 %v386
  %535 = vmatprep.subr.bf16.mxu0 %v385
  %536 = vmatpush2.bf16.msra.mxu0 %v384
  %537 = vmatprep.subr.bf16.mxu0 %v383
  %538 = vmatpush2.bf16.msra.mxu0 %v382
  %539 = vmatprep.subr.bf16.mxu0 %v381
  %540 = vmatpush2.bf16.msra.mxu0 %v380
  %541 = vmatprep.subr.bf16.mxu0 %v379
  %542 = vmatpush2.bf16.msra.mxu0 %v378
  %543 = vmatprep.mubr.bf16.mxu0 %v125
  %544 = vmatmul.mubr.bf16.gmra.mxu0 %v124
  %v545 = vpop.f32.mrf.mxu0
  %v546 = vadd.f32 %v493, %v545
  %v547 = vpop.f32.mrf.mxu0
  %v548 = vadd.f32 %v495, %v547
  %v549 = vpop.f32.mrf.mxu0
  %v550 = vadd.f32 %v497, %v549
  %v551 = vpop.f32.mrf.mxu0
  %v552 = vadd.f32 %v499, %v551
  %553 = vmatprep.mubr.bf16.mxu0 %v129
  %554 = vmatmul.mubr.bf16.gmra.mxu0 %v128
  %v555 = vpop.f32.mrf.mxu0
  %v556 = vadd.f32 %v503, %v555
  %v557 = vpop.f32.mrf.mxu0
  %v558 = vadd.f32 %v505, %v557
  %v559 = vpop.f32.mrf.mxu0
  %v560 = vadd.f32 %v507, %v559
  %v561 = vpop.f32.mrf.mxu0
  %v562 = vadd.f32 %v509, %v561
  %563 = vdwg.mxu0
  %vm564 = vcmp.ge.f32.partialorder %v546, 0.0
  %vm565 = vcmp.ge.f32.partialorder %v548, 0.0
  %vm566 = vcmp.ge.f32.partialorder %v550, 0.0
  %vm567 = vcmp.ge.f32.partialorder %v552, 0.0
  %vm568 = vcmp.ge.f32.partialorder %v556, 0.0
  %vm569 = vcmp.ge.f32.partialorder %v558, 0.0
  %vm570 = vcmp.ge.f32.partialorder %v560, 0.0
  %vm571 = vcmp.ge.f32.partialorder %v562, 0.0
  %v572 = vmul.f32 %v546, 0.01
  %v573 = vmul.f32 %v548, 0.01
  %v574 = vmul.f32 %v550, 0.01
  %v575 = vmul.f32 %v552, 0.01
  %v576 = vmul.f32 %v556, 0.01
  %v577 = vmul.f32 %v558, 0.01
  %v578 = vmul.f32 %v560, 0.01
  %v579 = vmul.f32 %v562, 0.01
  %v580 = vsel %vm564, %v546, %v572
  %v581 = vsel %vm565, %v548, %v573
  %v582 = vsel %vm566, %v550, %v574
  %v583 = vsel %vm567, %v552, %v575
  %v584 = vsel %vm568, %v556, %v576
  %v585 = vsel %vm569, %v558, %v577
  %v586 = vsel %vm570, %v560, %v578
  %v587 = vsel %vm571, %v562, %v579
  %588 = vst [vmem:[%s3] sm:$0xff] %v580
  %589 = vst [vmem:[%s3 + $0x8] sm:$0xff] %v581
  %590 = vst [vmem:[%s3 + $0x10] sm:$0xff] %v582
  %591 = vst [vmem:[%s3 + $0x18] sm:$0xff] %v583
  %592 = vst [vmem:[%s3 + $0x20] sm:$0xff] %v584
  %593 = vst [vmem:[%s3 + $0x28] sm:$0xff] %v585
  %594 = vst [vmem:[%s3 + $0x30] sm:$0xff] %v586
  %595 = vst [vmem:[%s3 + $0x38] sm:$0xff] %v587
  // Predicated region
  $region14: #{generator_forward.9} parent=0 // pred_check
    _
  $region15: #{generator_forward.9} parent=0 // pred_check_branch
    %597 = sbr.rel (0) target = $region17
  $region16: #{generator_forward.9} parent=0 // pred_region
    _
  $region17: #{generator_forward.9} parent=0 // pred_fallthru
    _
  // Predicated region
  $region18: #{generator_forward.9} parent=0 // pred_check
    _
  $region19: #{generator_forward.9} parent=0 // pred_check_branch
    %599 = sbr.rel (0) target = $region21
  $region20: #{generator_forward.9} parent=0 // pred_region
    _
  $region21: #{generator_forward.9} parent=0 // pred_fallthru
    _

// kernel: generator_forward.8
$region0: #{generator_forward.8}
  #allocation0 [shape = 'u32[]', space=smem, size = 0x4, offset = 0x4, fixed_abs, tag = 'smem constant byte address 0x4 - core index']
  #allocation1 [shape = 'u32[144,128]{1,0:T(1,128)}', space=vmem, size = 0x12000, scoped, tag = 'internal scratch']
  %s0 = inlined_call_operand.vmem [shape: bf16[16,1024], index: 0, kind: input, shape index: {}]
  %s1 = inlined_call_operand.vmem [shape: bf16[1024,512], index: 1, kind: input, shape index: {}]
  %s2 = inlined_call_operand.vmem [shape: f32[1,512], index: 2, kind: input, shape index: {}]
  %s3 = inlined_call_operand.vmem [shape: bf16[16,512], index: 3, kind: output, shape index: {}]
  %s4 = sld [smem:[#allocation0]]
  $region22: #{generator_forward.8} parent=0
    _
  %s6 = ssub.s32 1, %s4
  %s7 = scalar_select 0, %s6, %s4
  // Predicated region
  $region2: #{generator_forward.8} parent=0 // pred_check
    _
  $region3: #{generator_forward.8} parent=0 // pred_check_branch
    %9 = sbr.rel (0) target = $region5
  $region4: #{generator_forward.8} parent=0 // pred_region
    _
  $region5: #{generator_forward.8} parent=0 // pred_fallthru
    _
  // Predicated region
  $region6: #{generator_forward.8} parent=0 // pred_check
    _
  $region7: #{generator_forward.8} parent=0 // pred_check_branch
    %11 = sbr.rel (0) target = $region9
  $region8: #{generator_forward.8} parent=0 // pred_region
    _
  $region9: #{generator_forward.8} parent=0 // pred_fallthru
    _
  // Predicated region
  $region10: #{generator_forward.8} parent=0 // pred_check
    _
  $region11: #{generator_forward.8} parent=0 // pred_check_branch
    %13 = sbr.rel (0) target = $region13
  $region12: #{generator_forward.8} parent=0 // pred_region
    _
  $region13: #{generator_forward.8} parent=0 // pred_fallthru
    _
  %v14 = vld [vmem:[%s0] sm:$0xff]
  %v15 = vld [vmem:[%s0 + $0x8] sm:$0xff]
  %v16 = vld [vmem:[%s0 + $0x10] sm:$0xff]
  %v17 = vld [vmem:[%s0 + $0x18] sm:$0xff]
  %v18 = vld [vmem:[%s0 + $0x20] sm:$0xff]
  %v19 = vld [vmem:[%s0 + $0x28] sm:$0xff]
  %v20 = vld [vmem:[%s0 + $0x30] sm:$0xff]
  %v21 = vld [vmem:[%s0 + $0x38] sm:$0xff]
  %v22 = vld [vmem:[%s1] sm:$0xff]
  %v23 = vld [vmem:[%s1 + $0x8] sm:$0xff]
  %v24 = vld [vmem:[%s1 + $0x10] sm:$0xff]
  %v25 = vld [vmem:[%s1 + $0x18] sm:$0xff]
  %v26 = vld [vmem:[%s1 + $0x20] sm:$0xff]
  %v27 = vld [vmem:[%s1 + $0x28] sm:$0xff]
  %v28 = vld [vmem:[%s1 + $0x30] sm:$0xff]
  %v29 = vld [vmem:[%s1 + $0x38] sm:$0xff]
  %v30 = vld [vmem:[%s1 + $0x40] sm:$0xff]
  %v31 = vld [vmem:[%s1 + $0x48] sm:$0xff]
  %v32 = vld [vmem:[%s1 + $0x50] sm:$0xff]
  %v33 = vld [vmem:[%s1 + $0x58] sm:$0xff]
  %v34 = vld [vmem:[%s1 + $0x60] sm:$0xff]
  %v35 = vld [vmem:[%s1 + $0x68] sm:$0xff]
  %v36 = vld [vmem:[%s1 + $0x70] sm:$0xff]
  %v37 = vld [vmem:[%s1 + $0x78] sm:$0xff]
  %v38 = vld [vmem:[%s1 + $0x80] sm:$0xff]
  %v39 = vld [vmem:[%s1 + $0x88] sm:$0xff]
  %v40 = vld [vmem:[%s1 + $0x90] sm:$0xff]
  %v41 = vld [vmem:[%s1 + $0x98] sm:$0xff]
  %v42 = vld [vmem:[%s1 + $0xa0] sm:$0xff]
  %v43 = vld [vmem:[%s1 + $0xa8] sm:$0xff]
  %v44 = vld [vmem:[%s1 + $0xb0] sm:$0xff]
  %v45 = vld [vmem:[%s1 + $0xb8] sm:$0xff]
  %v46 = vld [vmem:[%s1 + $0xc0] sm:$0xff]
  %v47 = vld [vmem:[%s1 + $0xc8] sm:$0xff]
  %v48 = vld [vmem:[%s1 + $0xd0] sm:$0xff]
  %v49 = vld [vmem:[%s1 + $0xd8] sm:$0xff]
  %v50 = vld [vmem:[%s1 + $0xe0] sm:$0xff]
  %v51 = vld [vmem:[%s1 + $0xe8] sm:$0xff]
  %v52 = vld [vmem:[%s1 + $0xf0] sm:$0xff]
  %v53 = vld [vmem:[%s1 + $0xf8] sm:$0xff]
  %v54 = vld [vmem:[%s1 + $0x100] sm:$0xff]
  %v55 = vld [vmem:[%s1 + $0x108] sm:$0xff]
  %v56 = vld [vmem:[%s1 + $0x110] sm:$0xff]
  %v57 = vld [vmem:[%s1 + $0x118] sm:$0xff]
  %v58 = vld [vmem:[%s1 + $0x120] sm:$0xff]
  %v59 = vld [vmem:[%s1 + $0x128] sm:$0xff]
  %v60 = vld [vmem:[%s1 + $0x130] sm:$0xff]
  %v61 = vld [vmem:[%s1 + $0x138] sm:$0xff]
  %v62 = vld [vmem:[%s1 + $0x140] sm:$0xff]
  %v63 = vld [vmem:[%s1 + $0x148] sm:$0xff]
  %v64 = vld [vmem:[%s1 + $0x150] sm:$0xff]
  %v65 = vld [vmem:[%s1 + $0x158] sm:$0xff]
  %v66 = vld [vmem:[%s1 + $0x160] sm:$0xff]
  %v67 = vld [vmem:[%s1 + $0x168] sm:$0xff]
  %v68 = vld [vmem:[%s1 + $0x170] sm:$0xff]
  %v69 = vld [vmem:[%s1 + $0x178] sm:$0xff]
  %v70 = vld [vmem:[%s1 + $0x180] sm:$0xff]
  %v71 = vld [vmem:[%s1 + $0x188] sm:$0xff]
  %v72 = vld [vmem:[%s1 + $0x190] sm:$0xff]
  %v73 = vld [vmem:[%s1 + $0x198] sm:$0xff]
  %v74 = vld [vmem:[%s1 + $0x1a0] sm:$0xff]
  %v75 = vld [vmem:[%s1 + $0x1a8] sm:$0xff]
  %v76 = vld [vmem:[%s1 + $0x1b0] sm:$0xff]
  %v77 = vld [vmem:[%s1 + $0x1b8] sm:$0xff]
  %v78 = vld [vmem:[%s1 + $0x1c0] sm:$0xff]
  %v79 = vld [vmem:[%s1 + $0x1c8] sm:$0xff]
  %v80 = vld [vmem:[%s1 + $0x1d0] sm:$0xff]
  %v81 = vld [vmem:[%s1 + $0x1d8] sm:$0xff]
  %v82 = vld [vmem:[%s1 + $0x1e0] sm:$0xff]
  %v83 = vld [vmem:[%s1 + $0x1e8] sm:$0xff]
  %v84 = vld [vmem:[%s1 + $0x1f0] sm:$0xff]
  %v85 = vld [vmem:[%s1 + $0x1f8] sm:$0xff]
  %v86 = vld [vmem:[%s1 + $0x200] sm:$0xff]
  %v87 = vld [vmem:[%s1 + $0x208] sm:$0xff]
  %v88 = vld [vmem:[%s1 + $0x210] sm:$0xff]
  %v89 = vld [vmem:[%s1 + $0x218] sm:$0xff]
  %v90 = vld [vmem:[%s1 + $0x220] sm:$0xff]
  %v91 = vld [vmem:[%s1 + $0x228] sm:$0xff]
  %v92 = vld [vmem:[%s1 + $0x230] sm:$0xff]
  %v93 = vld [vmem:[%s1 + $0x238] sm:$0xff]
  %v94 = vld [vmem:[%s1 + $0x240] sm:$0xff]
  %v95 = vld [vmem:[%s1 + $0x248] sm:$0xff]
  %v96 = vld [vmem:[%s1 + $0x250] sm:$0xff]
  %v97 = vld [vmem:[%s1 + $0x258] sm:$0xff]
  %v98 = vld [vmem:[%s1 + $0x260] sm:$0xff]
  %v99 = vld [vmem:[%s1 + $0x268] sm:$0xff]
  %v100 = vld [vmem:[%s1 + $0x270] sm:$0xff]
  %v101 = vld [vmem:[%s1 + $0x278] sm:$0xff]
  %v102 = vld [vmem:[%s1 + $0x280] sm:$0xff]
  %v103 = vld [vmem:[%s1 + $0x288] sm:$0xff]
  %v104 = vld [vmem:[%s1 + $0x290] sm:$0xff]
  %v105 = vld [vmem:[%s1 + $0x298] sm:$0xff]
  %v106 = vld [vmem:[%s1 + $0x2a0] sm:$0xff]
  %v107 = vld [vmem:[%s1 + $0x2a8] sm:$0xff]
  %v108 = vld [vmem:[%s1 + $0x2b0] sm:$0xff]
  %v109 = vld [vmem:[%s1 + $0x2b8] sm:$0xff]
  %v110 = vld [vmem:[%s1 + $0x2c0] sm:$0xff]
  %v111 = vld [vmem:[%s1 + $0x2c8] sm:$0xff]
  %v112 = vld [vmem:[%s1 + $0x2d0] sm:$0xff]
  %v113 = vld [vmem:[%s1 + $0x2d8] sm:$0xff]
  %v114 = vld [vmem:[%s1 + $0x2e0] sm:$0xff]
  %v115 = vld [vmem:[%s1 + $0x2e8] sm:$0xff]
  %v116 = vld [vmem:[%s1 + $0x2f0] sm:$0xff]
  %v117 = vld [vmem:[%s1 + $0x2f8] sm:$0xff]
  %v118 = vld [vmem:[%s1 + $0x300] sm:$0xff]
  %v119 = vld [vmem:[%s1 + $0x308] sm:$0xff]
  %v120 = vld [vmem:[%s1 + $0x310] sm:$0xff]
  %v121 = vld [vmem:[%s1 + $0x318] sm:$0xff]
  %v122 = vld [vmem:[%s1 + $0x320] sm:$0xff]
  %v123 = vld [vmem:[%s1 + $0x328] sm:$0xff]
  %v124 = vld [vmem:[%s1 + $0x330] sm:$0xff]
  %v125 = vld [vmem:[%s1 + $0x338] sm:$0xff]
  %v126 = vld [vmem:[%s1 + $0x340] sm:$0xff]
  %v127 = vld [vmem:[%s1 + $0x348] sm:$0xff]
  %v128 = vld [vmem:[%s1 + $0x350] sm:$0xff]
  %v129 = vld [vmem:[%s1 + $0x358] sm:$0xff]
  %v130 = vld [vmem:[%s1 + $0x360] sm:$0xff]
  %v131 = vld [vmem:[%s1 + $0x368] sm:$0xff]
  %v132 = vld [vmem:[%s1 + $0x370] sm:$0xff]
  %v133 = vld [vmem:[%s1 + $0x378] sm:$0xff]
  %v134 = vld [vmem:[%s1 + $0x380] sm:$0xff]
  %v135 = vld [vmem:[%s1 + $0x388] sm:$0xff]
  %v136 = vld [vmem:[%s1 + $0x390] sm:$0xff]
  %v137 = vld [vmem:[%s1 + $0x398] sm:$0xff]
  %v138 = vld [vmem:[%s1 + $0x3a0] sm:$0xff]
  %v139 = vld [vmem:[%s1 + $0x3a8] sm:$0xff]
  %v140 = vld [vmem:[%s1 + $0x3b0] sm:$0xff]
  %v141 = vld [vmem:[%s1 + $0x3b8] sm:$0xff]
  %v142 = vld [vmem:[%s1 + $0x3c0] sm:$0xff]
  %v143 = vld [vmem:[%s1 + $0x3c8] sm:$0xff]
  %v144 = vld [vmem:[%s1 + $0x3d0] sm:$0xff]
  %v145 = vld [vmem:[%s1 + $0x3d8] sm:$0xff]
  %v146 = vld [vmem:[%s1 + $0x3e0] sm:$0xff]
  %v147 = vld [vmem:[%s1 + $0x3e8] sm:$0xff]
  %v148 = vld [vmem:[%s1 + $0x3f0] sm:$0xff]
  %v149 = vld [vmem:[%s1 + $0x3f8] sm:$0xff]
  %v150 = vld [vmem:[%s1 + $0x400] sm:$0xff]
  %v151 = vld [vmem:[%s1 + $0x408] sm:$0xff]
  %v152 = vld [vmem:[%s1 + $0x410] sm:$0xff]
  %v153 = vld [vmem:[%s1 + $0x418] sm:$0xff]
  %v154 = vld [vmem:[%s1 + $0x420] sm:$0xff]
  %v155 = vld [vmem:[%s1 + $0x428] sm:$0xff]
  %v156 = vld [vmem:[%s1 + $0x430] sm:$0xff]
  %v157 = vld [vmem:[%s1 + $0x438] sm:$0xff]
  %v158 = vld [vmem:[%s1 + $0x440] sm:$0xff]
  %v159 = vld [vmem:[%s1 + $0x448] sm:$0xff]
  %v160 = vld [vmem:[%s1 + $0x450] sm:$0xff]
  %v161 = vld [vmem:[%s1 + $0x458] sm:$0xff]
  %v162 = vld [vmem:[%s1 + $0x460] sm:$0xff]
  %v163 = vld [vmem:[%s1 + $0x468] sm:$0xff]
  %v164 = vld [vmem:[%s1 + $0x470] sm:$0xff]
  %v165 = vld [vmem:[%s1 + $0x478] sm:$0xff]
  %v166 = vld [vmem:[%s1 + $0x480] sm:$0xff]
  %v167 = vld [vmem:[%s1 + $0x488] sm:$0xff]
  %v168 = vld [vmem:[%s1 + $0x490] sm:$0xff]
  %v169 = vld [vmem:[%s1 + $0x498] sm:$0xff]
  %v170 = vld [vmem:[%s1 + $0x4a0] sm:$0xff]
  %v171 = vld [vmem:[%s1 + $0x4a8] sm:$0xff]
  %v172 = vld [vmem:[%s1 + $0x4b0] sm:$0xff]
  %v173 = vld [vmem:[%s1 + $0x4b8] sm:$0xff]
  %v174 = vld [vmem:[%s1 + $0x4c0] sm:$0xff]
  %v175 = vld [vmem:[%s1 + $0x4c8] sm:$0xff]
  %v176 = vld [vmem:[%s1 + $0x4d0] sm:$0xff]
  %v177 = vld [vmem:[%s1 + $0x4d8] sm:$0xff]
  %v178 = vld [vmem:[%s1 + $0x4e0] sm:$0xff]
  %v179 = vld [vmem:[%s1 + $0x4e8] sm:$0xff]
  %v180 = vld [vmem:[%s1 + $0x4f0] sm:$0xff]
  %v181 = vld [vmem:[%s1 + $0x4f8] sm:$0xff]
  %v182 = vld [vmem:[%s1 + $0x500] sm:$0xff]
  %v183 = vld [vmem:[%s1 + $0x508] sm:$0xff]
  %v184 = vld [vmem:[%s1 + $0x510] sm:$0xff]
  %v185 = vld [vmem:[%s1 + $0x518] sm:$0xff]
  %v186 = vld [vmem:[%s1 + $0x520] sm:$0xff]
  %v187 = vld [vmem:[%s1 + $0x528] sm:$0xff]
  %v188 = vld [vmem:[%s1 + $0x530] sm:$0xff]
  %v189 = vld [vmem:[%s1 + $0x538] sm:$0xff]
  %v190 = vld [vmem:[%s1 + $0x540] sm:$0xff]
  %v191 = vld [vmem:[%s1 + $0x548] sm:$0xff]
  %v192 = vld [vmem:[%s1 + $0x550] sm:$0xff]
  %v193 = vld [vmem:[%s1 + $0x558] sm:$0xff]
  %v194 = vld [vmem:[%s1 + $0x560] sm:$0xff]
  %v195 = vld [vmem:[%s1 + $0x568] sm:$0xff]
  %v196 = vld [vmem:[%s1 + $0x570] sm:$0xff]
  %v197 = vld [vmem:[%s1 + $0x578] sm:$0xff]
  %v198 = vld [vmem:[%s1 + $0x580] sm:$0xff]
  %v199 = vld [vmem:[%s1 + $0x588] sm:$0xff]
  %v200 = vld [vmem:[%s1 + $0x590] sm:$0xff]
  %v201 = vld [vmem:[%s1 + $0x598] sm:$0xff]
  %v202 = vld [vmem:[%s1 + $0x5a0] sm:$0xff]
  %v203 = vld [vmem:[%s1 + $0x5a8] sm:$0xff]
  %v204 = vld [vmem:[%s1 + $0x5b0] sm:$0xff]
  %v205 = vld [vmem:[%s1 + $0x5b8] sm:$0xff]
  %v206 = vld [vmem:[%s1 + $0x5c0] sm:$0xff]
  %v207 = vld [vmem:[%s1 + $0x5c8] sm:$0xff]
  %v208 = vld [vmem:[%s1 + $0x5d0] sm:$0xff]
  %v209 = vld [vmem:[%s1 + $0x5d8] sm:$0xff]
  %v210 = vld [vmem:[%s1 + $0x5e0] sm:$0xff]
  %v211 = vld [vmem:[%s1 + $0x5e8] sm:$0xff]
  %v212 = vld [vmem:[%s1 + $0x5f0] sm:$0xff]
  %v213 = vld [vmem:[%s1 + $0x5f8] sm:$0xff]
  %v214 = vld [vmem:[%s1 + $0x600] sm:$0xff]
  %v215 = vld [vmem:[%s1 + $0x608] sm:$0xff]
  %v216 = vld [vmem:[%s1 + $0x610] sm:$0xff]
  %v217 = vld [vmem:[%s1 + $0x618] sm:$0xff]
  %v218 = vld [vmem:[%s1 + $0x620] sm:$0xff]
  %v219 = vld [vmem:[%s1 + $0x628] sm:$0xff]
  %v220 = vld [vmem:[%s1 + $0x630] sm:$0xff]
  %v221 = vld [vmem:[%s1 + $0x638] sm:$0xff]
  %v222 = vld [vmem:[%s1 + $0x640] sm:$0xff]
  %v223 = vld [vmem:[%s1 + $0x648] sm:$0xff]
  %v224 = vld [vmem:[%s1 + $0x650] sm:$0xff]
  %v225 = vld [vmem:[%s1 + $0x658] sm:$0xff]
  %v226 = vld [vmem:[%s1 + $0x660] sm:$0xff]
  %v227 = vld [vmem:[%s1 + $0x668] sm:$0xff]
  %v228 = vld [vmem:[%s1 + $0x670] sm:$0xff]
  %v229 = vld [vmem:[%s1 + $0x678] sm:$0xff]
  %v230 = vld [vmem:[%s1 + $0x680] sm:$0xff]
  %v231 = vld [vmem:[%s1 + $0x688] sm:$0xff]
  %v232 = vld [vmem:[%s1 + $0x690] sm:$0xff]
  %v233 = vld [vmem:[%s1 + $0x698] sm:$0xff]
  %v234 = vld [vmem:[%s1 + $0x6a0] sm:$0xff]
  %v235 = vld [vmem:[%s1 + $0x6a8] sm:$0xff]
  %v236 = vld [vmem:[%s1 + $0x6b0] sm:$0xff]
  %v237 = vld [vmem:[%s1 + $0x6b8] sm:$0xff]
  %v238 = vld [vmem:[%s1 + $0x6c0] sm:$0xff]
  %v239 = vld [vmem:[%s1 + $0x6c8] sm:$0xff]
  %v240 = vld [vmem:[%s1 + $0x6d0] sm:$0xff]
  %v241 = vld [vmem:[%s1 + $0x6d8] sm:$0xff]
  %v242 = vld [vmem:[%s1 + $0x6e0] sm:$0xff]
  %v243 = vld [vmem:[%s1 + $0x6e8] sm:$0xff]
  %v244 = vld [vmem:[%s1 + $0x6f0] sm:$0xff]
  %v245 = vld [vmem:[%s1 + $0x6f8] sm:$0xff]
  %v246 = vld [vmem:[%s1 + $0x700] sm:$0xff]
  %v247 = vld [vmem:[%s1 + $0x708] sm:$0xff]
  %v248 = vld [vmem:[%s1 + $0x710] sm:$0xff]
  %v249 = vld [vmem:[%s1 + $0x718] sm:$0xff]
  %v250 = vld [vmem:[%s1 + $0x720] sm:$0xff]
  %v251 = vld [vmem:[%s1 + $0x728] sm:$0xff]
  %v252 = vld [vmem:[%s1 + $0x730] sm:$0xff]
  %v253 = vld [vmem:[%s1 + $0x738] sm:$0xff]
  %v254 = vld [vmem:[%s1 + $0x740] sm:$0xff]
  %v255 = vld [vmem:[%s1 + $0x748] sm:$0xff]
  %v256 = vld [vmem:[%s1 + $0x750] sm:$0xff]
  %v257 = vld [vmem:[%s1 + $0x758] sm:$0xff]
  %v258 = vld [vmem:[%s1 + $0x760] sm:$0xff]
  %v259 = vld [vmem:[%s1 + $0x768] sm:$0xff]
  %v260 = vld [vmem:[%s1 + $0x770] sm:$0xff]
  %v261 = vld [vmem:[%s1 + $0x778] sm:$0xff]
  %v262 = vld [vmem:[%s1 + $0x780] sm:$0xff]
  %v263 = vld [vmem:[%s1 + $0x788] sm:$0xff]
  %v264 = vld [vmem:[%s1 + $0x790] sm:$0xff]
  %v265 = vld [vmem:[%s1 + $0x798] sm:$0xff]
  %v266 = vld [vmem:[%s1 + $0x7a0] sm:$0xff]
  %v267 = vld [vmem:[%s1 + $0x7a8] sm:$0xff]
  %v268 = vld [vmem:[%s1 + $0x7b0] sm:$0xff]
  %v269 = vld [vmem:[%s1 + $0x7b8] sm:$0xff]
  %v270 = vld [vmem:[%s1 + $0x7c0] sm:$0xff]
  %v271 = vld [vmem:[%s1 + $0x7c8] sm:$0xff]
  %v272 = vld [vmem:[%s1 + $0x7d0] sm:$0xff]
  %v273 = vld [vmem:[%s1 + $0x7d8] sm:$0xff]
  %v274 = vld [vmem:[%s1 + $0x7e0] sm:$0xff]
  %v275 = vld [vmem:[%s1 + $0x7e8] sm:$0xff]
  %v276 = vld [vmem:[%s1 + $0x7f0] sm:$0xff]
  %v277 = vld [vmem:[%s1 + $0x7f8] sm:$0xff]
  %v278 = vld [vmem:[%s2] sm:$0xf]
  %v280 = vlaneseq
  %v281 = vshrl.u32 %v280, 7
  %v282 = vsub.s32 0, %v281
  %v283 = vrot.slane %v278, %v282
  %v284 = vlaneseq
  %v285 = vshrl.u32 %v284, 7
  %v286 = vsub.s32 1, %v285
  %v287 = vrot.slane %v278, %v286
  %v288 = vlaneseq
  %v289 = vshrl.u32 %v288, 7
  %v290 = vsub.s32 2, %v289
  %v291 = vrot.slane %v278, %v290
  %v292 = vlaneseq
  %v293 = vshrl.u32 %v292, 7
  %v294 = vsub.s32 3, %v293
  %v295 = vrot.slane %v278, %v294
  %v308 = vunpack.c.l.b16 %v14
  %v309 = vunpack.c.h.b16 %v14
  %v310 = vunpack.c.l.b16 %v15
  %v311 = vunpack.c.h.b16 %v15
  %v312 = vunpack.c.l.b16 %v16
  %v313 = vunpack.c.h.b16 %v16
  %v314 = vunpack.c.l.b16 %v17
  %v315 = vunpack.c.h.b16 %v17
  %v316 = vunpack.c.l.b16 %v18
  %v317 = vunpack.c.h.b16 %v18
  %v318 = vunpack.c.l.b16 %v19
  %v319 = vunpack.c.h.b16 %v19
  %v320 = vunpack.c.l.b16 %v20
  %v321 = vunpack.c.h.b16 %v20
  %v322 = vunpack.c.l.b16 %v21
  %v323 = vunpack.c.h.b16 %v21
  %v324 = vpack.c.b16 %v316, %v308
  %v325 = vpack.c.b16 %v317, %v309
  %v326 = vpack.c.b16 %v318, %v310
  %v327 = vpack.c.b16 %v319, %v311
  %v328 = vpack.c.b16 %v320, %v312
  %v329 = vpack.c.b16 %v321, %v313
  %v330 = vpack.c.b16 %v322, %v314
  %v331 = vpack.c.b16 %v323, %v315
  %v596 = vunpack.c.l.b16 %v22
  %v597 = vunpack.c.h.b16 %v22
  %v598 = vunpack.c.l.b16 %v23
  %v599 = vunpack.c.h.b16 %v23
  %v600 = vunpack.c.l.b16 %v24
  %v601 = vunpack.c.h.b16 %v24
  %v602 = vunpack.c.l.b16 %v25
  %v603 = vunpack.c.h.b16 %v25
  %v604 = vunpack.c.l.b16 %v26
  %v605 = vunpack.c.h.b16 %v26
  %v606 = vunpack.c.l.b16 %v27
  %v607 = vunpack.c.h.b16 %v27
  %v608 = vunpack.c.l.b16 %v28
  %v609 = vunpack.c.h.b16 %v28
  %v610 = vunpack.c.l.b16 %v29
  %v611 = vunpack.c.h.b16 %v29
  %v612 = vunpack.c.l.b16 %v30
  %v613 = vunpack.c.h.b16 %v30
  %v614 = vunpack.c.l.b16 %v31
  %v615 = vunpack.c.h.b16 %v31
  %v616 = vunpack.c.l.b16 %v32
  %v617 = vunpack.c.h.b16 %v32
  %v618 = vunpack.c.l.b16 %v33
  %v619 = vunpack.c.h.b16 %v33
  %v620 = vunpack.c.l.b16 %v34
  %v621 = vunpack.c.h.b16 %v34
  %v622 = vunpack.c.l.b16 %v35
  %v623 = vunpack.c.h.b16 %v35
  %v624 = vunpack.c.l.b16 %v36
  %v625 = vunpack.c.h.b16 %v36
  %v626 = vunpack.c.l.b16 %v37
  %v627 = vunpack.c.h.b16 %v37
  %v628 = vunpack.c.l.b16 %v38
  %v629 = vunpack.c.h.b16 %v38
  %v630 = vunpack.c.l.b16 %v39
  %v631 = vunpack.c.h.b16 %v39
  %v632 = vunpack.c.l.b16 %v40
  %v633 = vunpack.c.h.b16 %v40
  %v634 = vunpack.c.l.b16 %v41
  %v635 = vunpack.c.h.b16 %v41
  %v636 = vunpack.c.l.b16 %v42
  %v637 = vunpack.c.h.b16 %v42
  %v638 = vunpack.c.l.b16 %v43
  %v639 = vunpack.c.h.b16 %v43
  %v640 = vunpack.c.l.b16 %v44
  %v641 = vunpack.c.h.b16 %v44
  %v642 = vunpack.c.l.b16 %v45
  %v643 = vunpack.c.h.b16 %v45
  %v644 = vunpack.c.l.b16 %v46
  %v645 = vunpack.c.h.b16 %v46
  %v646 = vunpack.c.l.b16 %v47
  %v647 = vunpack.c.h.b16 %v47
  %v648 = vunpack.c.l.b16 %v48
  %v649 = vunpack.c.h.b16 %v48
  %v650 = vunpack.c.l.b16 %v49
  %v651 = vunpack.c.h.b16 %v49
  %v652 = vunpack.c.l.b16 %v50
  %v653 = vunpack.c.h.b16 %v50
  %v654 = vunpack.c.l.b16 %v51
  %v655 = vunpack.c.h.b16 %v51
  %v656 = vunpack.c.l.b16 %v52
  %v657 = vunpack.c.h.b16 %v52
  %v658 = vunpack.c.l.b16 %v53
  %v659 = vunpack.c.h.b16 %v53
  %v660 = vunpack.c.l.b16 %v54
  %v661 = vunpack.c.h.b16 %v54
  %v662 = vunpack.c.l.b16 %v55
  %v663 = vunpack.c.h.b16 %v55
  %v664 = vunpack.c.l.b16 %v56
  %v665 = vunpack.c.h.b16 %v56
  %v666 = vunpack.c.l.b16 %v57
  %v667 = vunpack.c.h.b16 %v57
  %v668 = vunpack.c.l.b16 %v58
  %v669 = vunpack.c.h.b16 %v58
  %v670 = vunpack.c.l.b16 %v59
  %v671 = vunpack.c.h.b16 %v59
  %v672 = vunpack.c.l.b16 %v60
  %v673 = vunpack.c.h.b16 %v60
  %v674 = vunpack.c.l.b16 %v61
  %v675 = vunpack.c.h.b16 %v61
  %v676 = vunpack.c.l.b16 %v62
  %v677 = vunpack.c.h.b16 %v62
  %v678 = vunpack.c.l.b16 %v63
  %v679 = vunpack.c.h.b16 %v63
  %v680 = vunpack.c.l.b16 %v64
  %v681 = vunpack.c.h.b16 %v64
  %v682 = vunpack.c.l.b16 %v65
  %v683 = vunpack.c.h.b16 %v65
  %v684 = vunpack.c.l.b16 %v66
  %v685 = vunpack.c.h.b16 %v66
  %v686 = vunpack.c.l.b16 %v67
  %v687 = vunpack.c.h.b16 %v67
  %v688 = vunpack.c.l.b16 %v68
  %v689 = vunpack.c.h.b16 %v68
  %v690 = vunpack.c.l.b16 %v69
  %v691 = vunpack.c.h.b16 %v69
  %v692 = vunpack.c.l.b16 %v70
  %v693 = vunpack.c.h.b16 %v70
  %v694 = vunpack.c.l.b16 %v71
  %v695 = vunpack.c.h.b16 %v71
  %v696 = vunpack.c.l.b16 %v72
  %v697 = vunpack.c.h.b16 %v72
  %v698 = vunpack.c.l.b16 %v73
  %v699 = vunpack.c.h.b16 %v73
  %v700 = vunpack.c.l.b16 %v74
  %v701 = vunpack.c.h.b16 %v74
  %v702 = vunpack.c.l.b16 %v75
  %v703 = vunpack.c.h.b16 %v75
  %v704 = vunpack.c.l.b16 %v76
  %v705 = vunpack.c.h.b16 %v76
  %v706 = vunpack.c.l.b16 %v77
  %v707 = vunpack.c.h.b16 %v77
  %v708 = vunpack.c.l.b16 %v78
  %v709 = vunpack.c.h.b16 %v78
  %v710 = vunpack.c.l.b16 %v79
  %v711 = vunpack.c.h.b16 %v79
  %v712 = vunpack.c.l.b16 %v80
  %v713 = vunpack.c.h.b16 %v80
  %v714 = vunpack.c.l.b16 %v81
  %v715 = vunpack.c.h.b16 %v81
  %v716 = vunpack.c.l.b16 %v82
  %v717 = vunpack.c.h.b16 %v82
  %v718 = vunpack.c.l.b16 %v83
  %v719 = vunpack.c.h.b16 %v83
  %v720 = vunpack.c.l.b16 %v84
  %v721 = vunpack.c.h.b16 %v84
  %v722 = vunpack.c.l.b16 %v85
  %v723 = vunpack.c.h.b16 %v85
  %v724 = vunpack.c.l.b16 %v86
  %v725 = vunpack.c.h.b16 %v86
  %v726 = vunpack.c.l.b16 %v87
  %v727 = vunpack.c.h.b16 %v87
  %v728 = vunpack.c.l.b16 %v88
  %v729 = vunpack.c.h.b16 %v88
  %v730 = vunpack.c.l.b16 %v89
  %v731 = vunpack.c.h.b16 %v89
  %v732 = vunpack.c.l.b16 %v90
  %v733 = vunpack.c.h.b16 %v90
  %v734 = vunpack.c.l.b16 %v91
  %v735 = vunpack.c.h.b16 %v91
  %v736 = vunpack.c.l.b16 %v92
  %v737 = vunpack.c.h.b16 %v92
  %v738 = vunpack.c.l.b16 %v93
  %v739 = vunpack.c.h.b16 %v93
  %v740 = vunpack.c.l.b16 %v94
  %v741 = vunpack.c.h.b16 %v94
  %v742 = vunpack.c.l.b16 %v95
  %v743 = vunpack.c.h.b16 %v95
  %v744 = vunpack.c.l.b16 %v96
  %v745 = vunpack.c.h.b16 %v96
  %v746 = vunpack.c.l.b16 %v97
  %v747 = vunpack.c.h.b16 %v97
  %v748 = vunpack.c.l.b16 %v98
  %v749 = vunpack.c.h.b16 %v98
  %v750 = vunpack.c.l.b16 %v99
  %v751 = vunpack.c.h.b16 %v99
  %v752 = vunpack.c.l.b16 %v100
  %v753 = vunpack.c.h.b16 %v100
  %v754 = vunpack.c.l.b16 %v101
  %v755 = vunpack.c.h.b16 %v101
  %v756 = vunpack.c.l.b16 %v102
  %v757 = vunpack.c.h.b16 %v102
  %v758 = vunpack.c.l.b16 %v103
  %v759 = vunpack.c.h.b16 %v103
  %v760 = vunpack.c.l.b16 %v104
  %v761 = vunpack.c.h.b16 %v104
  %v762 = vunpack.c.l.b16 %v105
  %v763 = vunpack.c.h.b16 %v105
  %v764 = vunpack.c.l.b16 %v106
  %v765 = vunpack.c.h.b16 %v106
  %v766 = vunpack.c.l.b16 %v107
  %v767 = vunpack.c.h.b16 %v107
  %v768 = vunpack.c.l.b16 %v108
  %v769 = vunpack.c.h.b16 %v108
  %v770 = vunpack.c.l.b16 %v109
  %v771 = vunpack.c.h.b16 %v109
  %v772 = vunpack.c.l.b16 %v110
  %v773 = vunpack.c.h.b16 %v110
  %v774 = vunpack.c.l.b16 %v111
  %v775 = vunpack.c.h.b16 %v111
  %v776 = vunpack.c.l.b16 %v112
  %v777 = vunpack.c.h.b16 %v112
  %v778 = vunpack.c.l.b16 %v113
  %v779 = vunpack.c.h.b16 %v113
  %v780 = vunpack.c.l.b16 %v114
  %v781 = vunpack.c.h.b16 %v114
  %v782 = vunpack.c.l.b16 %v115
  %v783 = vunpack.c.h.b16 %v115
  %v784 = vunpack.c.l.b16 %v116
  %v785 = vunpack.c.h.b16 %v116
  %v786 = vunpack.c.l.b16 %v117
  %v787 = vunpack.c.h.b16 %v117
  %v788 = vunpack.c.l.b16 %v118
  %v789 = vunpack.c.h.b16 %v118
  %v790 = vunpack.c.l.b16 %v119
  %v791 = vunpack.c.h.b16 %v119
  %v792 = vunpack.c.l.b16 %v120
  %v793 = vunpack.c.h.b16 %v120
  %v794 = vunpack.c.l.b16 %v121
  %v795 = vunpack.c.h.b16 %v121
  %v796 = vunpack.c.l.b16 %v122
  %v797 = vunpack.c.h.b16 %v122
  %v798 = vunpack.c.l.b16 %v123
  %v799 = vunpack.c.h.b16 %v123
  %v800 = vunpack.c.l.b16 %v124
  %v801 = vunpack.c.h.b16 %v124
  %v802 = vunpack.c.l.b16 %v125
  %v803 = vunpack.c.h.b16 %v125
  %v804 = vunpack.c.l.b16 %v126
  %v805 = vunpack.c.h.b16 %v126
  %v806 = vunpack.c.l.b16 %v127
  %v807 = vunpack.c.h.b16 %v127
  %v808 = vunpack.c.l.b16 %v128
  %v809 = vunpack.c.h.b16 %v128
  %v810 = vunpack.c.l.b16 %v129
  %v811 = vunpack.c.h.b16 %v129
  %v812 = vunpack.c.l.b16 %v130
  %v813 = vunpack.c.h.b16 %v130
  %v814 = vunpack.c.l.b16 %v131
  %v815 = vunpack.c.h.b16 %v131
  %v816 = vunpack.c.l.b16 %v132
  %v817 = vunpack.c.h.b16 %v132
  %v818 = vunpack.c.l.b16 %v133
  %v819 = vunpack.c.h.b16 %v133
  %v820 = vunpack.c.l.b16 %v134
  %v821 = vunpack.c.h.b16 %v134
  %v822 = vunpack.c.l.b16 %v135
  %v823 = vunpack.c.h.b16 %v135
  %v824 = vunpack.c.l.b16 %v136
  %v825 = vunpack.c.h.b16 %v136
  %v826 = vunpack.c.l.b16 %v137
  %v827 = vunpack.c.h.b16 %v137
  %v828 = vunpack.c.l.b16 %v138
  %v829 = vunpack.c.h.b16 %v138
  %v830 = vunpack.c.l.b16 %v139
  %v831 = vunpack.c.h.b16 %v139
  %v832 = vunpack.c.l.b16 %v140
  %v833 = vunpack.c.h.b16 %v140
  %v834 = vunpack.c.l.b16 %v141
  %v835 = vunpack.c.h.b16 %v141
  %v836 = vunpack.c.l.b16 %v142
  %v837 = vunpack.c.h.b16 %v142
  %v838 = vunpack.c.l.b16 %v143
  %v839 = vunpack.c.h.b16 %v143
  %v840 = vunpack.c.l.b16 %v144
  %v841 = vunpack.c.h.b16 %v144
  %v842 = vunpack.c.l.b16 %v145
  %v843 = vunpack.c.h.b16 %v145
  %v844 = vunpack.c.l.b16 %v146
  %v845 = vunpack.c.h.b16 %v146
  %v846 = vunpack.c.l.b16 %v147
  %v847 = vunpack.c.h.b16 %v147
  %v848 = vunpack.c.l.b16 %v148
  %v849 = vunpack.c.h.b16 %v148
  %v850 = vunpack.c.l.b16 %v149
  %v851 = vunpack.c.h.b16 %v149
  %v852 = vunpack.c.l.b16 %v150
  %v853 = vunpack.c.h.b16 %v150
  %v854 = vunpack.c.l.b16 %v151
  %v855 = vunpack.c.h.b16 %v151
  %v856 = vunpack.c.l.b16 %v152
  %v857 = vunpack.c.h.b16 %v152
  %v858 = vunpack.c.l.b16 %v153
  %v859 = vunpack.c.h.b16 %v153
  %v860 = vunpack.c.l.b16 %v154
  %v861 = vunpack.c.h.b16 %v154
  %v862 = vunpack.c.l.b16 %v155
  %v863 = vunpack.c.h.b16 %v155
  %v864 = vunpack.c.l.b16 %v156
  %v865 = vunpack.c.h.b16 %v156
  %v866 = vunpack.c.l.b16 %v157
  %v867 = vunpack.c.h.b16 %v157
  %v868 = vunpack.c.l.b16 %v158
  %v869 = vunpack.c.h.b16 %v158
  %v870 = vunpack.c.l.b16 %v159
  %v871 = vunpack.c.h.b16 %v159
  %v872 = vunpack.c.l.b16 %v160
  %v873 = vunpack.c.h.b16 %v160
  %v874 = vunpack.c.l.b16 %v161
  %v875 = vunpack.c.h.b16 %v161
  %v876 = vunpack.c.l.b16 %v162
  %v877 = vunpack.c.h.b16 %v162
  %v878 = vunpack.c.l.b16 %v163
  %v879 = vunpack.c.h.b16 %v163
  %v880 = vunpack.c.l.b16 %v164
  %v881 = vunpack.c.h.b16 %v164
  %v882 = vunpack.c.l.b16 %v165
  %v883 = vunpack.c.h.b16 %v165
  %v884 = vunpack.c.l.b16 %v166
  %v885 = vunpack.c.h.b16 %v166
  %v886 = vunpack.c.l.b16 %v167
  %v887 = vunpack.c.h.b16 %v167
  %v888 = vunpack.c.l.b16 %v168
  %v889 = vunpack.c.h.b16 %v168
  %v890 = vunpack.c.l.b16 %v169
  %v891 = vunpack.c.h.b16 %v169
  %v892 = vunpack.c.l.b16 %v170
  %v893 = vunpack.c.h.b16 %v170
  %v894 = vunpack.c.l.b16 %v171
  %v895 = vunpack.c.h.b16 %v171
  %v896 = vunpack.c.l.b16 %v172
  %v897 = vunpack.c.h.b16 %v172
  %v898 = vunpack.c.l.b16 %v173
  %v899 = vunpack.c.h.b16 %v173
  %v900 = vunpack.c.l.b16 %v174
  %v901 = vunpack.c.h.b16 %v174
  %v902 = vunpack.c.l.b16 %v175
  %v903 = vunpack.c.h.b16 %v175
  %v904 = vunpack.c.l.b16 %v176
  %v905 = vunpack.c.h.b16 %v176
  %v906 = vunpack.c.l.b16 %v177
  %v907 = vunpack.c.h.b16 %v177
  %v908 = vunpack.c.l.b16 %v178
  %v909 = vunpack.c.h.b16 %v178
  %v910 = vunpack.c.l.b16 %v179
  %v911 = vunpack.c.h.b16 %v179
  %v912 = vunpack.c.l.b16 %v180
  %v913 = vunpack.c.h.b16 %v180
  %v914 = vunpack.c.l.b16 %v181
  %v915 = vunpack.c.h.b16 %v181
  %v916 = vunpack.c.l.b16 %v182
  %v917 = vunpack.c.h.b16 %v182
  %v918 = vunpack.c.l.b16 %v183
  %v919 = vunpack.c.h.b16 %v183
  %v920 = vunpack.c.l.b16 %v184
  %v921 = vunpack.c.h.b16 %v184
  %v922 = vunpack.c.l.b16 %v185
  %v923 = vunpack.c.h.b16 %v185
  %v924 = vunpack.c.l.b16 %v186
  %v925 = vunpack.c.h.b16 %v186
  %v926 = vunpack.c.l.b16 %v187
  %v927 = vunpack.c.h.b16 %v187
  %v928 = vunpack.c.l.b16 %v188
  %v929 = vunpack.c.h.b16 %v188
  %v930 = vunpack.c.l.b16 %v189
  %v931 = vunpack.c.h.b16 %v189
  %v932 = vunpack.c.l.b16 %v190
  %v933 = vunpack.c.h.b16 %v190
  %v934 = vunpack.c.l.b16 %v191
  %v935 = vunpack.c.h.b16 %v191
  %v936 = vunpack.c.l.b16 %v192
  %v937 = vunpack.c.h.b16 %v192
  %v938 = vunpack.c.l.b16 %v193
  %v939 = vunpack.c.h.b16 %v193
  %v940 = vunpack.c.l.b16 %v194
  %v941 = vunpack.c.h.b16 %v194
  %v942 = vunpack.c.l.b16 %v195
  %v943 = vunpack.c.h.b16 %v195
  %v944 = vunpack.c.l.b16 %v196
  %v945 = vunpack.c.h.b16 %v196
  %v946 = vunpack.c.l.b16 %v197
  %v947 = vunpack.c.h.b16 %v197
  %v948 = vunpack.c.l.b16 %v198
  %v949 = vunpack.c.h.b16 %v198
  %v950 = vunpack.c.l.b16 %v199
  %v951 = vunpack.c.h.b16 %v199
  %v952 = vunpack.c.l.b16 %v200
  %v953 = vunpack.c.h.b16 %v200
  %v954 = vunpack.c.l.b16 %v201
  %v955 = vunpack.c.h.b16 %v201
  %v956 = vunpack.c.l.b16 %v202
  %v957 = vunpack.c.h.b16 %v202
  %v958 = vunpack.c.l.b16 %v203
  %v959 = vunpack.c.h.b16 %v203
  %v960 = vunpack.c.l.b16 %v204
  %v961 = vunpack.c.h.b16 %v204
  %v962 = vunpack.c.l.b16 %v205
  %v963 = vunpack.c.h.b16 %v205
  %v964 = vunpack.c.l.b16 %v206
  %v965 = vunpack.c.h.b16 %v206
  %v966 = vunpack.c.l.b16 %v207
  %v967 = vunpack.c.h.b16 %v207
  %v968 = vunpack.c.l.b16 %v208
  %v969 = vunpack.c.h.b16 %v208
  %v970 = vunpack.c.l.b16 %v209
  %v971 = vunpack.c.h.b16 %v209
  %v972 = vunpack.c.l.b16 %v210
  %v973 = vunpack.c.h.b16 %v210
  %v974 = vunpack.c.l.b16 %v211
  %v975 = vunpack.c.h.b16 %v211
  %v976 = vunpack.c.l.b16 %v212
  %v977 = vunpack.c.h.b16 %v212
  %v978 = vunpack.c.l.b16 %v213
  %v979 = vunpack.c.h.b16 %v213
  %v980 = vunpack.c.l.b16 %v214
  %v981 = vunpack.c.h.b16 %v214
  %v982 = vunpack.c.l.b16 %v215
  %v983 = vunpack.c.h.b16 %v215
  %v984 = vunpack.c.l.b16 %v216
  %v985 = vunpack.c.h.b16 %v216
  %v986 = vunpack.c.l.b16 %v217
  %v987 = vunpack.c.h.b16 %v217
  %v988 = vunpack.c.l.b16 %v218
  %v989 = vunpack.c.h.b16 %v218
  %v990 = vunpack.c.l.b16 %v219
  %v991 = vunpack.c.h.b16 %v219
  %v992 = vunpack.c.l.b16 %v220
  %v993 = vunpack.c.h.b16 %v220
  %v994 = vunpack.c.l.b16 %v221
  %v995 = vunpack.c.h.b16 %v221
  %v996 = vunpack.c.l.b16 %v222
  %v997 = vunpack.c.h.b16 %v222
  %v998 = vunpack.c.l.b16 %v223
  %v999 = vunpack.c.h.b16 %v223
  %v1000 = vunpack.c.l.b16 %v224
  %v1001 = vunpack.c.h.b16 %v224
  %v1002 = vunpack.c.l.b16 %v225
  %v1003 = vunpack.c.h.b16 %v225
  %v1004 = vunpack.c.l.b16 %v226
  %v1005 = vunpack.c.h.b16 %v226
  %v1006 = vunpack.c.l.b16 %v227
  %v1007 = vunpack.c.h.b16 %v227
  %v1008 = vunpack.c.l.b16 %v228
  %v1009 = vunpack.c.h.b16 %v228
  %v1010 = vunpack.c.l.b16 %v229
  %v1011 = vunpack.c.h.b16 %v229
  %v1012 = vunpack.c.l.b16 %v230
  %v1013 = vunpack.c.h.b16 %v230
  %v1014 = vunpack.c.l.b16 %v231
  %v1015 = vunpack.c.h.b16 %v231
  %v1016 = vunpack.c.l.b16 %v232
  %v1017 = vunpack.c.h.b16 %v232
  %v1018 = vunpack.c.l.b16 %v233
  %v1019 = vunpack.c.h.b16 %v233
  %v1020 = vunpack.c.l.b16 %v234
  %v1021 = vunpack.c.h.b16 %v234
  %v1022 = vunpack.c.l.b16 %v235
  %v1023 = vunpack.c.h.b16 %v235
  %v1024 = vunpack.c.l.b16 %v236
  %v1025 = vunpack.c.h.b16 %v236
  %v1026 = vunpack.c.l.b16 %v237
  %v1027 = vunpack.c.h.b16 %v237
  %v1028 = vunpack.c.l.b16 %v238
  %v1029 = vunpack.c.h.b16 %v238
  %v1030 = vunpack.c.l.b16 %v239
  %v1031 = vunpack.c.h.b16 %v239
  %v1032 = vunpack.c.l.b16 %v240
  %v1033 = vunpack.c.h.b16 %v240
  %v1034 = vunpack.c.l.b16 %v241
  %v1035 = vunpack.c.h.b16 %v241
  %v1036 = vunpack.c.l.b16 %v242
  %v1037 = vunpack.c.h.b16 %v242
  %v1038 = vunpack.c.l.b16 %v243
  %v1039 = vunpack.c.h.b16 %v243
  %v1040 = vunpack.c.l.b16 %v244
  %v1041 = vunpack.c.h.b16 %v244
  %v1042 = vunpack.c.l.b16 %v245
  %v1043 = vunpack.c.h.b16 %v245
  %v1044 = vunpack.c.l.b16 %v246
  %v1045 = vunpack.c.h.b16 %v246
  %v1046 = vunpack.c.l.b16 %v247
  %v1047 = vunpack.c.h.b16 %v247
  %v1048 = vunpack.c.l.b16 %v248
  %v1049 = vunpack.c.h.b16 %v248
  %v1050 = vunpack.c.l.b16 %v249
  %v1051 = vunpack.c.h.b16 %v249
  %v1052 = vunpack.c.l.b16 %v250
  %v1053 = vunpack.c.h.b16 %v250
  %v1054 = vunpack.c.l.b16 %v251
  %v1055 = vunpack.c.h.b16 %v251
  %v1056 = vunpack.c.l.b16 %v252
  %v1057 = vunpack.c.h.b16 %v252
  %v1058 = vunpack.c.l.b16 %v253
  %v1059 = vunpack.c.h.b16 %v253
  %v1060 = vunpack.c.l.b16 %v254
  %v1061 = vunpack.c.h.b16 %v254
  %v1062 = vunpack.c.l.b16 %v255
  %v1063 = vunpack.c.h.b16 %v255
  %v1064 = vunpack.c.l.b16 %v256
  %v1065 = vunpack.c.h.b16 %v256
  %v1066 = vunpack.c.l.b16 %v257
  %v1067 = vunpack.c.h.b16 %v257
  %v1068 = vunpack.c.l.b16 %v258
  %v1069 = vunpack.c.h.b16 %v258
  %v1070 = vunpack.c.l.b16 %v259
  %v1071 = vunpack.c.h.b16 %v259
  %v1072 = vunpack.c.l.b16 %v260
  %v1073 = vunpack.c.h.b16 %v260
  %v1074 = vunpack.c.l.b16 %v261
  %v1075 = vunpack.c.h.b16 %v261
  %v1076 = vunpack.c.l.b16 %v262
  %v1077 = vunpack.c.h.b16 %v262
  %v1078 = vunpack.c.l.b16 %v263
  %v1079 = vunpack.c.h.b16 %v263
  %v1080 = vunpack.c.l.b16 %v264
  %v1081 = vunpack.c.h.b16 %v264
  %v1082 = vunpack.c.l.b16 %v265
  %v1083 = vunpack.c.h.b16 %v265
  %v1084 = vunpack.c.l.b16 %v266
  %v1085 = vunpack.c.h.b16 %v266
  %v1086 = vunpack.c.l.b16 %v267
  %v1087 = vunpack.c.h.b16 %v267
  %v1088 = vunpack.c.l.b16 %v268
  %v1089 = vunpack.c.h.b16 %v268
  %v1090 = vunpack.c.l.b16 %v269
  %v1091 = vunpack.c.h.b16 %v269
  %v1092 = vunpack.c.l.b16 %v270
  %v1093 = vunpack.c.h.b16 %v270
  %v1094 = vunpack.c.l.b16 %v271
  %v1095 = vunpack.c.h.b16 %v271
  %v1096 = vunpack.c.l.b16 %v272
  %v1097 = vunpack.c.h.b16 %v272
  %v1098 = vunpack.c.l.b16 %v273
  %v1099 = vunpack.c.h.b16 %v273
  %v1100 = vunpack.c.l.b16 %v274
  %v1101 = vunpack.c.h.b16 %v274
  %v1102 = vunpack.c.l.b16 %v275
  %v1103 = vunpack.c.h.b16 %v275
  %v1104 = vunpack.c.l.b16 %v276
  %v1105 = vunpack.c.h.b16 %v276
  %v1106 = vunpack.c.l.b16 %v277
  %v1107 = vunpack.c.h.b16 %v277
  %v1108 = vpack.c.b16 %v600, %v596
  %v1109 = vpack.c.b16 %v601, %v597
  %v1110 = vpack.c.b16 %v602, %v598
  %v1111 = vpack.c.b16 %v603, %v599
  %v1112 = vpack.c.b16 %v608, %v604
  %v1113 = vpack.c.b16 %v609, %v605
  %v1114 = vpack.c.b16 %v610, %v606
  %v1115 = vpack.c.b16 %v611, %v607
  %v1116 = vpack.c.b16 %v616, %v612
  %v1117 = vpack.c.b16 %v617, %v613
  %v1118 = vpack.c.b16 %v618, %v614
  %v1119 = vpack.c.b16 %v619, %v615
  %v1120 = vpack.c.b16 %v624, %v620
  %v1121 = vpack.c.b16 %v625, %v621
  %v1122 = vpack.c.b16 %v626, %v622
  %v1123 = vpack.c.b16 %v627, %v623
  %v1124 = vpack.c.b16 %v632, %v628
  %v1125 = vpack.c.b16 %v633, %v629
  %v1126 = vpack.c.b16 %v634, %v630
  %v1127 = vpack.c.b16 %v635, %v631
  %v1128 = vpack.c.b16 %v640, %v636
  %v1129 = vpack.c.b16 %v641, %v637
  %v1130 = vpack.c.b16 %v642, %v638
  %v1131 = vpack.c.b16 %v643, %v639
  %v1132 = vpack.c.b16 %v648, %v644
  %v1133 = vpack.c.b16 %v649, %v645
  %v1134 = vpack.c.b16 %v650, %v646
  %v1135 = vpack.c.b16 %v651, %v647
  %v1136 = vpack.c.b16 %v656, %v652
  %v1137 = vpack.c.b16 %v657, %v653
  %v1138 = vpack.c.b16 %v658, %v654
  %v1139 = vpack.c.b16 %v659, %v655
  %v1140 = vpack.c.b16 %v664, %v660
  %v1141 = vpack.c.b16 %v665, %v661
  %v1142 = vpack.c.b16 %v666, %v662
  %v1143 = vpack.c.b16 %v667, %v663
  %v1144 = vpack.c.b16 %v672, %v668
  %v1145 = vpack.c.b16 %v673, %v669
  %v1146 = vpack.c.b16 %v674, %v670
  %v1147 = vpack.c.b16 %v675, %v671
  %v1148 = vpack.c.b16 %v680, %v676
  %v1149 = vpack.c.b16 %v681, %v677
  %v1150 = vpack.c.b16 %v682, %v678
  %v1151 = vpack.c.b16 %v683, %v679
  %v1152 = vpack.c.b16 %v688, %v684
  %v1153 = vpack.c.b16 %v689, %v685
  %v1154 = vpack.c.b16 %v690, %v686
  %v1155 = vpack.c.b16 %v691, %v687
  %v1156 = vpack.c.b16 %v696, %v692
  %v1157 = vpack.c.b16 %v697, %v693
  %v1158 = vpack.c.b16 %v698, %v694
  %v1159 = vpack.c.b16 %v699, %v695
  %v1160 = vpack.c.b16 %v704, %v700
  %v1161 = vpack.c.b16 %v705, %v701
  %v1162 = vpack.c.b16 %v706, %v702
  %v1163 = vpack.c.b16 %v707, %v703
  %v1164 = vpack.c.b16 %v712, %v708
  %v1165 = vpack.c.b16 %v713, %v709
  %v1166 = vpack.c.b16 %v714, %v710
  %v1167 = vpack.c.b16 %v715, %v711
  %v1168 = vpack.c.b16 %v720, %v716
  %v1169 = vpack.c.b16 %v721, %v717
  %v1170 = vpack.c.b16 %v722, %v718
  %v1171 = vpack.c.b16 %v723, %v719
  %v1172 = vpack.c.b16 %v728, %v724
  %v1173 = vpack.c.b16 %v729, %v725
  %v1174 = vpack.c.b16 %v730, %v726
  %v1175 = vpack.c.b16 %v731, %v727
  %v1176 = vpack.c.b16 %v736, %v732
  %v1177 = vpack.c.b16 %v737, %v733
  %v1178 = vpack.c.b16 %v738, %v734
  %v1179 = vpack.c.b16 %v739, %v735
  %v1180 = vpack.c.b16 %v744, %v740
  %v1181 = vpack.c.b16 %v745, %v741
  %v1182 = vpack.c.b16 %v746, %v742
  %v1183 = vpack.c.b16 %v747, %v743
  %v1184 = vpack.c.b16 %v752, %v748
  %v1185 = vpack.c.b16 %v753, %v749
  %v1186 = vpack.c.b16 %v754, %v750
  %v1187 = vpack.c.b16 %v755, %v751
  %v1188 = vpack.c.b16 %v760, %v756
  %v1189 = vpack.c.b16 %v761, %v757
  %v1190 = vpack.c.b16 %v762, %v758
  %v1191 = vpack.c.b16 %v763, %v759
  %v1192 = vpack.c.b16 %v768, %v764
  %v1193 = vpack.c.b16 %v769, %v765
  %v1194 = vpack.c.b16 %v770, %v766
  %v1195 = vpack.c.b16 %v771, %v767
  %v1196 = vpack.c.b16 %v776, %v772
  %v1197 = vpack.c.b16 %v777, %v773
  %v1198 = vpack.c.b16 %v778, %v774
  %v1199 = vpack.c.b16 %v779, %v775
  %v1200 = vpack.c.b16 %v784, %v780
  %v1201 = vpack.c.b16 %v785, %v781
  %v1202 = vpack.c.b16 %v786, %v782
  %v1203 = vpack.c.b16 %v787, %v783
  %v1204 = vpack.c.b16 %v792, %v788
  %v1205 = vpack.c.b16 %v793, %v789
  %v1206 = vpack.c.b16 %v794, %v790
  %v1207 = vpack.c.b16 %v795, %v791
  %v1208 = vpack.c.b16 %v800, %v796
  %v1209 = vpack.c.b16 %v801, %v797
  %v1210 = vpack.c.b16 %v802, %v798
  %v1211 = vpack.c.b16 %v803, %v799
  %v1212 = vpack.c.b16 %v808, %v804
  %v1213 = vpack.c.b16 %v809, %v805
  %v1214 = vpack.c.b16 %v810, %v806
  %v1215 = vpack.c.b16 %v811, %v807
  %v1216 = vpack.c.b16 %v816, %v812
  %v1217 = vpack.c.b16 %v817, %v813
  %v1218 = vpack.c.b16 %v818, %v814
  %v1219 = vpack.c.b16 %v819, %v815
  %v1220 = vpack.c.b16 %v824, %v820
  %v1221 = vpack.c.b16 %v825, %v821
  %v1222 = vpack.c.b16 %v826, %v822
  %v1223 = vpack.c.b16 %v827, %v823
  %v1224 = vpack.c.b16 %v832, %v828
  %v1225 = vpack.c.b16 %v833, %v829
  %v1226 = vpack.c.b16 %v834, %v830
  %v1227 = vpack.c.b16 %v835, %v831
  %v1228 = vpack.c.b16 %v840, %v836
  %v1229 = vpack.c.b16 %v841, %v837
  %v1230 = vpack.c.b16 %v842, %v838
  %v1231 = vpack.c.b16 %v843, %v839
  %v1232 = vpack.c.b16 %v848, %v844
  %v1233 = vpack.c.b16 %v849, %v845
  %v1234 = vpack.c.b16 %v850, %v846
  %v1235 = vpack.c.b16 %v851, %v847
  %v1236 = vpack.c.b16 %v856, %v852
  %v1237 = vpack.c.b16 %v857, %v853
  %v1238 = vpack.c.b16 %v858, %v854
  %v1239 = vpack.c.b16 %v859, %v855
  %v1240 = vpack.c.b16 %v864, %v860
  %v1241 = vpack.c.b16 %v865, %v861
  %v1242 = vpack.c.b16 %v866, %v862
  %v1243 = vpack.c.b16 %v867, %v863
  %v1244 = vpack.c.b16 %v872, %v868
  %v1245 = vpack.c.b16 %v873, %v869
  %v1246 = vpack.c.b16 %v874, %v870
  %v1247 = vpack.c.b16 %v875, %v871
  %v1248 = vpack.c.b16 %v880, %v876
  %v1249 = vpack.c.b16 %v881, %v877
  %v1250 = vpack.c.b16 %v882, %v878
  %v1251 = vpack.c.b16 %v883, %v879
  %v1252 = vpack.c.b16 %v888, %v884
  %v1253 = vpack.c.b16 %v889, %v885
  %v1254 = vpack.c.b16 %v890, %v886
  %v1255 = vpack.c.b16 %v891, %v887
  %v1256 = vpack.c.b16 %v896, %v892
  %v1257 = vpack.c.b16 %v897, %v893
  %v1258 = vpack.c.b16 %v898, %v894
  %v1259 = vpack.c.b16 %v899, %v895
  %v1260 = vpack.c.b16 %v904, %v900
  %v1261 = vpack.c.b16 %v905, %v901
  %v1262 = vpack.c.b16 %v906, %v902
  %v1263 = vpack.c.b16 %v907, %v903
  %v1264 = vpack.c.b16 %v912, %v908
  %v1265 = vpack.c.b16 %v913, %v909
  %v1266 = vpack.c.b16 %v914, %v910
  %v1267 = vpack.c.b16 %v915, %v911
  %v1268 = vpack.c.b16 %v920, %v916
  %v1269 = vpack.c.b16 %v921, %v917
  %v1270 = vpack.c.b16 %v922, %v918
  %v1271 = vpack.c.b16 %v923, %v919
  %v1272 = vpack.c.b16 %v928, %v924
  %v1273 = vpack.c.b16 %v929, %v925
  %v1274 = vpack.c.b16 %v930, %v926
  %v1275 = vpack.c.b16 %v931, %v927
  %v1276 = vpack.c.b16 %v936, %v932
  %v1277 = vpack.c.b16 %v937, %v933
  %v1278 = vpack.c.b16 %v938, %v934
  %v1279 = vpack.c.b16 %v939, %v935
  %v1280 = vpack.c.b16 %v944, %v940
  %v1281 = vpack.c.b16 %v945, %v941
  %v1282 = vpack.c.b16 %v946, %v942
  %v1283 = vpack.c.b16 %v947, %v943
  %v1284 = vpack.c.b16 %v952, %v948
  %v1285 = vpack.c.b16 %v953, %v949
  %v1286 = vpack.c.b16 %v954, %v950
  %v1287 = vpack.c.b16 %v955, %v951
  %v1288 = vpack.c.b16 %v960, %v956
  %v1289 = vpack.c.b16 %v961, %v957
  %v1290 = vpack.c.b16 %v962, %v958
  %v1291 = vpack.c.b16 %v963, %v959
  %v1292 = vpack.c.b16 %v968, %v964
  %v1293 = vpack.c.b16 %v969, %v965
  %v1294 = vpack.c.b16 %v970, %v966
  %v1295 = vpack.c.b16 %v971, %v967
  %v1296 = vpack.c.b16 %v976, %v972
  %v1297 = vpack.c.b16 %v977, %v973
  %v1298 = vpack.c.b16 %v978, %v974
  %v1299 = vpack.c.b16 %v979, %v975
  %v1300 = vpack.c.b16 %v984, %v980
  %v1301 = vpack.c.b16 %v985, %v981
  %v1302 = vpack.c.b16 %v986, %v982
  %v1303 = vpack.c.b16 %v987, %v983
  %v1304 = vpack.c.b16 %v992, %v988
  %v1305 = vpack.c.b16 %v993, %v989
  %v1306 = vpack.c.b16 %v994, %v990
  %v1307 = vpack.c.b16 %v995, %v991
  %v1308 = vpack.c.b16 %v1000, %v996
  %v1309 = vpack.c.b16 %v1001, %v997
  %v1310 = vpack.c.b16 %v1002, %v998
  %v1311 = vpack.c.b16 %v1003, %v999
  %v1312 = vpack.c.b16 %v1008, %v1004
  %v1313 = vpack.c.b16 %v1009, %v1005
  %v1314 = vpack.c.b16 %v1010, %v1006
  %v1315 = vpack.c.b16 %v1011, %v1007
  %v1316 = vpack.c.b16 %v1016, %v1012
  %v1317 = vpack.c.b16 %v1017, %v1013
  %v1318 = vpack.c.b16 %v1018, %v1014
  %v1319 = vpack.c.b16 %v1019, %v1015
  %v1320 = vpack.c.b16 %v1024, %v1020
  %v1321 = vpack.c.b16 %v1025, %v1021
  %v1322 = vpack.c.b16 %v1026, %v1022
  %v1323 = vpack.c.b16 %v1027, %v1023
  %v1324 = vpack.c.b16 %v1032, %v1028
  %v1325 = vpack.c.b16 %v1033, %v1029
  %v1326 = vpack.c.b16 %v1034, %v1030
  %v1327 = vpack.c.b16 %v1035, %v1031
  %v1328 = vpack.c.b16 %v1040, %v1036
  %v1329 = vpack.c.b16 %v1041, %v1037
  %v1330 = vpack.c.b16 %v1042, %v1038
  %v1331 = vpack.c.b16 %v1043, %v1039
  %v1332 = vpack.c.b16 %v1048, %v1044
  %v1333 = vpack.c.b16 %v1049, %v1045
  %v1334 = vpack.c.b16 %v1050, %v1046
  %v1335 = vpack.c.b16 %v1051, %v1047
  %v1336 = vpack.c.b16 %v1056, %v1052
  %v1337 = vpack.c.b16 %v1057, %v1053
  %v1338 = vpack.c.b16 %v1058, %v1054
  %v1339 = vpack.c.b16 %v1059, %v1055
  %v1340 = vpack.c.b16 %v1064, %v1060
  %v1341 = vpack.c.b16 %v1065, %v1061
  %v1342 = vpack.c.b16 %v1066, %v1062
  %v1343 = vpack.c.b16 %v1067, %v1063
  %v1344 = vpack.c.b16 %v1072, %v1068
  %v1345 = vpack.c.b16 %v1073, %v1069
  %v1346 = vpack.c.b16 %v1074, %v1070
  %v1347 = vpack.c.b16 %v1075, %v1071
  %v1348 = vpack.c.b16 %v1080, %v1076
  %v1349 = vpack.c.b16 %v1081, %v1077
  %v1350 = vpack.c.b16 %v1082, %v1078
  %v1351 = vpack.c.b16 %v1083, %v1079
  %v1352 = vpack.c.b16 %v1088, %v1084
  %v1353 = vpack.c.b16 %v1089, %v1085
  %v1354 = vpack.c.b16 %v1090, %v1086
  %v1355 = vpack.c.b16 %v1091, %v1087
  %v1356 = vpack.c.b16 %v1096, %v1092
  %v1357 = vpack.c.b16 %v1097, %v1093
  %v1358 = vpack.c.b16 %v1098, %v1094
  %v1359 = vpack.c.b16 %v1099, %v1095
  %v1360 = vpack.c.b16 %v1104, %v1100
  %v1361 = vpack.c.b16 %v1105, %v1101
  %v1362 = vpack.c.b16 %v1106, %v1102
  %v1363 = vpack.c.b16 %v1107, %v1103
  %1620 = vmatprep.subr.bf16.mxu0 %v1137
  %1621 = vmatpush1.bf16.msra.mxu0 %v1136
  %1622 = vmatprep.subr.bf16.mxu0 %v1133
  %1623 = vmatpush1.bf16.msra.mxu0 %v1132
  %1624 = vmatprep.subr.bf16.mxu0 %v1129
  %1625 = vmatpush1.bf16.msra.mxu0 %v1128
  %1626 = vmatprep.subr.bf16.mxu0 %v1125
  %1627 = vmatpush1.bf16.msra.mxu0 %v1124
  %1628 = vmatprep.subr.bf16.mxu0 %v1121
  %1629 = vmatpush1.bf16.msra.mxu0 %v1120
  %1630 = vmatprep.subr.bf16.mxu0 %v1117
  %1631 = vmatpush1.bf16.msra.mxu0 %v1116
  %1632 = vmatprep.subr.bf16.mxu0 %v1113
  %1633 = vmatpush1.bf16.msra.mxu0 %v1112
  %1634 = vmatprep.subr.bf16.mxu0 %v1109
  %1635 = vmatpush1.bf16.msra.mxu0 %v1108
  %1636 = vmatprep.subr.bf16.mxu0 %v1169
  %1637 = vmatpush2.bf16.msra.mxu0 %v1168
  %1638 = vmatprep.subr.bf16.mxu0 %v1165
  %1639 = vmatpush2.bf16.msra.mxu0 %v1164
  %1640 = vmatprep.subr.bf16.mxu0 %v1161
  %1641 = vmatpush2.bf16.msra.mxu0 %v1160
  %1642 = vmatprep.subr.bf16.mxu0 %v1157
  %1643 = vmatpush2.bf16.msra.mxu0 %v1156
  %1644 = vmatprep.subr.bf16.mxu0 %v1153
  %1645 = vmatpush2.bf16.msra.mxu0 %v1152
  %1646 = vmatprep.subr.bf16.mxu0 %v1149
  %1647 = vmatpush2.bf16.msra.mxu0 %v1148
  %1648 = vmatprep.subr.bf16.mxu0 %v1145
  %1649 = vmatpush2.bf16.msra.mxu0 %v1144
  %1650 = vmatprep.subr.bf16.mxu0 %v1141
  %1651 = vmatpush2.bf16.msra.mxu0 %v1140
  %1652 = vmatprep.mubr.bf16.mxu0 %v325
  %1653 = vmatmul.mubr.bf16.gmra.mxu0 %v324
  %v1654 = vpop.f32.mrf.mxu0
  %v1655 = vadd.f32 %v283, %v1654
  %v1656 = vpop.f32.mrf.mxu0
  %v1657 = vadd.f32 %v287, %v1656
  %v1658 = vpop.f32.mrf.mxu0
  %v1659 = vadd.f32 %v283, %v1658
  %v1660 = vpop.f32.mrf.mxu0
  %v1661 = vadd.f32 %v287, %v1660
  %1662 = vdwg.mxu0
  %1663 = vmatprep.subr.bf16.mxu0 %v1201
  %1664 = vmatpush1.bf16.msra.mxu0 %v1200
  %1665 = vmatprep.subr.bf16.mxu0 %v1197
  %1666 = vmatpush1.bf16.msra.mxu0 %v1196
  %1667 = vmatprep.subr.bf16.mxu0 %v1193
  %1668 = vmatpush1.bf16.msra.mxu0 %v1192
  %1669 = vmatprep.subr.bf16.mxu0 %v1189
  %1670 = vmatpush1.bf16.msra.mxu0 %v1188
  %1671 = vmatprep.subr.bf16.mxu0 %v1185
  %1672 = vmatpush1.bf16.msra.mxu0 %v1184
  %1673 = vmatprep.subr.bf16.mxu0 %v1181
  %1674 = vmatpush1.bf16.msra.mxu0 %v1180
  %1675 = vmatprep.subr.bf16.mxu0 %v1177
  %1676 = vmatpush1.bf16.msra.mxu0 %v1176
  %1677 = vmatprep.subr.bf16.mxu0 %v1173
  %1678 = vmatpush1.bf16.msra.mxu0 %v1172
  %1679 = vmatprep.subr.bf16.mxu0 %v1233
  %1680 = vmatpush2.bf16.msra.mxu0 %v1232
  %1681 = vmatprep.subr.bf16.mxu0 %v1229
  %1682 = vmatpush2.bf16.msra.mxu0 %v1228
  %1683 = vmatprep.subr.bf16.mxu0 %v1225
  %1684 = vmatpush2.bf16.msra.mxu0 %v1224
  %1685 = vmatprep.subr.bf16.mxu0 %v1221
  %1686 = vmatpush2.bf16.msra.mxu0 %v1220
  %1687 = vmatprep.subr.bf16.mxu0 %v1217
  %1688 = vmatpush2.bf16.msra.mxu0 %v1216
  %1689 = vmatprep.subr.bf16.mxu0 %v1213
  %1690 = vmatpush2.bf16.msra.mxu0 %v1212
  %1691 = vmatprep.subr.bf16.mxu0 %v1209
  %1692 = vmatpush2.bf16.msra.mxu0 %v1208
  %1693 = vmatprep.subr.bf16.mxu0 %v1205
  %1694 = vmatpush2.bf16.msra.mxu0 %v1204
  %1695 = vmatprep.mubr.bf16.mxu0 %v327
  %1696 = vmatmul.mubr.bf16.gmra.mxu0 %v326
  %v1697 = vpop.f32.mrf.mxu0
  %v1698 = vadd.f32 %v1655, %v1697
  %v1699 = vpop.f32.mrf.mxu0
  %v1700 = vadd.f32 %v1657, %v1699
  %v1701 = vpop.f32.mrf.mxu0
  %v1702 = vadd.f32 %v1659, %v1701
  %v1703 = vpop.f32.mrf.mxu0
  %v1704 = vadd.f32 %v1661, %v1703
  %1705 = vdwg.mxu0
  %1706 = vmatprep.subr.bf16.mxu0 %v1265
  %1707 = vmatpush1.bf16.msra.mxu0 %v1264
  %1708 = vmatprep.subr.bf16.mxu0 %v1261
  %1709 = vmatpush1.bf16.msra.mxu0 %v1260
  %1710 = vmatprep.subr.bf16.mxu0 %v1257
  %1711 = vmatpush1.bf16.msra.mxu0 %v1256
  %1712 = vmatprep.subr.bf16.mxu0 %v1253
  %1713 = vmatpush1.bf16.msra.mxu0 %v1252
  %1714 = vmatprep.subr.bf16.mxu0 %v1249
  %1715 = vmatpush1.bf16.msra.mxu0 %v1248
  %1716 = vmatprep.subr.bf16.mxu0 %v1245
  %1717 = vmatpush1.bf16.msra.mxu0 %v1244
  %1718 = vmatprep.subr.bf16.mxu0 %v1241
  %1719 = vmatpush1.bf16.msra.mxu0 %v1240
  %1720 = vmatprep.subr.bf16.mxu0 %v1237
  %1721 = vmatpush1.bf16.msra.mxu0 %v1236
  %1722 = vmatprep.subr.bf16.mxu0 %v1297
  %1723 = vmatpush2.bf16.msra.mxu0 %v1296
  %1724 = vmatprep.subr.bf16.mxu0 %v1293
  %1725 = vmatpush2.bf16.msra.mxu0 %v1292
  %1726 = vmatprep.subr.bf16.mxu0 %v1289
  %1727 = vmatpush2.bf16.msra.mxu0 %v1288
  %1728 = vmatprep.subr.bf16.mxu0 %v1285
  %1729 = vmatpush2.bf16.msra.mxu0 %v1284
  %1730 = vmatprep.subr.bf16.mxu0 %v1281
  %1731 = vmatpush2.bf16.msra.mxu0 %v1280
  %1732 = vmatprep.subr.bf16.mxu0 %v1277
  %1733 = vmatpush2.bf16.msra.mxu0 %v1276
  %1734 = vmatprep.subr.bf16.mxu0 %v1273
  %1735 = vmatpush2.bf16.msra.mxu0 %v1272
  %1736 = vmatprep.subr.bf16.mxu0 %v1269
  %1737 = vmatpush2.bf16.msra.mxu0 %v1268
  %1738 = vmatprep.mubr.bf16.mxu0 %v329
  %1739 = vmatmul.mubr.bf16.gmra.mxu0 %v328
  %v1740 = vpop.f32.mrf.mxu0
  %v1741 = vadd.f32 %v1698, %v1740
  %v1742 = vpop.f32.mrf.mxu0
  %v1743 = vadd.f32 %v1700, %v1742
  %v1744 = vpop.f32.mrf.mxu0
  %v1745 = vadd.f32 %v1702, %v1744
  %v1746 = vpop.f32.mrf.mxu0
  %v1747 = vadd.f32 %v1704, %v1746
  %1748 = vdwg.mxu0
  %1749 = vmatprep.subr.bf16.mxu0 %v1329
  %1750 = vmatpush1.bf16.msra.mxu0 %v1328
  %1751 = vmatprep.subr.bf16.mxu0 %v1325
  %1752 = vmatpush1.bf16.msra.mxu0 %v1324
  %1753 = vmatprep.subr.bf16.mxu0 %v1321
  %1754 = vmatpush1.bf16.msra.mxu0 %v1320
  %1755 = vmatprep.subr.bf16.mxu0 %v1317
  %1756 = vmatpush1.bf16.msra.mxu0 %v1316
  %1757 = vmatprep.subr.bf16.mxu0 %v1313
  %1758 = vmatpush1.bf16.msra.mxu0 %v1312
  %1759 = vmatprep.subr.bf16.mxu0 %v1309
  %1760 = vmatpush1.bf16.msra.mxu0 %v1308
  %1761 = vmatprep.subr.bf16.mxu0 %v1305
  %1762 = vmatpush1.bf16.msra.mxu0 %v1304
  %1763 = vmatprep.subr.bf16.mxu0 %v1301
  %1764 = vmatpush1.bf16.msra.mxu0 %v1300
  %1765 = vmatprep.subr.bf16.mxu0 %v1361
  %1766 = vmatpush2.bf16.msra.mxu0 %v1360
  %1767 = vmatprep.subr.bf16.mxu0 %v1357
  %1768 = vmatpush2.bf16.msra.mxu0 %v1356
  %1769 = vmatprep.subr.bf16.mxu0 %v1353
  %1770 = vmatpush2.bf16.msra.mxu0 %v1352
  %1771 = vmatprep.subr.bf16.mxu0 %v1349
  %1772 = vmatpush2.bf16.msra.mxu0 %v1348
  %1773 = vmatprep.subr.bf16.mxu0 %v1345
  %1774 = vmatpush2.bf16.msra.mxu0 %v1344
  %1775 = vmatprep.subr.bf16.mxu0 %v1341
  %1776 = vmatpush2.bf16.msra.mxu0 %v1340
  %1777 = vmatprep.subr.bf16.mxu0 %v1337
  %1778 = vmatpush2.bf16.msra.mxu0 %v1336
  %1779 = vmatprep.subr.bf16.mxu0 %v1333
  %1780 = vmatpush2.bf16.msra.mxu0 %v1332
  %1781 = vmatprep.mubr.bf16.mxu0 %v331
  %1782 = vmatmul.mubr.bf16.gmra.mxu0 %v330
  %v1783 = vpop.f32.mrf.mxu0
  %v1784 = vadd.f32 %v1741, %v1783
  %v1785 = vpop.f32.mrf.mxu0
  %v1786 = vadd.f32 %v1743, %v1785
  %v1787 = vpop.f32.mrf.mxu0
  %v1788 = vadd.f32 %v1745, %v1787
  %v1789 = vpop.f32.mrf.mxu0
  %v1790 = vadd.f32 %v1747, %v1789
  %1791 = vdwg.mxu0
  %1792 = vmatprep.subr.bf16.mxu0 %v1139
  %1793 = vmatpush1.bf16.msra.mxu0 %v1138
  %1794 = vmatprep.subr.bf16.mxu0 %v1135
  %1795 = vmatpush1.bf16.msra.mxu0 %v1134
  %1796 = vmatprep.subr.bf16.mxu0 %v1131
  %1797 = vmatpush1.bf16.msra.mxu0 %v1130
  %1798 = vmatprep.subr.bf16.mxu0 %v1127
  %1799 = vmatpush1.bf16.msra.mxu0 %v1126
  %1800 = vmatprep.subr.bf16.mxu0 %v1123
  %1801 = vmatpush1.bf16.msra.mxu0 %v1122
  %1802 = vmatprep.subr.bf16.mxu0 %v1119
  %1803 = vmatpush1.bf16.msra.mxu0 %v1118
  %1804 = vmatprep.subr.bf16.mxu0 %v1115
  %1805 = vmatpush1.bf16.msra.mxu0 %v1114
  %1806 = vmatprep.subr.bf16.mxu0 %v1111
  %1807 = vmatpush1.bf16.msra.mxu0 %v1110
  %1808 = vmatprep.subr.bf16.mxu0 %v1171
  %1809 = vmatpush2.bf16.msra.mxu0 %v1170
  %1810 = vmatprep.subr.bf16.mxu0 %v1167
  %1811 = vmatpush2.bf16.msra.mxu0 %v1166
  %1812 = vmatprep.subr.bf16.mxu0 %v1163
  %1813 = vmatpush2.bf16.msra.mxu0 %v1162
  %1814 = vmatprep.subr.bf16.mxu0 %v1159
  %1815 = vmatpush2.bf16.msra.mxu0 %v1158
  %1816 = vmatprep.subr.bf16.mxu0 %v1155
  %1817 = vmatpush2.bf16.msra.mxu0 %v1154
  %1818 = vmatprep.subr.bf16.mxu0 %v1151
  %1819 = vmatpush2.bf16.msra.mxu0 %v1150
  %1820 = vmatprep.subr.bf16.mxu0 %v1147
  %1821 = vmatpush2.bf16.msra.mxu0 %v1146
  %1822 = vmatprep.subr.bf16.mxu0 %v1143
  %1823 = vmatpush2.bf16.msra.mxu0 %v1142
  %1824 = vmatprep.mubr.bf16.mxu0 %v325
  %1825 = vmatmul.mubr.bf16.gmra.mxu0 %v324
  %v1826 = vpop.f32.mrf.mxu0
  %v1827 = vadd.f32 %v291, %v1826
  %v1828 = vpop.f32.mrf.mxu0
  %v1829 = vadd.f32 %v295, %v1828
  %v1830 = vpop.f32.mrf.mxu0
  %v1831 = vadd.f32 %v291, %v1830
  %v1832 = vpop.f32.mrf.mxu0
  %v1833 = vadd.f32 %v295, %v1832
  %1834 = vdwg.mxu0
  %1835 = vmatprep.subr.bf16.mxu0 %v1203
  %1836 = vmatpush1.bf16.msra.mxu0 %v1202
  %1837 = vmatprep.subr.bf16.mxu0 %v1199
  %1838 = vmatpush1.bf16.msra.mxu0 %v1198
  %1839 = vmatprep.subr.bf16.mxu0 %v1195
  %1840 = vmatpush1.bf16.msra.mxu0 %v1194
  %1841 = vmatprep.subr.bf16.mxu0 %v1191
  %1842 = vmatpush1.bf16.msra.mxu0 %v1190
  %1843 = vmatprep.subr.bf16.mxu0 %v1187
  %1844 = vmatpush1.bf16.msra.mxu0 %v1186
  %1845 = vmatprep.subr.bf16.mxu0 %v1183
  %1846 = vmatpush1.bf16.msra.mxu0 %v1182
  %1847 = vmatprep.subr.bf16.mxu0 %v1179
  %1848 = vmatpush1.bf16.msra.mxu0 %v1178
  %1849 = vmatprep.subr.bf16.mxu0 %v1175
  %1850 = vmatpush1.bf16.msra.mxu0 %v1174
  %1851 = vmatprep.subr.bf16.mxu0 %v1235
  %1852 = vmatpush2.bf16.msra.mxu0 %v1234
  %1853 = vmatprep.subr.bf16.mxu0 %v1231
  %1854 = vmatpush2.bf16.msra.mxu0 %v1230
  %1855 = vmatprep.subr.bf16.mxu0 %v1227
  %1856 = vmatpush2.bf16.msra.mxu0 %v1226
  %1857 = vmatprep.subr.bf16.mxu0 %v1223
  %1858 = vmatpush2.bf16.msra.mxu0 %v1222
  %1859 = vmatprep.subr.bf16.mxu0 %v1219
  %1860 = vmatpush2.bf16.msra.mxu0 %v1218
  %1861 = vmatprep.subr.bf16.mxu0 %v1215
  %1862 = vmatpush2.bf16.msra.mxu0 %v1214
  %1863 = vmatprep.subr.bf16.mxu0 %v1211
  %1864 = vmatpush2.bf16.msra.mxu0 %v1210
  %1865 = vmatprep.subr.bf16.mxu0 %v1207
  %1866 = vmatpush2.bf16.msra.mxu0 %v1206
  %1867 = vmatprep.mubr.bf16.mxu0 %v327
  %1868 = vmatmul.mubr.bf16.gmra.mxu0 %v326
  %v1869 = vpop.f32.mrf.mxu0
  %v1870 = vadd.f32 %v1827, %v1869
  %v1871 = vpop.f32.mrf.mxu0
  %v1872 = vadd.f32 %v1829, %v1871
  %v1873 = vpop.f32.mrf.mxu0
  %v1874 = vadd.f32 %v1831, %v1873
  %v1875 = vpop.f32.mrf.mxu0
  %v1876 = vadd.f32 %v1833, %v1875
  %1877 = vdwg.mxu0
  %1878 = vmatprep.subr.bf16.mxu0 %v1267
  %1879 = vmatpush1.bf16.msra.mxu0 %v1266
  %1880 = vmatprep.subr.bf16.mxu0 %v1263
  %1881 = vmatpush1.bf16.msra.mxu0 %v1262
  %1882 = vmatprep.subr.bf16.mxu0 %v1259
  %1883 = vmatpush1.bf16.msra.mxu0 %v1258
  %1884 = vmatprep.subr.bf16.mxu0 %v1255
  %1885 = vmatpush1.bf16.msra.mxu0 %v1254
  %1886 = vmatprep.subr.bf16.mxu0 %v1251
  %1887 = vmatpush1.bf16.msra.mxu0 %v1250
  %1888 = vmatprep.subr.bf16.mxu0 %v1247
  %1889 = vmatpush1.bf16.msra.mxu0 %v1246
  %1890 = vmatprep.subr.bf16.mxu0 %v1243
  %1891 = vmatpush1.bf16.msra.mxu0 %v1242
  %1892 = vmatprep.subr.bf16.mxu0 %v1239
  %1893 = vmatpush1.bf16.msra.mxu0 %v1238
  %1894 = vmatprep.subr.bf16.mxu0 %v1299
  %1895 = vmatpush2.bf16.msra.mxu0 %v1298
  %1896 = vmatprep.subr.bf16.mxu0 %v1295
  %1897 = vmatpush2.bf16.msra.mxu0 %v1294
  %1898 = vmatprep.subr.bf16.mxu0 %v1291
  %1899 = vmatpush2.bf16.msra.mxu0 %v1290
  %1900 = vmatprep.subr.bf16.mxu0 %v1287
  %1901 = vmatpush2.bf16.msra.mxu0 %v1286
  %1902 = vmatprep.subr.bf16.mxu0 %v1283
  %1903 = vmatpush2.bf16.msra.mxu0 %v1282
  %1904 = vmatprep.subr.bf16.mxu0 %v1279
  %1905 = vmatpush2.bf16.msra.mxu0 %v1278
  %1906 = vmatprep.subr.bf16.mxu0 %v1275
  %1907 = vmatpush2.bf16.msra.mxu0 %v1274
  %1908 = vmatprep.subr.bf16.mxu0 %v1271
  %1909 = vmatpush2.bf16.msra.mxu0 %v1270
  %1910 = vmatprep.mubr.bf16.mxu0 %v329
  %1911 = vmatmul.mubr.bf16.gmra.mxu0 %v328
  %v1912 = vpop.f32.mrf.mxu0
  %v1913 = vadd.f32 %v1870, %v1912
  %v1914 = vpop.f32.mrf.mxu0
  %v1915 = vadd.f32 %v1872, %v1914
  %v1916 = vpop.f32.mrf.mxu0
  %v1917 = vadd.f32 %v1874, %v1916
  %v1918 = vpop.f32.mrf.mxu0
  %v1919 = vadd.f32 %v1876, %v1918
  %1920 = vdwg.mxu0
  %1921 = vmatprep.subr.bf16.mxu0 %v1331
  %1922 = vmatpush1.bf16.msra.mxu0 %v1330
  %1923 = vmatprep.subr.bf16.mxu0 %v1327
  %1924 = vmatpush1.bf16.msra.mxu0 %v1326
  %1925 = vmatprep.subr.bf16.mxu0 %v1323
  %1926 = vmatpush1.bf16.msra.mxu0 %v1322
  %1927 = vmatprep.subr.bf16.mxu0 %v1319
  %1928 = vmatpush1.bf16.msra.mxu0 %v1318
  %1929 = vmatprep.subr.bf16.mxu0 %v1315
  %1930 = vmatpush1.bf16.msra.mxu0 %v1314
  %1931 = vmatprep.subr.bf16.mxu0 %v1311
  %1932 = vmatpush1.bf16.msra.mxu0 %v1310
  %1933 = vmatprep.subr.bf16.mxu0 %v1307
  %1934 = vmatpush1.bf16.msra.mxu0 %v1306
  %1935 = vmatprep.subr.bf16.mxu0 %v1303
  %1936 = vmatpush1.bf16.msra.mxu0 %v1302
  %1937 = vmatprep.subr.bf16.mxu0 %v1363
  %1938 = vmatpush2.bf16.msra.mxu0 %v1362
  %1939 = vmatprep.subr.bf16.mxu0 %v1359
  %1940 = vmatpush2.bf16.msra.mxu0 %v1358
  %1941 = vmatprep.subr.bf16.mxu0 %v1355
  %1942 = vmatpush2.bf16.msra.mxu0 %v1354
  %1943 = vmatprep.subr.bf16.mxu0 %v1351
  %1944 = vmatpush2.bf16.msra.mxu0 %v1350
  %1945 = vmatprep.subr.bf16.mxu0 %v1347
  %1946 = vmatpush2.bf16.msra.mxu0 %v1346
  %1947 = vmatprep.subr.bf16.mxu0 %v1343
  %1948 = vmatpush2.bf16.msra.mxu0 %v1342
  %1949 = vmatprep.subr.bf16.mxu0 %v1339
  %1950 = vmatpush2.bf16.msra.mxu0 %v1338
  %1951 = vmatprep.subr.bf16.mxu0 %v1335
  %1952 = vmatpush2.bf16.msra.mxu0 %v1334
  %1953 = vmatprep.mubr.bf16.mxu0 %v331
  %1954 = vmatmul.mubr.bf16.gmra.mxu0 %v330
  %v1955 = vpop.f32.mrf.mxu0
  %v1956 = vadd.f32 %v1913, %v1955
  %v1957 = vpop.f32.mrf.mxu0
  %v1958 = vadd.f32 %v1915, %v1957
  %v1959 = vpop.f32.mrf.mxu0
  %v1960 = vadd.f32 %v1917, %v1959
  %v1961 = vpop.f32.mrf.mxu0
  %v1962 = vadd.f32 %v1919, %v1961
  %1963 = vdwg.mxu0
  %vm1964 = vcmp.ge.f32.partialorder %v1784, 0.0
  %vm1965 = vcmp.ge.f32.partialorder %v1786, 0.0
  %vm1966 = vcmp.ge.f32.partialorder %v1956, 0.0
  %vm1967 = vcmp.ge.f32.partialorder %v1958, 0.0
  %vm1968 = vcmp.ge.f32.partialorder %v1788, 0.0
  %vm1969 = vcmp.ge.f32.partialorder %v1790, 0.0
  %vm1970 = vcmp.ge.f32.partialorder %v1960, 0.0
  %vm1971 = vcmp.ge.f32.partialorder %v1962, 0.0
  %v1972 = vmul.f32 %v1784, 0.01
  %v1973 = vmul.f32 %v1786, 0.01
  %v1974 = vmul.f32 %v1956, 0.01
  %v1975 = vmul.f32 %v1958, 0.01
  %v1976 = vmul.f32 %v1788, 0.01
  %v1977 = vmul.f32 %v1790, 0.01
  %v1978 = vmul.f32 %v1960, 0.01
  %v1979 = vmul.f32 %v1962, 0.01
  %v1980 = vsel %vm1964, %v1784, %v1972
  %v1981 = vsel %vm1965, %v1786, %v1973
  %v1982 = vsel %vm1966, %v1956, %v1974
  %v1983 = vsel %vm1967, %v1958, %v1975
  %v1984 = vsel %vm1968, %v1788, %v1976
  %v1985 = vsel %vm1969, %v1790, %v1977
  %v1986 = vsel %vm1970, %v1960, %v1978
  %v1987 = vsel %vm1971, %v1962, %v1979
  %v1988 = vpack.c.bf16 %v1984, %v1980
  %v1989 = vpack.c.bf16 %v1985, %v1981
  %v1990 = vpack.c.bf16 %v1986, %v1982
  %v1991 = vpack.c.bf16 %v1987, %v1983
  %v1996 = vunpack.c.l.b16 %v1988
  %v1997 = vunpack.c.l.b16 %v1989
  %v1998 = vunpack.c.l.b16 %v1990
  %v1999 = vunpack.c.l.b16 %v1991
  %v2000 = vunpack.c.h.b16 %v1988
  %v2001 = vunpack.c.h.b16 %v1989
  %v2002 = vunpack.c.h.b16 %v1990
  %v2003 = vunpack.c.h.b16 %v1991
  %v2004 = vpack.c.b16 %v1997, %v1996
  %v2005 = vpack.c.b16 %v1999, %v1998
  %v2006 = vpack.c.b16 %v2001, %v2000
  %v2007 = vpack.c.b16 %v2003, %v2002
  %2012 = vst [vmem:[%s3] sm:$0xff] %v2004
  %2013 = vst [vmem:[%s3 + $0x8] sm:$0xff] %v2005
  %2014 = vst [vmem:[%s3 + $0x10] sm:$0xff] %v2006
  %2015 = vst [vmem:[%s3 + $0x18] sm:$0xff] %v2007
  // Predicated region
  $region14: #{generator_forward.8} parent=0 // pred_check
    _
  $region15: #{generator_forward.8} parent=0 // pred_check_branch
    %2017 = sbr.rel (0) target = $region17
  $region16: #{generator_forward.8} parent=0 // pred_region
    _
  $region17: #{generator_forward.8} parent=0 // pred_fallthru
    _
  // Predicated region
  $region18: #{generator_forward.8} parent=0 // pred_check
    _
  $region19: #{generator_forward.8} parent=0 // pred_check_branch
    %2019 = sbr.rel (0) target = $region21
  $region20: #{generator_forward.8} parent=0 // pred_region
    _
  $region21: #{generator_forward.8} parent=0 // pred_fallthru
    _

</llo_original>
